<compile_context>
chip_gen: v6e
topology: v6e:2x2x1
jax: 0.10.0
libtpu: 0.0.40
codegen_flags: <defaults>
</compile_context>

<pallas_src>
import jax
import jax.numpy as jnp
from jax.experimental import pallas as pl
from jax.experimental.pallas import tpu as pltpu


def _pick_compute_dtype():
    """bf16 MXU operands on v6e/v7x (f32 accumulation); f32 on v5e and older."""
    try:
        kind = jax.devices()[0].device_kind.lower()
    except Exception:
        return jnp.float32
    if any(tag in kind for tag in ("v2", "v3", "v4", "v5")):
        return jnp.float32
    return jnp.bfloat16


def make_dynamics_kernel(cfg, TB, compute_dtype):
    N_l, N_p = cfg["N_l"], cfg["N_p"]
    jnf, H = cfg["joint_nf"], cfg["hidden_nf"]
    Hv, L = H // 2, cfg["n_layers"]
    TBL, TBP = TB * N_l, TB * N_p
    TBN = TBL + TBP
    inv_norm = 1.0 / float(cfg["normalization_factor"])
    f32 = jnp.float32
    cdt = compute_dtype

    def mxdot(a, b):
        # MXU dot with (optionally) bf16 operands, always f32 accumulation.
        return jnp.dot(a.astype(cdt), b.astype(cdt), preferred_element_type=f32)

    def kernel(hl_ref, hp_ref, xl_ref, xp_ref, cl_ref, cp_ref, valid_ref, cut2_ref,
               wae_ref, bae_ref, wpe_ref, bpe_ref, wemb_ref, bemb_ref,
               wg_ref, wvg_ref, wupd_ref, bupd_ref,
               wouts_ref, bouts_ref, woutv_ref, wdec_ref, bdec_ref,
               out_ref):
        # ---- atom / pocket encoders + context -> h0 (built as a value) ----
        lig_enc = mxdot(hl_ref[...], wae_ref[...]) + bae_ref[...]         # (TBL, jnf)
        pok_enc = mxdot(hp_ref[...], wpe_ref[...]) + bpe_ref[...]         # (TBP, jnf)
        h0 = jnp.concatenate(
            [jnp.concatenate([lig_enc, cl_ref[...]], axis=-1),
             jnp.concatenate([pok_enc, cp_ref[...]], axis=-1)], axis=0)   # (TBN, jnf+4)

        x = jnp.concatenate([xl_ref[...], xp_ref[...]], axis=0)           # (TBN, 3)
        xx, xy, xz = x[:, 0:1], x[:, 1:2], x[:, 2:3]

        # ---- dense block-diagonal adjacency (get_edges_cutoff), VPU distances ----
        dx = xx - jnp.transpose(xx)
        dy = xy - jnp.transpose(xy)
        dz = xz - jnp.transpose(xz)
        d2 = dx * dx + dy * dy + dz * dz                                  # (TBN, TBN), >= 0 exactly
        vr = valid_ref[0]                                                 # (1, TBN)
        vc = jnp.transpose(vr)                                            # (TBN, 1)
        # self-edges kept: reference get_edges_cutoff has no i==j removal
        A = jnp.where(d2 <= cut2_ref[...], vc * vr, 0.0)                  # (TBN, TBN)

        # ---- GVP-style network: embed ----
        s = jax.nn.silu(mxdot(h0, wemb_ref[...]) + bemb_ref[...])         # (TBN, H)
        vx = jnp.zeros((TBN, Hv), f32)
        vy = jnp.zeros((TBN, Hv), f32)
        vz = jnp.zeros((TBN, Hv), f32)

        # ---- message passing (scalar + vector channels, vector_gate=True) ----
        for l in range(L):
            g = jax.nn.sigmoid(mxdot(s, wg_ref[l]))                       # (TBN, Hv)
            # single fused aggregation matmul: [g*x, g*y, g*z, g, s] (width 4*Hv+H)
            stacked = jnp.concatenate([g * xx, g * xy, g * xz, g, s], axis=-1)
            agg = mxdot(A, stacked)                                       # (TBN, 4*Hv+H)
            Ag = agg[:, 3 * Hv:4 * Hv]
            mvx = (agg[:, 0:Hv] - xx * Ag) * inv_norm
            mvy = (agg[:, Hv:2 * Hv] - xy * Ag) * inv_norm
            mvz = (agg[:, 2 * Hv:3 * Hv] - xz * Ag) * inv_norm
            ms = agg[:, 4 * Hv:4 * Hv + H] * inv_norm
            # fused update matmul: [ms | s] @ [[W_msg]; [W_self]]
            upd = jax.nn.silu(mxdot(jnp.concatenate([ms, s], axis=-1), wupd_ref[l])
                              + bupd_ref[l])
            s = s + upd
            vg = jax.nn.sigmoid(mxdot(s, wvg_ref[l]))                     # (TBN, Hv)
            vx = (vx + mvx) * vg
            vy = (vy + mvy) * vg
            vz = (vz + mvz) * vg

        # ---- heads: only ligand rows [0, TBL) feed the output ----
        s_lig = s[0:TBL]
        h_final = mxdot(s_lig, wouts_ref[...]) + bouts_ref[...]           # (TBL, jnf)
        h_dec = mxdot(h_final, wdec_ref[...]) + bdec_ref[...]             # (TBL, lig_nf)
        wv = woutv_ref[...]                                               # (1, Hv)
        # width-1 vector projection on VPU+XLU instead of three 1-lane MXU dots
        px = jnp.sum(vx[0:TBL] * wv, axis=-1, keepdims=True)
        py = jnp.sum(vy[0:TBL] * wv, axis=-1, keepdims=True)
        pz = jnp.sum(vz[0:TBL] * wv, axis=-1, keepdims=True)

        # single contiguous slab store per grid step
        out_ref[...] = jnp.concatenate([px, py, pz, h_dec], axis=-1).astype(out_ref.dtype)

    return kernel


def dynamics_with_pockets_forward(params, cfg, t, xh, pocket_xh,
                                  extension_mask, scaffold_mask,
                                  anchors, pocket_anchors, pocket_mask,
                                  batch_tile=8):
    f32 = jnp.float32
    B, N_l = xh.shape[0], xh.shape[1]
    N_p = pocket_xh.shape[1]
    n_dims, lig_nf, pocket_nf = cfg["n_dims"], cfg["lig_nf"], cfg["pocket_nf"]
    jnf, H = cfg["joint_nf"], cfg["hidden_nf"]
    Hv, L = H // 2, cfg["n_layers"]
    dn = jnf + 4
    out_dim = n_dims + lig_nf

    TB = batch_tile
    G = -(-B // TB)            # number of grid steps
    B_pad = G * TB
    TBL, TBP = TB * N_l, TB * N_p
    TBN = TBL + TBP

    cdt = _pick_compute_dtype()
    kernel = make_dynamics_kernel(dict(cfg, N_l=N_l, N_p=N_p), TB, cdt)

    node_mask = ((scaffold_mask > 0) | (extension_mask > 0)).astype(f32)     # [B, N_l]
    pmask = (pocket_mask > 0).astype(f32)                                    # [B, N_p]

    x_lig = xh[..., :n_dims].astype(f32)
    h_lig = xh[..., n_dims:].astype(f32)
    x_pok = pocket_xh[..., :n_dims].astype(f32)
    h_pok = pocket_xh[..., n_dims:].astype(f32)

    # context features appended to h: [anchor, scaffold, is_pocket, time]
    t_b = jnp.reshape(t.astype(f32), (B, 1))
    ctx_lig = jnp.stack([anchors.astype(f32), scaffold_mask.astype(f32),
                         jnp.zeros((B, N_l), f32),
                         jnp.broadcast_to(t_b, (B, N_l))], axis=-1)          # [B, N_l, 4]
    ctx_pok = jnp.stack([pocket_anchors.astype(f32), jnp.zeros((B, N_p), f32),
                         jnp.ones((B, N_p), f32),
                         jnp.broadcast_to(t_b, (B, N_p))], axis=-1)          # [B, N_p, 4]

    def pad_b(a):
        if B_pad == B:
            return a
        return jnp.concatenate(
            [a, jnp.zeros((B_pad - B,) + a.shape[1:], a.dtype)], axis=0)

    # packed 2-D slabs: grid step g covers batches [g*TB, (g+1)*TB)
    hl2 = pad_b(h_lig).reshape(B_pad * N_l, lig_nf)
    hp2 = pad_b(h_pok).reshape(B_pad * N_p, pocket_nf)
    xl2 = pad_b(x_lig).reshape(B_pad * N_l, n_dims)
    xp2 = pad_b(x_pok).reshape(B_pad * N_p, n_dims)
    cl2 = pad_b(ctx_lig).reshape(B_pad * N_l, 4)
    cp2 = pad_b(ctx_pok).reshape(B_pad * N_p, 4)
    valid = jnp.concatenate([pad_b(node_mask).reshape(G, TBL),
                             pad_b(pmask).reshape(G, TBP)], axis=1).reshape(G, 1, TBN)

    # static squared-cutoff / connectivity matrix (identical for every grid step)
    big = jnp.float32(1e30)                      # edge_cutoff_ligand is None -> always connected
    bid = jnp.concatenate([jnp.repeat(jnp.arange(TB), N_l),
                           jnp.repeat(jnp.arange(TB), N_p)])
    is_lig = jnp.concatenate([jnp.ones((TBL,), bool), jnp.zeros((TBP,), bool)])
    same_b = bid[:, None] == bid[None, :]
    ll = is_lig[:, None] & is_lig[None, :]
    pp = (~is_lig[:, None]) & (~is_lig[None, :])
    cut2 = jnp.where(ll, big,
                     jnp.where(pp, jnp.float32(cfg["edge_cutoff_pocket"]) ** 2,
                               jnp.float32(cfg["edge_cutoff_interaction"]) ** 2))
    cut2 = jnp.where(same_b, cut2, jnp.float32(-1.0)).astype(f32)            # (TBN, TBN)

    # fused per-layer update weight: upd = [ms | s] @ [[W_msg]; [W_self]]
    W_upd = jnp.concatenate([params["W_msg"], params["W_self"]], axis=1)     # (L, 2H, H)
    w_outv_row = params["w_outv"].reshape(1, Hv)

    step2 = lambda g: (g, 0)
    step3 = lambda g: (g, 0, 0)
    const2 = lambda g: (0, 0)
    const3 = lambda g: (0, 0, 0)

    in_specs = [
        pl.BlockSpec((TBL, lig_nf), step2),
        pl.BlockSpec((TBP, pocket_nf), step2),
        pl.BlockSpec((TBL, n_dims), step2),
        pl.BlockSpec((TBP, n_dims), step2),
        pl.BlockSpec((TBL, 4), step2),
        pl.BlockSpec((TBP, 4), step2),
        pl.BlockSpec((1, 1, TBN), step3),
        pl.BlockSpec((TBN, TBN), const2),
        pl.BlockSpec((lig_nf, jnf), const2),
        pl.BlockSpec((1, jnf), const2),
        pl.BlockSpec((pocket_nf, jnf), const2),
        pl.BlockSpec((1, jnf), const2),
        pl.BlockSpec((dn, H), const2),
        pl.BlockSpec((1, H), const2),
        pl.BlockSpec((L, H, Hv), const3),
        pl.BlockSpec((L, H, Hv), const3),
        pl.BlockSpec((L, 2 * H, H), const3),
        pl.BlockSpec((L, 1, H), const3),
        pl.BlockSpec((H, jnf), const2),
        pl.BlockSpec((1, jnf), const2),
        pl.BlockSpec((1, Hv), const2),
        pl.BlockSpec((jnf, lig_nf), const2),
        pl.BlockSpec((1, lig_nf), const2),
    ]
    out_spec = pl.BlockSpec((TBL, out_dim), step2)

    grid_spec = pltpu.PrefetchScalarGridSpec(
        num_scalar_prefetch=0, grid=(G,),
        in_specs=in_specs, out_specs=out_spec)

    out_flat = pl.pallas_call(
        kernel,
        out_shape=jax.ShapeDtypeStruct((B_pad * N_l, out_dim), f32),
        grid_spec=grid_spec,
        compiler_params=pltpu.CompilerParams(
            dimension_semantics=("parallel",),        # batches independent -> v7x 2-TC split
            vmem_limit_bytes=32 * 1024 * 1024),       # explicit; fits v7x 64 MiB VMEM
    )(hl2, hp2, xl2, xp2, cl2, cp2, valid, cut2,
      params["W_ae"], params["b_ae"], params["W_pe"], params["b_pe"],
      params["W_emb"], params["b_emb"],
      params["W_gate"], params["W_vgate"], W_upd, params["b_upd"],
      params["W_outs"], params["b_outs"], w_outv_row, params["W_dec"], params["b_dec"])

    dense = out_flat.reshape(B_pad, N_l, out_dim)[:B]                        # (B, N_l, out_dim)

    # compaction in XLA: reshaped_vel_h[batch_mask_ligand, positions] = vel_h_ligand
    pos = (jnp.cumsum(node_mask, axis=1) - node_mask).astype(jnp.int32)      # [B, N_l]
    P = ((jnp.arange(N_l, dtype=jnp.int32)[None, :, None] == pos[:, None, :])
         & (node_mask[:, None, :] > 0)).astype(f32)                          # [B, N_l, N_l]
    return jnp.einsum('bpi,bif->bpf', P, dense)


def init_params(key, cfg):
    jnf, H = cfg["joint_nf"], cfg["hidden_nf"]
    Hv, L = H // 2, cfg["n_layers"]
    lig_nf, pocket_nf = cfg["lig_nf"], cfg["pocket_nf"]
    dn = jnf + 4
    keys = iter(jax.random.split(key, 32))

    def w(shape, fan_in):
        return jax.random.normal(next(keys), shape, jnp.float32) * (1.0 / jnp.sqrt(float(fan_in)))

    return dict(
        W_ae=w((lig_nf, jnf), lig_nf),
        b_ae=jnp.zeros((1, jnf), jnp.float32),
        W_pe=w((pocket_nf, jnf), pocket_nf),
        b_pe=jnp.zeros((1, jnf), jnp.float32),
        W_emb=w((dn, H), dn),
        b_emb=jnp.zeros((1, H), jnp.float32),
        W_gate=w((L, H, Hv), H),
        W_msg=w((L, H, H), H),
        W_self=w((L, H, H), H),
        b_upd=jnp.zeros((L, 1, H), jnp.float32),
        W_vgate=w((L, H, Hv), H),
        W_outs=w((H, jnf), H),
        b_outs=jnp.zeros((1, jnf), jnp.float32),
        w_outv=w((Hv, 1), Hv),
        W_dec=w((jnf, lig_nf), jnf),
        b_dec=jnp.zeros((1, lig_nf), jnp.float32),
    )


if __name__ == "__main__":
    cfg = dict(
        n_dims=3, lig_nf=8, pocket_nf=10,
        joint_nf=32, hidden_nf=64, n_layers=2,
        normalization_factor=100.0,
        edge_cutoff_pocket=4.5, edge_cutoff_interaction=4.5,  # edge_cutoff_ligand=None (all pairs)
    )
    B, N_l, N_p = 2, 8, 8

    key = jax.random.PRNGKey(0)
    kp, k1, k2, k3, k4 = jax.random.split(key, 5)
    params = init_params(kp, cfg)

    xh = jax.random.normal(k1, (B, N_l, cfg["n_dims"] + cfg["lig_nf"]), jnp.float32)
    xh = xh.at[..., :3].set(jax.random.uniform(k3, (B, N_l, 3), jnp.float32, 0.0, 3.0))
    pocket_xh = jax.random.normal(k2, (B, N_p, cfg["n_dims"] + cfg["pocket_nf"]), jnp.float32)
    pocket_xh = pocket_xh.at[..., :3].set(jax.random.uniform(k4, (B, N_p, 3), jnp.float32, 0.0, 3.0))

    scaffold_mask = jnp.array([[1, 1, 1, 1, 0, 0, 0, 0],
                               [1, 1, 1, 0, 0, 0, 0, 0]], jnp.float32)
    extension_mask = jnp.array([[0, 0, 0, 0, 1, 1, 0, 0],
                                [0, 0, 0, 1, 1, 1, 1, 0]], jnp.float32)
    anchors = jnp.array([[0, 0, 1, 0, 0, 0, 0, 0],
                         [0, 1, 0, 0, 0, 0, 0, 0]], jnp.float32)
    pocket_mask = jnp.array([[1, 1, 1, 1, 1, 1, 0, 0],
                             [1, 1, 1, 1, 1, 1, 1, 1]], jnp.float32)
    pocket_anchors = jnp.zeros((B, N_p), jnp.float32)
    t = jnp.array([[0.25], [0.75]], jnp.float32)

    # batch_tile=8 -> packed node count = 8*(8+8) = 128 rows (one full MXU M tile)
    out = dynamics_with_pockets_forward(params, cfg, t, xh, pocket_xh,
                                        extension_mask, scaffold_mask,
                                        anchors, pocket_anchors, pocket_mask,
                                        batch_tile=8)
    jax.block_until_ready(out)
    assert out.shape == (B, N_l, cfg["n_dims"] + cfg["lig_nf"])
    print("KERNEL_OK")
</pallas_src>

<mosaic_0001>
module attributes {stable_mosaic.version = 11 : i64} {
  func.func @kernel(%arg0: i32, %arg1: memref<64x8xf32, #tpu.memory_space<vmem>>, %arg2: memref<64x10xf32, #tpu.memory_space<vmem>>, %arg3: memref<64x3xf32, #tpu.memory_space<vmem>>, %arg4: memref<64x3xf32, #tpu.memory_space<vmem>>, %arg5: memref<64x4xf32, #tpu.memory_space<vmem>>, %arg6: memref<64x4xf32, #tpu.memory_space<vmem>>, %arg7: memref<1x1x128xf32, #tpu.memory_space<vmem>>, %arg8: memref<128x128xf32, #tpu.memory_space<vmem>>, %arg9: memref<8x32xf32, #tpu.memory_space<vmem>>, %arg10: memref<1x32xf32, #tpu.memory_space<vmem>>, %arg11: memref<10x32xf32, #tpu.memory_space<vmem>>, %arg12: memref<1x32xf32, #tpu.memory_space<vmem>>, %arg13: memref<36x64xf32, #tpu.memory_space<vmem>>, %arg14: memref<1x64xf32, #tpu.memory_space<vmem>>, %arg15: memref<2x64x32xf32, #tpu.memory_space<vmem>>, %arg16: memref<2x64x32xf32, #tpu.memory_space<vmem>>, %arg17: memref<2x128x64xf32, #tpu.memory_space<vmem>>, %arg18: memref<2x1x64xf32, #tpu.memory_space<vmem>>, %arg19: memref<64x32xf32, #tpu.memory_space<vmem>>, %arg20: memref<1x32xf32, #tpu.memory_space<vmem>>, %arg21: memref<1x32xf32, #tpu.memory_space<vmem>>, %arg22: memref<32x8xf32, #tpu.memory_space<vmem>>, %arg23: memref<1x8xf32, #tpu.memory_space<vmem>>, %arg24: memref<64x11xf32, #tpu.memory_space<vmem>>) attributes {dimension_semantics = [#tpu.dimension_semantics<parallel>], iteration_bounds = array<i64: 1>, scalar_prefetch = 0 : i64, scratch_operands = 0 : i64, tpu.core_type = #tpu.core_type<tc>, window_params = [{transform_indices = @transform_0, window_bounds = array<i64: 64, 8>}, {transform_indices = @transform_1, window_bounds = array<i64: 64, 10>}, {transform_indices = @transform_2, window_bounds = array<i64: 64, 3>}, {transform_indices = @transform_3, window_bounds = array<i64: 64, 3>}, {transform_indices = @transform_4, window_bounds = array<i64: 64, 4>}, {transform_indices = @transform_5, window_bounds = array<i64: 64, 4>}, {transform_indices = @transform_6, window_bounds = array<i64: 1, 1, 128>}, {pipeline_mode = #tpu.pipeline_mode<synchronous>, transform_indices = @transform_7, window_bounds = array<i64: 128, 128>}, {pipeline_mode = #tpu.pipeline_mode<synchronous>, transform_indices = @transform_8, window_bounds = array<i64: 8, 32>}, {pipeline_mode = #tpu.pipeline_mode<synchronous>, transform_indices = @transform_9, window_bounds = array<i64: 1, 32>}, {pipeline_mode = #tpu.pipeline_mode<synchronous>, transform_indices = @transform_10, window_bounds = array<i64: 10, 32>}, {pipeline_mode = #tpu.pipeline_mode<synchronous>, transform_indices = @transform_11, window_bounds = array<i64: 1, 32>}, {pipeline_mode = #tpu.pipeline_mode<synchronous>, transform_indices = @transform_12, window_bounds = array<i64: 36, 64>}, {pipeline_mode = #tpu.pipeline_mode<synchronous>, transform_indices = @transform_13, window_bounds = array<i64: 1, 64>}, {pipeline_mode = #tpu.pipeline_mode<synchronous>, transform_indices = @transform_14, window_bounds = array<i64: 2, 64, 32>}, {pipeline_mode = #tpu.pipeline_mode<synchronous>, transform_indices = @transform_15, window_bounds = array<i64: 2, 64, 32>}, {pipeline_mode = #tpu.pipeline_mode<synchronous>, transform_indices = @transform_16, window_bounds = array<i64: 2, 128, 64>}, {pipeline_mode = #tpu.pipeline_mode<synchronous>, transform_indices = @transform_17, window_bounds = array<i64: 2, 1, 64>}, {pipeline_mode = #tpu.pipeline_mode<synchronous>, transform_indices = @transform_18, window_bounds = array<i64: 64, 32>}, {pipeline_mode = #tpu.pipeline_mode<synchronous>, transform_indices = @transform_19, window_bounds = array<i64: 1, 32>}, {pipeline_mode = #tpu.pipeline_mode<synchronous>, transform_indices = @transform_20, window_bounds = array<i64: 1, 32>}, {pipeline_mode = #tpu.pipeline_mode<synchronous>, transform_indices = @transform_21, window_bounds = array<i64: 32, 8>}, {pipeline_mode = #tpu.pipeline_mode<synchronous>, transform_indices = @transform_22, window_bounds = array<i64: 1, 8>}, {transform_indices = @transform_23, window_bounds = array<i64: 64, 11>}]} {
    %c0 = arith.constant 0 : index
    %c0_0 = arith.constant 0 : index
    %0 = vector.load %arg1[%c0, %c0_0] : memref<64x8xf32, #tpu.memory_space<vmem>>, vector<64x8xf32>
    %c0_1 = arith.constant 0 : index
    %c0_2 = arith.constant 0 : index
    %1 = vector.load %arg9[%c0_1, %c0_2] : memref<8x32xf32, #tpu.memory_space<vmem>>, vector<8x32xf32>
    %2 = arith.truncf %0 : vector<64x8xf32> to vector<64x8xbf16>
    %3 = arith.truncf %1 : vector<8x32xf32> to vector<8x32xbf16>
    %cst = arith.constant dense<0.000000e+00> : vector<64x32xf32>
    %4 = tpu.matmul %2, %3, %cst {dimension_numbers = #tpu.dot_dimension_numbers<[1], [0], [0], [1], [0, 0, 1, 1], [], []>} : vector<64x8xbf16>, vector<8x32xbf16>, vector<64x32xf32> -> vector<64x32xf32>
    %c0_3 = arith.constant 0 : index
    %c0_4 = arith.constant 0 : index
    %5 = vector.load %arg10[%c0_3, %c0_4] : memref<1x32xf32, #tpu.memory_space<vmem>>, vector<1x32xf32>
    %6 = vector.broadcast %5 : vector<1x32xf32> to vector<64x32xf32>
    %7 = arith.addf %4, %6 : vector<64x32xf32>
    %c0_5 = arith.constant 0 : index
    %c0_6 = arith.constant 0 : index
    %8 = vector.load %arg2[%c0_5, %c0_6] : memref<64x10xf32, #tpu.memory_space<vmem>>, vector<64x10xf32>
    %c0_7 = arith.constant 0 : index
    %c0_8 = arith.constant 0 : index
    %9 = vector.load %arg11[%c0_7, %c0_8] : memref<10x32xf32, #tpu.memory_space<vmem>>, vector<10x32xf32>
    %10 = arith.truncf %8 : vector<64x10xf32> to vector<64x10xbf16>
    %11 = arith.truncf %9 : vector<10x32xf32> to vector<10x32xbf16>
    %cst_9 = arith.constant dense<0.000000e+00> : vector<64x32xf32>
    %12 = tpu.matmul %10, %11, %cst_9 {dimension_numbers = #tpu.dot_dimension_numbers<[1], [0], [0], [1], [0, 0, 1, 1], [], []>} : vector<64x10xbf16>, vector<10x32xbf16>, vector<64x32xf32> -> vector<64x32xf32>
    %c0_10 = arith.constant 0 : index
    %c0_11 = arith.constant 0 : index
    %13 = vector.load %arg12[%c0_10, %c0_11] : memref<1x32xf32, #tpu.memory_space<vmem>>, vector<1x32xf32>
    %14 = vector.broadcast %13 : vector<1x32xf32> to vector<64x32xf32>
    %15 = arith.addf %12, %14 : vector<64x32xf32>
    %c0_12 = arith.constant 0 : index
    %c0_13 = arith.constant 0 : index
    %16 = vector.load %arg5[%c0_12, %c0_13] : memref<64x4xf32, #tpu.memory_space<vmem>>, vector<64x4xf32>
    %17 = tpu.concatenate %7, %16 in 1 : vector<64x32xf32>, vector<64x4xf32> -> vector<64x36xf32>
    %c0_14 = arith.constant 0 : index
    %c0_15 = arith.constant 0 : index
    %18 = vector.load %arg6[%c0_14, %c0_15] : memref<64x4xf32, #tpu.memory_space<vmem>>, vector<64x4xf32>
    %19 = tpu.concatenate %15, %18 in 1 : vector<64x32xf32>, vector<64x4xf32> -> vector<64x36xf32>
    %20 = tpu.concatenate %17, %19 in 0 : vector<64x36xf32>, vector<64x36xf32> -> vector<128x36xf32>
    %c0_16 = arith.constant 0 : index
    %c0_17 = arith.constant 0 : index
    %21 = vector.load %arg3[%c0_16, %c0_17] : memref<64x3xf32, #tpu.memory_space<vmem>>, vector<64x3xf32>
    %c0_18 = arith.constant 0 : index
    %c0_19 = arith.constant 0 : index
    %22 = vector.load %arg4[%c0_18, %c0_19] : memref<64x3xf32, #tpu.memory_space<vmem>>, vector<64x3xf32>
    %23 = tpu.concatenate %21, %22 in 0 : vector<64x3xf32>, vector<64x3xf32> -> vector<128x3xf32>
    %24 = vector.extract_strided_slice %23 {offsets = [0, 0], sizes = [128, 1], strides = [1, 1]} : vector<128x3xf32> to vector<128x1xf32>
    %25 = vector.extract_strided_slice %23 {offsets = [0, 1], sizes = [128, 1], strides = [1, 1]} : vector<128x3xf32> to vector<128x1xf32>
    %26 = vector.extract_strided_slice %23 {offsets = [0, 2], sizes = [128, 1], strides = [1, 1]} : vector<128x3xf32> to vector<128x1xf32>
    %27 = tpu.transpose %24, [1, 0] : vector<128x1xf32> -> vector<1x128xf32>
    %28 = vector.broadcast %24 : vector<128x1xf32> to vector<128x128xf32>
    %29 = vector.broadcast %27 : vector<1x128xf32> to vector<128x128xf32>
    %30 = arith.subf %28, %29 : vector<128x128xf32>
    %31 = tpu.transpose %25, [1, 0] : vector<128x1xf32> -> vector<1x128xf32>
    %32 = vector.broadcast %25 : vector<128x1xf32> to vector<128x128xf32>
    %33 = vector.broadcast %31 : vector<1x128xf32> to vector<128x128xf32>
    %34 = arith.subf %32, %33 : vector<128x128xf32>
    %35 = tpu.transpose %26, [1, 0] : vector<128x1xf32> -> vector<1x128xf32>
    %36 = vector.broadcast %26 : vector<128x1xf32> to vector<128x128xf32>
    %37 = vector.broadcast %35 : vector<1x128xf32> to vector<128x128xf32>
    %38 = arith.subf %36, %37 : vector<128x128xf32>
    %39 = arith.mulf %30, %30 : vector<128x128xf32>
    %40 = arith.mulf %34, %34 : vector<128x128xf32>
    %41 = arith.addf %39, %40 : vector<128x128xf32>
    %42 = arith.mulf %38, %38 : vector<128x128xf32>
    %43 = arith.addf %41, %42 : vector<128x128xf32>
    %c0_20 = arith.constant 0 : index
    %c0_21 = arith.constant 0 : index
    %c0_22 = arith.constant 0 : index
    %44 = vector.load %arg7[%c0_20, %c0_21, %c0_22] : memref<1x1x128xf32, #tpu.memory_space<vmem>>, vector<1x1x128xf32>
    %45 = vector.shape_cast %44 : vector<1x1x128xf32> to vector<1x128xf32>
    %46 = tpu.transpose %45, [1, 0] : vector<1x128xf32> -> vector<128x1xf32>
    %c0_23 = arith.constant 0 : index
    %c0_24 = arith.constant 0 : index
    %47 = vector.load %arg8[%c0_23, %c0_24] : memref<128x128xf32, #tpu.memory_space<vmem>>, vector<128x128xf32>
    %48 = arith.cmpf ole, %43, %47 : vector<128x128xf32>
    %49 = vector.broadcast %46 : vector<128x1xf32> to vector<128x128xf32>
    %50 = vector.broadcast %45 : vector<1x128xf32> to vector<128x128xf32>
    %51 = arith.mulf %49, %50 : vector<128x128xf32>
    %cst_25 = arith.constant 0.000000e+00 : f32
    %52 = vector.broadcast %cst_25 : f32 to vector<128x128xf32>
    %53 = arith.select %48, %51, %52 : vector<128x128xi1>, vector<128x128xf32>
    %c0_26 = arith.constant 0 : index
    %c0_27 = arith.constant 0 : index
    %54 = vector.load %arg13[%c0_26, %c0_27] : memref<36x64xf32, #tpu.memory_space<vmem>>, vector<36x64xf32>
    %55 = arith.truncf %20 : vector<128x36xf32> to vector<128x36xbf16>
    %56 = arith.truncf %54 : vector<36x64xf32> to vector<36x64xbf16>
    %cst_28 = arith.constant dense<0.000000e+00> : vector<128x64xf32>
    %57 = tpu.matmul %55, %56, %cst_28 {dimension_numbers = #tpu.dot_dimension_numbers<[1], [0], [0], [1], [0, 0, 1, 1], [], []>} : vector<128x36xbf16>, vector<36x64xbf16>, vector<128x64xf32> -> vector<128x64xf32>
    %c0_29 = arith.constant 0 : index
    %c0_30 = arith.constant 0 : index
    %58 = vector.load %arg14[%c0_29, %c0_30] : memref<1x64xf32, #tpu.memory_space<vmem>>, vector<1x64xf32>
    %59 = vector.broadcast %58 : vector<1x64xf32> to vector<128x64xf32>
    %60 = arith.addf %57, %59 : vector<128x64xf32>
    %61 = arith.negf %60 : vector<128x64xf32>
    %62 = math.exp %61 : vector<128x64xf32>
    %cst_31 = arith.constant 1.000000e+00 : f32
    %63 = vector.broadcast %cst_31 : f32 to vector<128x64xf32>
    %64 = arith.addf %63, %62 : vector<128x64xf32>
    %65 = arith.divf %63, %64 : vector<128x64xf32>
    %66 = arith.mulf %60, %65 : vector<128x64xf32>
    %cst_32 = arith.constant 0.000000e+00 : f32
    %67 = vector.broadcast %cst_32 : f32 to vector<128x32xf32>
    %cst_33 = arith.constant 0.000000e+00 : f32
    %68 = vector.broadcast %cst_33 : f32 to vector<128x32xf32>
    %cst_34 = arith.constant 0.000000e+00 : f32
    %69 = vector.broadcast %cst_34 : f32 to vector<128x32xf32>
    %c0_35 = arith.constant 0 : index
    %c0_36 = arith.constant 0 : index
    %c0_37 = arith.constant 0 : index
    %70 = vector.load %arg15[%c0_35, %c0_36, %c0_37] : memref<2x64x32xf32, #tpu.memory_space<vmem>>, vector<1x64x32xf32>
    %71 = vector.shape_cast %70 : vector<1x64x32xf32> to vector<64x32xf32>
    %72 = arith.truncf %66 : vector<128x64xf32> to vector<128x64xbf16>
    %73 = arith.truncf %71 : vector<64x32xf32> to vector<64x32xbf16>
    %cst_38 = arith.constant dense<0.000000e+00> : vector<128x32xf32>
    %74 = tpu.matmul %72, %73, %cst_38 {dimension_numbers = #tpu.dot_dimension_numbers<[1], [0], [0], [1], [0, 0, 1, 1], [], []>} : vector<128x64xbf16>, vector<64x32xbf16>, vector<128x32xf32> -> vector<128x32xf32>
    %75 = arith.negf %74 : vector<128x32xf32>
    %76 = math.exp %75 : vector<128x32xf32>
    %cst_39 = arith.constant 1.000000e+00 : f32
    %77 = vector.broadcast %cst_39 : f32 to vector<128x32xf32>
    %78 = arith.addf %77, %76 : vector<128x32xf32>
    %79 = arith.divf %77, %78 : vector<128x32xf32>
    %80 = vector.broadcast %24 : vector<128x1xf32> to vector<128x32xf32>
    %81 = arith.mulf %79, %80 : vector<128x32xf32>
    %82 = vector.broadcast %25 : vector<128x1xf32> to vector<128x32xf32>
    %83 = arith.mulf %79, %82 : vector<128x32xf32>
    %84 = vector.broadcast %26 : vector<128x1xf32> to vector<128x32xf32>
    %85 = arith.mulf %79, %84 : vector<128x32xf32>
    %86 = tpu.concatenate %81, %83, %85, %79, %66 in 1 : vector<128x32xf32>, vector<128x32xf32>, vector<128x32xf32>, vector<128x32xf32>, vector<128x64xf32> -> vector<128x192xf32>
    %87 = arith.truncf %53 : vector<128x128xf32> to vector<128x128xbf16>
    %88 = arith.truncf %86 : vector<128x192xf32> to vector<128x192xbf16>
    %cst_40 = arith.constant dense<0.000000e+00> : vector<128x192xf32>
    %89 = tpu.matmul %87, %88, %cst_40 {dimension_numbers = #tpu.dot_dimension_numbers<[1], [0], [0], [1], [0, 0, 1, 1], [], []>} : vector<128x128xbf16>, vector<128x192xbf16>, vector<128x192xf32> -> vector<128x192xf32>
    %90 = vector.extract_strided_slice %89 {offsets = [0, 96], sizes = [128, 32], strides = [1, 1]} : vector<128x192xf32> to vector<128x32xf32>
    %91 = vector.extract_strided_slice %89 {offsets = [0, 0], sizes = [128, 32], strides = [1, 1]} : vector<128x192xf32> to vector<128x32xf32>
    %92 = vector.broadcast %24 : vector<128x1xf32> to vector<128x32xf32>
    %93 = arith.mulf %92, %90 : vector<128x32xf32>
    %94 = arith.subf %91, %93 : vector<128x32xf32>
    %cst_41 = arith.constant 0.00999999977 : f32
    %95 = vector.broadcast %cst_41 : f32 to vector<128x32xf32>
    %96 = arith.mulf %94, %95 : vector<128x32xf32>
    %97 = vector.extract_strided_slice %89 {offsets = [0, 32], sizes = [128, 32], strides = [1, 1]} : vector<128x192xf32> to vector<128x32xf32>
    %98 = vector.broadcast %25 : vector<128x1xf32> to vector<128x32xf32>
    %99 = arith.mulf %98, %90 : vector<128x32xf32>
    %100 = arith.subf %97, %99 : vector<128x32xf32>
    %cst_42 = arith.constant 0.00999999977 : f32
    %101 = vector.broadcast %cst_42 : f32 to vector<128x32xf32>
    %102 = arith.mulf %100, %101 : vector<128x32xf32>
    %103 = vector.extract_strided_slice %89 {offsets = [0, 64], sizes = [128, 32], strides = [1, 1]} : vector<128x192xf32> to vector<128x32xf32>
    %104 = vector.broadcast %26 : vector<128x1xf32> to vector<128x32xf32>
    %105 = arith.mulf %104, %90 : vector<128x32xf32>
    %106 = arith.subf %103, %105 : vector<128x32xf32>
    %cst_43 = arith.constant 0.00999999977 : f32
    %107 = vector.broadcast %cst_43 : f32 to vector<128x32xf32>
    %108 = arith.mulf %106, %107 : vector<128x32xf32>
    %109 = vector.extract_strided_slice %89 {offsets = [0, 128], sizes = [128, 64], strides = [1, 1]} : vector<128x192xf32> to vector<128x64xf32>
    %cst_44 = arith.constant 0.00999999977 : f32
    %110 = vector.broadcast %cst_44 : f32 to vector<128x64xf32>
    %111 = arith.mulf %109, %110 : vector<128x64xf32>
    %112 = tpu.concatenate %111, %66 in 1 : vector<128x64xf32>, vector<128x64xf32> -> vector<128x128xf32>
    %c0_45 = arith.constant 0 : index
    %c0_46 = arith.constant 0 : index
    %c0_47 = arith.constant 0 : index
    %113 = vector.load %arg17[%c0_45, %c0_46, %c0_47] : memref<2x128x64xf32, #tpu.memory_space<vmem>>, vector<1x128x64xf32>
    %114 = vector.shape_cast %113 : vector<1x128x64xf32> to vector<128x64xf32>
    %115 = arith.truncf %112 : vector<128x128xf32> to vector<128x128xbf16>
    %116 = arith.truncf %114 : vector<128x64xf32> to vector<128x64xbf16>
    %cst_48 = arith.constant dense<0.000000e+00> : vector<128x64xf32>
    %117 = tpu.matmul %115, %116, %cst_48 {dimension_numbers = #tpu.dot_dimension_numbers<[1], [0], [0], [1], [0, 0, 1, 1], [], []>} : vector<128x128xbf16>, vector<128x64xbf16>, vector<128x64xf32> -> vector<128x64xf32>
    %c0_49 = arith.constant 0 : index
    %c0_50 = arith.constant 0 : index
    %c0_51 = arith.constant 0 : index
    %118 = vector.load %arg18[%c0_49, %c0_50, %c0_51] : memref<2x1x64xf32, #tpu.memory_space<vmem>>, vector<1x1x64xf32>
    %119 = vector.shape_cast %118 : vector<1x1x64xf32> to vector<1x64xf32>
    %120 = vector.broadcast %119 : vector<1x64xf32> to vector<128x64xf32>
    %121 = arith.addf %117, %120 : vector<128x64xf32>
    %122 = arith.negf %121 : vector<128x64xf32>
    %123 = math.exp %122 : vector<128x64xf32>
    %cst_52 = arith.constant 1.000000e+00 : f32
    %124 = vector.broadcast %cst_52 : f32 to vector<128x64xf32>
    %125 = arith.addf %124, %123 : vector<128x64xf32>
    %126 = arith.divf %124, %125 : vector<128x64xf32>
    %127 = arith.mulf %121, %126 : vector<128x64xf32>
    %128 = arith.addf %66, %127 : vector<128x64xf32>
    %c0_53 = arith.constant 0 : index
    %c0_54 = arith.constant 0 : index
    %c0_55 = arith.constant 0 : index
    %129 = vector.load %arg16[%c0_53, %c0_54, %c0_55] : memref<2x64x32xf32, #tpu.memory_space<vmem>>, vector<1x64x32xf32>
    %130 = vector.shape_cast %129 : vector<1x64x32xf32> to vector<64x32xf32>
    %131 = arith.truncf %128 : vector<128x64xf32> to vector<128x64xbf16>
    %132 = arith.truncf %130 : vector<64x32xf32> to vector<64x32xbf16>
    %cst_56 = arith.constant dense<0.000000e+00> : vector<128x32xf32>
    %133 = tpu.matmul %131, %132, %cst_56 {dimension_numbers = #tpu.dot_dimension_numbers<[1], [0], [0], [1], [0, 0, 1, 1], [], []>} : vector<128x64xbf16>, vector<64x32xbf16>, vector<128x32xf32> -> vector<128x32xf32>
    %134 = arith.negf %133 : vector<128x32xf32>
    %135 = math.exp %134 : vector<128x32xf32>
    %cst_57 = arith.constant 1.000000e+00 : f32
    %136 = vector.broadcast %cst_57 : f32 to vector<128x32xf32>
    %137 = arith.addf %136, %135 : vector<128x32xf32>
    %138 = arith.divf %136, %137 : vector<128x32xf32>
    %139 = arith.addf %67, %96 : vector<128x32xf32>
    %140 = arith.mulf %139, %138 : vector<128x32xf32>
    %141 = arith.addf %68, %102 : vector<128x32xf32>
    %142 = arith.mulf %141, %138 : vector<128x32xf32>
    %143 = arith.addf %69, %108 : vector<128x32xf32>
    %144 = arith.mulf %143, %138 : vector<128x32xf32>
    %c1 = arith.constant 1 : index
    %c0_58 = arith.constant 0 : index
    %c0_59 = arith.constant 0 : index
    %145 = vector.load %arg15[%c1, %c0_58, %c0_59] : memref<2x64x32xf32, #tpu.memory_space<vmem>>, vector<1x64x32xf32>
    %146 = vector.shape_cast %145 : vector<1x64x32xf32> to vector<64x32xf32>
    %147 = arith.truncf %128 : vector<128x64xf32> to vector<128x64xbf16>
    %148 = arith.truncf %146 : vector<64x32xf32> to vector<64x32xbf16>
    %cst_60 = arith.constant dense<0.000000e+00> : vector<128x32xf32>
    %149 = tpu.matmul %147, %148, %cst_60 {dimension_numbers = #tpu.dot_dimension_numbers<[1], [0], [0], [1], [0, 0, 1, 1], [], []>} : vector<128x64xbf16>, vector<64x32xbf16>, vector<128x32xf32> -> vector<128x32xf32>
    %150 = arith.negf %149 : vector<128x32xf32>
    %151 = math.exp %150 : vector<128x32xf32>
    %cst_61 = arith.constant 1.000000e+00 : f32
    %152 = vector.broadcast %cst_61 : f32 to vector<128x32xf32>
    %153 = arith.addf %152, %151 : vector<128x32xf32>
    %154 = arith.divf %152, %153 : vector<128x32xf32>
    %155 = vector.broadcast %24 : vector<128x1xf32> to vector<128x32xf32>
    %156 = arith.mulf %154, %155 : vector<128x32xf32>
    %157 = vector.broadcast %25 : vector<128x1xf32> to vector<128x32xf32>
    %158 = arith.mulf %154, %157 : vector<128x32xf32>
    %159 = vector.broadcast %26 : vector<128x1xf32> to vector<128x32xf32>
    %160 = arith.mulf %154, %159 : vector<128x32xf32>
    %161 = tpu.concatenate %156, %158, %160, %154, %128 in 1 : vector<128x32xf32>, vector<128x32xf32>, vector<128x32xf32>, vector<128x32xf32>, vector<128x64xf32> -> vector<128x192xf32>
    %162 = arith.truncf %53 : vector<128x128xf32> to vector<128x128xbf16>
    %163 = arith.truncf %161 : vector<128x192xf32> to vector<128x192xbf16>
    %cst_62 = arith.constant dense<0.000000e+00> : vector<128x192xf32>
    %164 = tpu.matmul %162, %163, %cst_62 {dimension_numbers = #tpu.dot_dimension_numbers<[1], [0], [0], [1], [0, 0, 1, 1], [], []>} : vector<128x128xbf16>, vector<128x192xbf16>, vector<128x192xf32> -> vector<128x192xf32>
    %165 = vector.extract_strided_slice %164 {offsets = [0, 96], sizes = [128, 32], strides = [1, 1]} : vector<128x192xf32> to vector<128x32xf32>
    %166 = vector.extract_strided_slice %164 {offsets = [0, 0], sizes = [128, 32], strides = [1, 1]} : vector<128x192xf32> to vector<128x32xf32>
    %167 = vector.broadcast %24 : vector<128x1xf32> to vector<128x32xf32>
    %168 = arith.mulf %167, %165 : vector<128x32xf32>
    %169 = arith.subf %166, %168 : vector<128x32xf32>
    %cst_63 = arith.constant 0.00999999977 : f32
    %170 = vector.broadcast %cst_63 : f32 to vector<128x32xf32>
    %171 = arith.mulf %169, %170 : vector<128x32xf32>
    %172 = vector.extract_strided_slice %164 {offsets = [0, 32], sizes = [128, 32], strides = [1, 1]} : vector<128x192xf32> to vector<128x32xf32>
    %173 = vector.broadcast %25 : vector<128x1xf32> to vector<128x32xf32>
    %174 = arith.mulf %173, %165 : vector<128x32xf32>
    %175 = arith.subf %172, %174 : vector<128x32xf32>
    %cst_64 = arith.constant 0.00999999977 : f32
    %176 = vector.broadcast %cst_64 : f32 to vector<128x32xf32>
    %177 = arith.mulf %175, %176 : vector<128x32xf32>
    %178 = vector.extract_strided_slice %164 {offsets = [0, 64], sizes = [128, 32], strides = [1, 1]} : vector<128x192xf32> to vector<128x32xf32>
    %179 = vector.broadcast %26 : vector<128x1xf32> to vector<128x32xf32>
    %180 = arith.mulf %179, %165 : vector<128x32xf32>
    %181 = arith.subf %178, %180 : vector<128x32xf32>
    %cst_65 = arith.constant 0.00999999977 : f32
    %182 = vector.broadcast %cst_65 : f32 to vector<128x32xf32>
    %183 = arith.mulf %181, %182 : vector<128x32xf32>
    %184 = vector.extract_strided_slice %164 {offsets = [0, 128], sizes = [128, 64], strides = [1, 1]} : vector<128x192xf32> to vector<128x64xf32>
    %cst_66 = arith.constant 0.00999999977 : f32
    %185 = vector.broadcast %cst_66 : f32 to vector<128x64xf32>
    %186 = arith.mulf %184, %185 : vector<128x64xf32>
    %187 = tpu.concatenate %186, %128 in 1 : vector<128x64xf32>, vector<128x64xf32> -> vector<128x128xf32>
    %c1_67 = arith.constant 1 : index
    %c0_68 = arith.constant 0 : index
    %c0_69 = arith.constant 0 : index
    %188 = vector.load %arg17[%c1_67, %c0_68, %c0_69] : memref<2x128x64xf32, #tpu.memory_space<vmem>>, vector<1x128x64xf32>
    %189 = vector.shape_cast %188 : vector<1x128x64xf32> to vector<128x64xf32>
    %190 = arith.truncf %187 : vector<128x128xf32> to vector<128x128xbf16>
    %191 = arith.truncf %189 : vector<128x64xf32> to vector<128x64xbf16>
    %cst_70 = arith.constant dense<0.000000e+00> : vector<128x64xf32>
    %192 = tpu.matmul %190, %191, %cst_70 {dimension_numbers = #tpu.dot_dimension_numbers<[1], [0], [0], [1], [0, 0, 1, 1], [], []>} : vector<128x128xbf16>, vector<128x64xbf16>, vector<128x64xf32> -> vector<128x64xf32>
    %c1_71 = arith.constant 1 : index
    %c0_72 = arith.constant 0 : index
    %c0_73 = arith.constant 0 : index
    %193 = vector.load %arg18[%c1_71, %c0_72, %c0_73] : memref<2x1x64xf32, #tpu.memory_space<vmem>>, vector<1x1x64xf32>
    %194 = vector.shape_cast %193 : vector<1x1x64xf32> to vector<1x64xf32>
    %195 = vector.broadcast %194 : vector<1x64xf32> to vector<128x64xf32>
    %196 = arith.addf %192, %195 : vector<128x64xf32>
    %197 = arith.negf %196 : vector<128x64xf32>
    %198 = math.exp %197 : vector<128x64xf32>
    %cst_74 = arith.constant 1.000000e+00 : f32
    %199 = vector.broadcast %cst_74 : f32 to vector<128x64xf32>
    %200 = arith.addf %199, %198 : vector<128x64xf32>
    %201 = arith.divf %199, %200 : vector<128x64xf32>
    %202 = arith.mulf %196, %201 : vector<128x64xf32>
    %203 = arith.addf %128, %202 : vector<128x64xf32>
    %c1_75 = arith.constant 1 : index
    %c0_76 = arith.constant 0 : index
    %c0_77 = arith.constant 0 : index
    %204 = vector.load %arg16[%c1_75, %c0_76, %c0_77] : memref<2x64x32xf32, #tpu.memory_space<vmem>>, vector<1x64x32xf32>
    %205 = vector.shape_cast %204 : vector<1x64x32xf32> to vector<64x32xf32>
    %206 = arith.truncf %203 : vector<128x64xf32> to vector<128x64xbf16>
    %207 = arith.truncf %205 : vector<64x32xf32> to vector<64x32xbf16>
    %cst_78 = arith.constant dense<0.000000e+00> : vector<128x32xf32>
    %208 = tpu.matmul %206, %207, %cst_78 {dimension_numbers = #tpu.dot_dimension_numbers<[1], [0], [0], [1], [0, 0, 1, 1], [], []>} : vector<128x64xbf16>, vector<64x32xbf16>, vector<128x32xf32> -> vector<128x32xf32>
    %209 = arith.negf %208 : vector<128x32xf32>
    %210 = math.exp %209 : vector<128x32xf32>
    %cst_79 = arith.constant 1.000000e+00 : f32
    %211 = vector.broadcast %cst_79 : f32 to vector<128x32xf32>
    %212 = arith.addf %211, %210 : vector<128x32xf32>
    %213 = arith.divf %211, %212 : vector<128x32xf32>
    %214 = arith.addf %140, %171 : vector<128x32xf32>
    %215 = arith.mulf %214, %213 : vector<128x32xf32>
    %216 = arith.addf %142, %177 : vector<128x32xf32>
    %217 = arith.mulf %216, %213 : vector<128x32xf32>
    %218 = arith.addf %144, %183 : vector<128x32xf32>
    %219 = arith.mulf %218, %213 : vector<128x32xf32>
    %220 = vector.extract_strided_slice %203 {offsets = [0, 0], sizes = [64, 64], strides = [1, 1]} : vector<128x64xf32> to vector<64x64xf32>
    %c0_80 = arith.constant 0 : index
    %c0_81 = arith.constant 0 : index
    %221 = vector.load %arg19[%c0_80, %c0_81] : memref<64x32xf32, #tpu.memory_space<vmem>>, vector<64x32xf32>
    %222 = arith.truncf %220 : vector<64x64xf32> to vector<64x64xbf16>
    %223 = arith.truncf %221 : vector<64x32xf32> to vector<64x32xbf16>
    %cst_82 = arith.constant dense<0.000000e+00> : vector<64x32xf32>
    %224 = tpu.matmul %222, %223, %cst_82 {dimension_numbers = #tpu.dot_dimension_numbers<[1], [0], [0], [1], [0, 0, 1, 1], [], []>} : vector<64x64xbf16>, vector<64x32xbf16>, vector<64x32xf32> -> vector<64x32xf32>
    %c0_83 = arith.constant 0 : index
    %c0_84 = arith.constant 0 : index
    %225 = vector.load %arg20[%c0_83, %c0_84] : memref<1x32xf32, #tpu.memory_space<vmem>>, vector<1x32xf32>
    %226 = vector.broadcast %225 : vector<1x32xf32> to vector<64x32xf32>
    %227 = arith.addf %224, %226 : vector<64x32xf32>
    %c0_85 = arith.constant 0 : index
    %c0_86 = arith.constant 0 : index
    %228 = vector.load %arg22[%c0_85, %c0_86] : memref<32x8xf32, #tpu.memory_space<vmem>>, vector<32x8xf32>
    %229 = arith.truncf %227 : vector<64x32xf32> to vector<64x32xbf16>
    %230 = arith.truncf %228 : vector<32x8xf32> to vector<32x8xbf16>
    %cst_87 = arith.constant dense<0.000000e+00> : vector<64x8xf32>
    %231 = tpu.matmul %229, %230, %cst_87 {dimension_numbers = #tpu.dot_dimension_numbers<[1], [0], [0], [1], [0, 0, 1, 1], [], []>} : vector<64x32xbf16>, vector<32x8xbf16>, vector<64x8xf32> -> vector<64x8xf32>
    %c0_88 = arith.constant 0 : index
    %c0_89 = arith.constant 0 : index
    %232 = vector.load %arg23[%c0_88, %c0_89] : memref<1x8xf32, #tpu.memory_space<vmem>>, vector<1x8xf32>
    %233 = vector.broadcast %232 : vector<1x8xf32> to vector<64x8xf32>
    %234 = arith.addf %231, %233 : vector<64x8xf32>
    %c0_90 = arith.constant 0 : index
    %c0_91 = arith.constant 0 : index
    %235 = vector.load %arg21[%c0_90, %c0_91] : memref<1x32xf32, #tpu.memory_space<vmem>>, vector<1x32xf32>
    %236 = vector.extract_strided_slice %215 {offsets = [0, 0], sizes = [64, 32], strides = [1, 1]} : vector<128x32xf32> to vector<64x32xf32>
    %237 = vector.broadcast %235 : vector<1x32xf32> to vector<64x32xf32>
    %238 = arith.mulf %236, %237 : vector<64x32xf32>
    %cst_92 = arith.constant dense<0.000000e+00> : vector<64xf32>
    %239 = vector.multi_reduction <add>, %238, %cst_92 [1] : vector<64x32xf32> to vector<64xf32>
    %240 = vector.shape_cast %239 : vector<64xf32> to vector<64x1xf32>
    %241 = vector.extract_strided_slice %217 {offsets = [0, 0], sizes = [64, 32], strides = [1, 1]} : vector<128x32xf32> to vector<64x32xf32>
    %242 = vector.broadcast %235 : vector<1x32xf32> to vector<64x32xf32>
    %243 = arith.mulf %241, %242 : vector<64x32xf32>
    %cst_93 = arith.constant dense<0.000000e+00> : vector<64xf32>
    %244 = vector.multi_reduction <add>, %243, %cst_93 [1] : vector<64x32xf32> to vector<64xf32>
    %245 = vector.shape_cast %244 : vector<64xf32> to vector<64x1xf32>
    %246 = vector.extract_strided_slice %219 {offsets = [0, 0], sizes = [64, 32], strides = [1, 1]} : vector<128x32xf32> to vector<64x32xf32>
    %247 = vector.broadcast %235 : vector<1x32xf32> to vector<64x32xf32>
    %248 = arith.mulf %246, %247 : vector<64x32xf32>
    %cst_94 = arith.constant dense<0.000000e+00> : vector<64xf32>
    %249 = vector.multi_reduction <add>, %248, %cst_94 [1] : vector<64x32xf32> to vector<64xf32>
    %250 = vector.shape_cast %249 : vector<64xf32> to vector<64x1xf32>
    %251 = tpu.concatenate %240, %245, %250, %234 in 1 : vector<64x1xf32>, vector<64x1xf32>, vector<64x1xf32>, vector<64x8xf32> -> vector<64x11xf32>
    %c0_95 = arith.constant 0 : index
    %c0_96 = arith.constant 0 : index
    %252 = vector.load %arg24[%c0_95, %c0_96] : memref<64x11xf32, #tpu.memory_space<vmem>>, vector<64x11xf32>
    tpu.vector_store %arg24[%c0_95, %c0_96], %251 {strides = array<i32>} : memref<64x11xf32, #tpu.memory_space<vmem>>, vector<64x11xf32>,
    return
  }
  func.func @transform_0(%arg0: i32) -> (i32, i32) {
    %c0_i32 = arith.constant 0 : i32
    %c0_i32_0 = arith.constant 0 : i32
    return %arg0, %c0_i32 : i32, i32
  }
  func.func @transform_1(%arg0: i32) -> (i32, i32) {
    %c0_i32 = arith.constant 0 : i32
    %c0_i32_0 = arith.constant 0 : i32
    return %arg0, %c0_i32 : i32, i32
  }
  func.func @transform_2(%arg0: i32) -> (i32, i32) {
    %c0_i32 = arith.constant 0 : i32
    %c0_i32_0 = arith.constant 0 : i32
    return %arg0, %c0_i32 : i32, i32
  }
  func.func @transform_3(%arg0: i32) -> (i32, i32) {
    %c0_i32 = arith.constant 0 : i32
    %c0_i32_0 = arith.constant 0 : i32
    return %arg0, %c0_i32 : i32, i32
  }
  func.func @transform_4(%arg0: i32) -> (i32, i32) {
    %c0_i32 = arith.constant 0 : i32
    %c0_i32_0 = arith.constant 0 : i32
    return %arg0, %c0_i32 : i32, i32
  }
  func.func @transform_5(%arg0: i32) -> (i32, i32) {
    %c0_i32 = arith.constant 0 : i32
    %c0_i32_0 = arith.constant 0 : i32
    return %arg0, %c0_i32 : i32, i32
  }
  func.func @transform_6(%arg0: i32) -> (i32, i32, i32) {
    %c0_i32 = arith.constant 0 : i32
    %c0_i32_0 = arith.constant 0 : i32
    %c0_i32_1 = arith.constant 0 : i32
    return %arg0, %c0_i32, %c0_i32_0 : i32, i32, i32
  }
  func.func @transform_7(%arg0: i32) -> (i32, i32) {
    %c0_i32 = arith.constant 0 : i32
    %c0_i32_0 = arith.constant 0 : i32
    %c0_i32_1 = arith.constant 0 : i32
    return %c0_i32, %c0_i32_0 : i32, i32
  }
  func.func @transform_8(%arg0: i32) -> (i32, i32) {
    %c0_i32 = arith.constant 0 : i32
    %c0_i32_0 = arith.constant 0 : i32
    %c0_i32_1 = arith.constant 0 : i32
    return %c0_i32, %c0_i32_0 : i32, i32
  }
  func.func @transform_9(%arg0: i32) -> (i32, i32) {
    %c0_i32 = arith.constant 0 : i32
    %c0_i32_0 = arith.constant 0 : i32
    %c0_i32_1 = arith.constant 0 : i32
    return %c0_i32, %c0_i32_0 : i32, i32
  }
  func.func @transform_10(%arg0: i32) -> (i32, i32) {
    %c0_i32 = arith.constant 0 : i32
    %c0_i32_0 = arith.constant 0 : i32
    %c0_i32_1 = arith.constant 0 : i32
    return %c0_i32, %c0_i32_0 : i32, i32
  }
  func.func @transform_11(%arg0: i32) -> (i32, i32) {
    %c0_i32 = arith.constant 0 : i32
    %c0_i32_0 = arith.constant 0 : i32
    %c0_i32_1 = arith.constant 0 : i32
    return %c0_i32, %c0_i32_0 : i32, i32
  }
  func.func @transform_12(%arg0: i32) -> (i32, i32) {
    %c0_i32 = arith.constant 0 : i32
    %c0_i32_0 = arith.constant 0 : i32
    %c0_i32_1 = arith.constant 0 : i32
    return %c0_i32, %c0_i32_0 : i32, i32
  }
  func.func @transform_13(%arg0: i32) -> (i32, i32) {
    %c0_i32 = arith.constant 0 : i32
    %c0_i32_0 = arith.constant 0 : i32
    %c0_i32_1 = arith.constant 0 : i32
    return %c0_i32, %c0_i32_0 : i32, i32
  }
  func.func @transform_14(%arg0: i32) -> (i32, i32, i32) {
    %c0_i32 = arith.constant 0 : i32
    %c0_i32_0 = arith.constant 0 : i32
    %c0_i32_1 = arith.constant 0 : i32
    %c0_i32_2 = arith.constant 0 : i32
    return %c0_i32, %c0_i32_0, %c0_i32_1 : i32, i32, i32
  }
  func.func @transform_15(%arg0: i32) -> (i32, i32, i32) {
    %c0_i32 = arith.constant 0 : i32
    %c0_i32_0 = arith.constant 0 : i32
    %c0_i32_1 = arith.constant 0 : i32
    %c0_i32_2 = arith.constant 0 : i32
    return %c0_i32, %c0_i32_0, %c0_i32_1 : i32, i32, i32
  }
  func.func @transform_16(%arg0: i32) -> (i32, i32, i32) {
    %c0_i32 = arith.constant 0 : i32
    %c0_i32_0 = arith.constant 0 : i32
    %c0_i32_1 = arith.constant 0 : i32
    %c0_i32_2 = arith.constant 0 : i32
    return %c0_i32, %c0_i32_0, %c0_i32_1 : i32, i32, i32
  }
  func.func @transform_17(%arg0: i32) -> (i32, i32, i32) {
    %c0_i32 = arith.constant 0 : i32
    %c0_i32_0 = arith.constant 0 : i32
    %c0_i32_1 = arith.constant 0 : i32
    %c0_i32_2 = arith.constant 0 : i32
    return %c0_i32, %c0_i32_0, %c0_i32_1 : i32, i32, i32
  }
  func.func @transform_18(%arg0: i32) -> (i32, i32) {
    %c0_i32 = arith.constant 0 : i32
    %c0_i32_0 = arith.constant 0 : i32
    %c0_i32_1 = arith.constant 0 : i32
    return %c0_i32, %c0_i32_0 : i32, i32
  }
  func.func @transform_19(%arg0: i32) -> (i32, i32) {
    %c0_i32 = arith.constant 0 : i32
    %c0_i32_0 = arith.constant 0 : i32
    %c0_i32_1 = arith.constant 0 : i32
    return %c0_i32, %c0_i32_0 : i32, i32
  }
  func.func @transform_20(%arg0: i32) -> (i32, i32) {
    %c0_i32 = arith.constant 0 : i32
    %c0_i32_0 = arith.constant 0 : i32
    %c0_i32_1 = arith.constant 0 : i32
    return %c0_i32, %c0_i32_0 : i32, i32
  }
  func.func @transform_21(%arg0: i32) -> (i32, i32) {
    %c0_i32 = arith.constant 0 : i32
    %c0_i32_0 = arith.constant 0 : i32
    %c0_i32_1 = arith.constant 0 : i32
    return %c0_i32, %c0_i32_0 : i32, i32
  }
  func.func @transform_22(%arg0: i32) -> (i32, i32) {
    %c0_i32 = arith.constant 0 : i32
    %c0_i32_0 = arith.constant 0 : i32
    %c0_i32_1 = arith.constant 0 : i32
    return %c0_i32, %c0_i32_0 : i32, i32
  }
  func.func @transform_23(%arg0: i32) -> (i32, i32) {
    %c0_i32 = arith.constant 0 : i32
    %c0_i32_0 = arith.constant 0 : i32
    return %arg0, %c0_i32 : i32, i32
  }
}

</mosaic_0001>

<llo_original>
// kernel: tpu_custom_call.1
$region0: #{tpu_custom_call.1}
  #allocation0 [shape = 'u32[]', space=smem, size = 0x4, offset = 0x4, fixed_abs, tag = 'smem constant byte address 0x4 - core index']
  #allocation1 [shape = 'u32[144,128]{1,0:T(1,128)}', space=vmem, size = 0x12000, scoped, tag = 'internal scratch']
  %s0 = inlined_call_operand.vmem [shape: f32[64,8], index: 0, kind: input, shape index: {}]
  %s1 = inlined_call_operand.vmem [shape: f32[64,10], index: 1, kind: input, shape index: {}]
  %s2 = inlined_call_operand.vmem [shape: f32[64,3], index: 2, kind: input, shape index: {}]
  %s3 = inlined_call_operand.vmem [shape: f32[64,3], index: 3, kind: input, shape index: {}]
  %s4 = inlined_call_operand.vmem [shape: f32[64,4], index: 4, kind: input, shape index: {}]
  %s5 = inlined_call_operand.vmem [shape: f32[64,4], index: 5, kind: input, shape index: {}]
  %s6 = inlined_call_operand.vmem [shape: f32[1,1,128], index: 6, kind: input, shape index: {}]
  %s7 = inlined_call_operand.vmem [shape: f32[128,128], index: 7, kind: input, shape index: {}]
  %s8 = inlined_call_operand.vmem [shape: f32[8,32], index: 8, kind: input, shape index: {}]
  %s9 = inlined_call_operand.vmem [shape: f32[1,32], index: 9, kind: input, shape index: {}]
  %s10 = inlined_call_operand.vmem [shape: f32[10,32], index: 10, kind: input, shape index: {}]
  %s11 = inlined_call_operand.vmem [shape: f32[1,32], index: 11, kind: input, shape index: {}]
  %s12 = inlined_call_operand.vmem [shape: f32[36,64], index: 12, kind: input, shape index: {}]
  %s13 = inlined_call_operand.vmem [shape: f32[1,64], index: 13, kind: input, shape index: {}]
  %s14 = inlined_call_operand.vmem [shape: f32[2,64,32], index: 14, kind: input, shape index: {}]
  %s15 = inlined_call_operand.vmem [shape: f32[2,64,32], index: 15, kind: input, shape index: {}]
  %s16 = inlined_call_operand.vmem [shape: f32[2,128,64], index: 16, kind: input, shape index: {}]
  %s17 = inlined_call_operand.vmem [shape: f32[2,1,64], index: 17, kind: input, shape index: {}]
  %s18 = inlined_call_operand.vmem [shape: f32[64,32], index: 18, kind: input, shape index: {}]
  %s19 = inlined_call_operand.vmem [shape: f32[1,32], index: 19, kind: input, shape index: {}]
  %s20 = inlined_call_operand.vmem [shape: f32[1,32], index: 20, kind: input, shape index: {}]
  %s21 = inlined_call_operand.vmem [shape: f32[32,8], index: 21, kind: input, shape index: {}]
  %s22 = inlined_call_operand.vmem [shape: f32[1,8], index: 22, kind: input, shape index: {}]
  %s23 = inlined_call_operand.vmem [shape: f32[64,11], index: 23, kind: output, shape index: {}]
  %s24 = sld [smem:[#allocation0]]
  $region102: #{tpu_custom_call.1} parent=0
    _
  %s26 = ssub.s32 1, %s24
  %s27 = scalar_select 0, %s26, %s24
  // Predicated region
  $region2: #{tpu_custom_call.1} parent=0 // pred_check
    _
  $region3: #{tpu_custom_call.1} parent=0 // pred_check_branch
    %29 = sbr.rel (0) target = $region5
  $region4: #{tpu_custom_call.1} parent=0 // pred_region
    _
  $region5: #{tpu_custom_call.1} parent=0 // pred_fallthru
    _
  // Predicated region
  $region6: #{tpu_custom_call.1} parent=0 // pred_check
    _
  $region7: #{tpu_custom_call.1} parent=0 // pred_check_branch
    %31 = sbr.rel (0) target = $region9
  $region8: #{tpu_custom_call.1} parent=0 // pred_region
    _
  $region9: #{tpu_custom_call.1} parent=0 // pred_fallthru
    _
  // Predicated region
  $region10: #{tpu_custom_call.1} parent=0 // pred_check
    _
  $region11: #{tpu_custom_call.1} parent=0 // pred_check_branch
    %33 = sbr.rel (0) target = $region13
  $region12: #{tpu_custom_call.1} parent=0 // pred_region
    _
  $region13: #{tpu_custom_call.1} parent=0 // pred_fallthru
    _
  // Predicated region
  $region14: #{tpu_custom_call.1} parent=0 // pred_check
    _
  $region15: #{tpu_custom_call.1} parent=0 // pred_check_branch
    %35 = sbr.rel (0) target = $region17
  $region16: #{tpu_custom_call.1} parent=0 // pred_region
    _
  $region17: #{tpu_custom_call.1} parent=0 // pred_fallthru
    _
  // Predicated region
  $region18: #{tpu_custom_call.1} parent=0 // pred_check
    _
  $region19: #{tpu_custom_call.1} parent=0 // pred_check_branch
    %37 = sbr.rel (0) target = $region21
  $region20: #{tpu_custom_call.1} parent=0 // pred_region
    _
  $region21: #{tpu_custom_call.1} parent=0 // pred_fallthru
    _
  // Predicated region
  $region22: #{tpu_custom_call.1} parent=0 // pred_check
    _
  $region23: #{tpu_custom_call.1} parent=0 // pred_check_branch
    %39 = sbr.rel (0) target = $region25
  $region24: #{tpu_custom_call.1} parent=0 // pred_region
    _
  $region25: #{tpu_custom_call.1} parent=0 // pred_fallthru
    _
  // Predicated region
  $region26: #{tpu_custom_call.1} parent=0 // pred_check
    _
  $region27: #{tpu_custom_call.1} parent=0 // pred_check_branch
    %41 = sbr.rel (0) target = $region29
  $region28: #{tpu_custom_call.1} parent=0 // pred_region
    _
  $region29: #{tpu_custom_call.1} parent=0 // pred_fallthru
    _
  // Predicated region
  $region30: #{tpu_custom_call.1} parent=0 // pred_check
    _
  $region31: #{tpu_custom_call.1} parent=0 // pred_check_branch
    %43 = sbr.rel (0) target = $region33
  $region32: #{tpu_custom_call.1} parent=0 // pred_region
    _
  $region33: #{tpu_custom_call.1} parent=0 // pred_fallthru
    _
  // Predicated region
  $region34: #{tpu_custom_call.1} parent=0 // pred_check
    _
  $region35: #{tpu_custom_call.1} parent=0 // pred_check_branch
    %45 = sbr.rel (0) target = $region37
  $region36: #{tpu_custom_call.1} parent=0 // pred_region
    _
  $region37: #{tpu_custom_call.1} parent=0 // pred_fallthru
    _
  // Predicated region
  $region38: #{tpu_custom_call.1} parent=0 // pred_check
    _
  $region39: #{tpu_custom_call.1} parent=0 // pred_check_branch
    %47 = sbr.rel (0) target = $region41
  $region40: #{tpu_custom_call.1} parent=0 // pred_region
    _
  $region41: #{tpu_custom_call.1} parent=0 // pred_fallthru
    _
  // Predicated region
  $region42: #{tpu_custom_call.1} parent=0 // pred_check
    _
  $region43: #{tpu_custom_call.1} parent=0 // pred_check_branch
    %49 = sbr.rel (0) target = $region45
  $region44: #{tpu_custom_call.1} parent=0 // pred_region
    _
  $region45: #{tpu_custom_call.1} parent=0 // pred_fallthru
    _
  // Predicated region
  $region46: #{tpu_custom_call.1} parent=0 // pred_check
    _
  $region47: #{tpu_custom_call.1} parent=0 // pred_check_branch
    %51 = sbr.rel (0) target = $region49
  $region48: #{tpu_custom_call.1} parent=0 // pred_region
    _
  $region49: #{tpu_custom_call.1} parent=0 // pred_fallthru
    _
  // Predicated region
  $region50: #{tpu_custom_call.1} parent=0 // pred_check
    _
  $region51: #{tpu_custom_call.1} parent=0 // pred_check_branch
    %53 = sbr.rel (0) target = $region53
  $region52: #{tpu_custom_call.1} parent=0 // pred_region
    _
  $region53: #{tpu_custom_call.1} parent=0 // pred_fallthru
    _
  // Predicated region
  $region54: #{tpu_custom_call.1} parent=0 // pred_check
    _
  $region55: #{tpu_custom_call.1} parent=0 // pred_check_branch
    %55 = sbr.rel (0) target = $region57
  $region56: #{tpu_custom_call.1} parent=0 // pred_region
    _
  $region57: #{tpu_custom_call.1} parent=0 // pred_fallthru
    _
  // Predicated region
  $region58: #{tpu_custom_call.1} parent=0 // pred_check
    _
  $region59: #{tpu_custom_call.1} parent=0 // pred_check_branch
    %57 = sbr.rel (0) target = $region61
  $region60: #{tpu_custom_call.1} parent=0 // pred_region
    _
  $region61: #{tpu_custom_call.1} parent=0 // pred_fallthru
    _
  // Predicated region
  $region62: #{tpu_custom_call.1} parent=0 // pred_check
    _
  $region63: #{tpu_custom_call.1} parent=0 // pred_check_branch
    %59 = sbr.rel (0) target = $region65
  $region64: #{tpu_custom_call.1} parent=0 // pred_region
    _
  $region65: #{tpu_custom_call.1} parent=0 // pred_fallthru
    _
  // Predicated region
  $region66: #{tpu_custom_call.1} parent=0 // pred_check
    _
  $region67: #{tpu_custom_call.1} parent=0 // pred_check_branch
    %61 = sbr.rel (0) target = $region69
  $region68: #{tpu_custom_call.1} parent=0 // pred_region
    _
  $region69: #{tpu_custom_call.1} parent=0 // pred_fallthru
    _
  // Predicated region
  $region70: #{tpu_custom_call.1} parent=0 // pred_check
    _
  $region71: #{tpu_custom_call.1} parent=0 // pred_check_branch
    %63 = sbr.rel (0) target = $region73
  $region72: #{tpu_custom_call.1} parent=0 // pred_region
    _
  $region73: #{tpu_custom_call.1} parent=0 // pred_fallthru
    _
  // Predicated region
  $region74: #{tpu_custom_call.1} parent=0 // pred_check
    _
  $region75: #{tpu_custom_call.1} parent=0 // pred_check_branch
    %65 = sbr.rel (0) target = $region77
  $region76: #{tpu_custom_call.1} parent=0 // pred_region
    _
  $region77: #{tpu_custom_call.1} parent=0 // pred_fallthru
    _
  // Predicated region
  $region78: #{tpu_custom_call.1} parent=0 // pred_check
    _
  $region79: #{tpu_custom_call.1} parent=0 // pred_check_branch
    %67 = sbr.rel (0) target = $region81
  $region80: #{tpu_custom_call.1} parent=0 // pred_region
    _
  $region81: #{tpu_custom_call.1} parent=0 // pred_fallthru
    _
  // Predicated region
  $region82: #{tpu_custom_call.1} parent=0 // pred_check
    _
  $region83: #{tpu_custom_call.1} parent=0 // pred_check_branch
    %69 = sbr.rel (0) target = $region85
  $region84: #{tpu_custom_call.1} parent=0 // pred_region
    _
  $region85: #{tpu_custom_call.1} parent=0 // pred_fallthru
    _
  // Predicated region
  $region86: #{tpu_custom_call.1} parent=0 // pred_check
    _
  $region87: #{tpu_custom_call.1} parent=0 // pred_check_branch
    %71 = sbr.rel (0) target = $region89
  $region88: #{tpu_custom_call.1} parent=0 // pred_region
    _
  $region89: #{tpu_custom_call.1} parent=0 // pred_fallthru
    _
  // Predicated region
  $region90: #{tpu_custom_call.1} parent=0 // pred_check
    _
  $region91: #{tpu_custom_call.1} parent=0 // pred_check_branch
    %73 = sbr.rel (0) target = $region93
  $region92: #{tpu_custom_call.1} parent=0 // pred_region
    _
  $region93: #{tpu_custom_call.1} parent=0 // pred_fallthru
    _
  %v75 = vld [vmem:[%s0] sm:$0xff]
  %v76 = vld [vmem:[%s0 + $0x8] sm:$0xff]
  %v77 = vld [vmem:[%s0 + $0x10] sm:$0xff]
  %v78 = vld [vmem:[%s0 + $0x18] sm:$0xff]
  %v79 = vld [vmem:[%s0 + $0x20] sm:$0xff]
  %v80 = vld [vmem:[%s0 + $0x28] sm:$0xff]
  %v81 = vld [vmem:[%s0 + $0x30] sm:$0xff]
  %v82 = vld [vmem:[%s0 + $0x38] sm:$0xff]
  %v83 = vld [vmem:[%s8] sm:$0xff]
  %v84 = vpack.c.bf16 %v76, %v75
  %v85 = vpack.c.bf16 %v78, %v77
  %v86 = vpack.c.bf16 %v80, %v79
  %v87 = vpack.c.bf16 %v82, %v81
  %v88 = vpack.c.bf16 %v83, %v83
  %v89 = vld [vmem:[%s9] sm:$0x1]
  %v91 = vlaneseq
  %v92 = vshrl.u32 %v91, 7
  %v93 = vsub.s32 0, %v92
  %v94 = vrot.slane %v89, %v93
  %vm96 = vcmask 64512
  %v98 = vsel %vm96, %v84, 0
  %v101 = vsel %vm96, %v85, 0
  %v104 = vsel %vm96, %v86, 0
  %v107 = vsel %vm96, %v87, 0
  %vm109 = vcmask 1043456
  %v111 = vsel %vm109, %v88, 0
  %113 = vmatprep.subr.bf16.mxu0 0
  %114 = vmatpush1.bf16.msra.mxu0 0
  %115 = vmatprep.subr.bf16.mxu0 0
  %116 = vmatpush1.bf16.msra.mxu0 0
  %117 = vmatprep.subr.bf16.mxu0 0
  %118 = vmatpush1.bf16.msra.mxu0 0
  %119 = vmatprep.subr.bf16.mxu0 0
  %120 = vmatpush1.bf16.msra.mxu0 0
  %121 = vmatprep.subr.bf16.mxu0 0
  %122 = vmatpush1.bf16.msra.mxu0 0
  %123 = vmatprep.subr.bf16.mxu0 0
  %124 = vmatpush1.bf16.msra.mxu0 0
  %125 = vmatprep.subr.bf16.mxu0 0
  %126 = vmatpush1.bf16.msra.mxu0 0
  %127 = vmatprep.subr.bf16.mxu0 0
  %128 = vmatpush1.bf16.msra.mxu0 %v111
  %129 = vmatprep.subr.bf16.mxu0 0
  %130 = vmatpush2.bf16.msra.mxu0 0
  %131 = vmatprep.subr.bf16.mxu0 0
  %132 = vmatpush2.bf16.msra.mxu0 0
  %133 = vmatprep.subr.bf16.mxu0 0
  %134 = vmatpush2.bf16.msra.mxu0 0
  %135 = vmatprep.subr.bf16.mxu0 0
  %136 = vmatpush2.bf16.msra.mxu0 0
  %137 = vmatprep.subr.bf16.mxu0 0
  %138 = vmatpush2.bf16.msra.mxu0 0
  %139 = vmatprep.subr.bf16.mxu0 0
  %140 = vmatpush2.bf16.msra.mxu0 0
  %141 = vmatprep.subr.bf16.mxu0 0
  %142 = vmatpush2.bf16.msra.mxu0 0
  %143 = vmatprep.subr.bf16.mxu0 0
  %144 = vmatpush2.bf16.msra.mxu0 0
  %145 = vmatprep.mubr.bf16.mxu0 0
  %146 = vmatmul.mubr.bf16.gmra.mxu0 %v98
  %v147 = vpop.f32.mrf.mxu0
  %v148 = vadd.f32 %v94, %v147
  %v149 = vpop.f32.mrf.mxu0
  %v150 = vpop.f32.mrf.mxu0
  %v151 = vadd.f32 %v94, %v150
  %v152 = vpop.f32.mrf.mxu0
  %153 = vmatprep.mubr.bf16.mxu0 0
  %154 = vmatmul.mubr.bf16.gmra.mxu0 %v101
  %v155 = vpop.f32.mrf.mxu0
  %v156 = vadd.f32 %v94, %v155
  %v157 = vpop.f32.mrf.mxu0
  %v158 = vpop.f32.mrf.mxu0
  %v159 = vadd.f32 %v94, %v158
  %v160 = vpop.f32.mrf.mxu0
  %161 = vmatprep.mubr.bf16.mxu0 0
  %162 = vmatmul.mubr.bf16.gmra.mxu0 %v104
  %v163 = vpop.f32.mrf.mxu0
  %v164 = vadd.f32 %v94, %v163
  %v165 = vpop.f32.mrf.mxu0
  %v166 = vpop.f32.mrf.mxu0
  %v167 = vadd.f32 %v94, %v166
  %v168 = vpop.f32.mrf.mxu0
  %169 = vmatprep.mubr.bf16.mxu0 0
  %170 = vmatmul.mubr.bf16.gmra.mxu0 %v107
  %v171 = vpop.f32.mrf.mxu0
  %v172 = vadd.f32 %v94, %v171
  %v173 = vpop.f32.mrf.mxu0
  %v174 = vpop.f32.mrf.mxu0
  %v175 = vadd.f32 %v94, %v174
  %v176 = vpop.f32.mrf.mxu0
  %177 = vdwg.mxu0
  %v178 = vld [vmem:[%s1] sm:$0xff]
  %v179 = vld [vmem:[%s1 + $0x8] sm:$0xff]
  %v180 = vld [vmem:[%s1 + $0x10] sm:$0xff]
  %v181 = vld [vmem:[%s1 + $0x18] sm:$0xff]
  %v182 = vld [vmem:[%s1 + $0x20] sm:$0xff]
  %v183 = vld [vmem:[%s1 + $0x28] sm:$0xff]
  %v184 = vld [vmem:[%s1 + $0x30] sm:$0xff]
  %v185 = vld [vmem:[%s1 + $0x38] sm:$0xff]
  %v186 = vld [vmem:[%s10] sm:$0xff]
  %v187 = vld [vmem:[%s10 + $0x8] sm:$0x3]
  %v188 = vpack.c.bf16 %v179, %v178
  %v189 = vpack.c.bf16 %v181, %v180
  %v190 = vpack.c.bf16 %v183, %v182
  %v191 = vpack.c.bf16 %v185, %v184
  %v192 = vpack.c.bf16 %v187, %v186
  %v193 = vld [vmem:[%s11] sm:$0x1]
  %v195 = vlaneseq
  %v196 = vshrl.u32 %v195, 7
  %v197 = vsub.s32 0, %v196
  %v198 = vrot.slane %v193, %v197
  %vm200 = vcmask 80896
  %v202 = vsel %vm200, %v188, 0
  %v205 = vsel %vm200, %v189, 0
  %v208 = vsel %vm200, %v190, 0
  %v211 = vsel %vm200, %v191, 0
  %vm213 = vcmask 1044480
  %v215 = vsel %vm213, %v192, 0
  %217 = vmatprep.subr.bf16.mxu0 0
  %218 = vmatpush1.bf16.msra.mxu0 0
  %219 = vmatprep.subr.bf16.mxu0 0
  %220 = vmatpush1.bf16.msra.mxu0 0
  %221 = vmatprep.subr.bf16.mxu0 0
  %222 = vmatpush1.bf16.msra.mxu0 0
  %223 = vmatprep.subr.bf16.mxu0 0
  %224 = vmatpush1.bf16.msra.mxu0 0
  %225 = vmatprep.subr.bf16.mxu0 0
  %226 = vmatpush1.bf16.msra.mxu0 0
  %227 = vmatprep.subr.bf16.mxu0 0
  %228 = vmatpush1.bf16.msra.mxu0 0
  %229 = vmatprep.subr.bf16.mxu0 0
  %230 = vmatpush1.bf16.msra.mxu0 0
  %231 = vmatprep.subr.bf16.mxu0 0
  %232 = vmatpush1.bf16.msra.mxu0 %v215
  %233 = vmatprep.subr.bf16.mxu0 0
  %234 = vmatpush2.bf16.msra.mxu0 0
  %235 = vmatprep.subr.bf16.mxu0 0
  %236 = vmatpush2.bf16.msra.mxu0 0
  %237 = vmatprep.subr.bf16.mxu0 0
  %238 = vmatpush2.bf16.msra.mxu0 0
  %239 = vmatprep.subr.bf16.mxu0 0
  %240 = vmatpush2.bf16.msra.mxu0 0
  %241 = vmatprep.subr.bf16.mxu0 0
  %242 = vmatpush2.bf16.msra.mxu0 0
  %243 = vmatprep.subr.bf16.mxu0 0
  %244 = vmatpush2.bf16.msra.mxu0 0
  %245 = vmatprep.subr.bf16.mxu0 0
  %246 = vmatpush2.bf16.msra.mxu0 0
  %247 = vmatprep.subr.bf16.mxu0 0
  %248 = vmatpush2.bf16.msra.mxu0 0
  %249 = vmatprep.mubr.bf16.mxu0 0
  %250 = vmatmul.mubr.bf16.gmra.mxu0 %v202
  %v251 = vpop.f32.mrf.mxu0
  %v252 = vadd.f32 %v198, %v251
  %v253 = vpop.f32.mrf.mxu0
  %v254 = vpop.f32.mrf.mxu0
  %v255 = vadd.f32 %v198, %v254
  %v256 = vpop.f32.mrf.mxu0
  %257 = vmatprep.mubr.bf16.mxu0 0
  %258 = vmatmul.mubr.bf16.gmra.mxu0 %v205
  %v259 = vpop.f32.mrf.mxu0
  %v260 = vadd.f32 %v198, %v259
  %v261 = vpop.f32.mrf.mxu0
  %v262 = vpop.f32.mrf.mxu0
  %v263 = vadd.f32 %v198, %v262
  %v264 = vpop.f32.mrf.mxu0
  %265 = vmatprep.mubr.bf16.mxu0 0
  %266 = vmatmul.mubr.bf16.gmra.mxu0 %v208
  %v267 = vpop.f32.mrf.mxu0
  %v268 = vadd.f32 %v198, %v267
  %v269 = vpop.f32.mrf.mxu0
  %v270 = vpop.f32.mrf.mxu0
  %v271 = vadd.f32 %v198, %v270
  %v272 = vpop.f32.mrf.mxu0
  %273 = vmatprep.mubr.bf16.mxu0 0
  %274 = vmatmul.mubr.bf16.gmra.mxu0 %v211
  %v275 = vpop.f32.mrf.mxu0
  %v276 = vadd.f32 %v198, %v275
  %v277 = vpop.f32.mrf.mxu0
  %v278 = vpop.f32.mrf.mxu0
  %v279 = vadd.f32 %v198, %v278
  %v280 = vpop.f32.mrf.mxu0
  %281 = vdwg.mxu0
  %v282 = vld [vmem:[%s4] sm:$0xff]
  %v283 = vld [vmem:[%s4 + $0x8] sm:$0xff]
  %v284 = vld [vmem:[%s4 + $0x10] sm:$0xff]
  %v285 = vld [vmem:[%s4 + $0x18] sm:$0xff]
  %v286 = vld [vmem:[%s4 + $0x20] sm:$0xff]
  %v287 = vld [vmem:[%s4 + $0x28] sm:$0xff]
  %v288 = vld [vmem:[%s4 + $0x30] sm:$0xff]
  %v289 = vld [vmem:[%s4 + $0x38] sm:$0xff]
  %298 = vrot.lane.b32.xlu0 %v282, 32
  %v299 = vpop.permute.xlu0 %298
  %300 = vrot.lane.b32.xlu0 %v283, 32
  %v301 = vpop.permute.xlu0 %300
  %302 = vrot.lane.b32.xlu0 %v284, 32
  %v303 = vpop.permute.xlu0 %302
  %304 = vrot.lane.b32.xlu0 %v285, 32
  %v305 = vpop.permute.xlu0 %304
  %306 = vrot.lane.b32.xlu0 %v286, 32
  %v307 = vpop.permute.xlu0 %306
  %308 = vrot.lane.b32.xlu0 %v287, 32
  %v309 = vpop.permute.xlu0 %308
  %310 = vrot.lane.b32.xlu0 %v288, 32
  %v311 = vpop.permute.xlu0 %310
  %312 = vrot.lane.b32.xlu0 %v289, 32
  %v313 = vpop.permute.xlu0 %312
  %vm322 = vcmask 261120
  %v323 = vsel %vm322, %v148, %v299
  %v324 = vsel %vm322, %v151, %v301
  %v325 = vsel %vm322, %v156, %v303
  %v326 = vsel %vm322, %v159, %v305
  %v327 = vsel %vm322, %v164, %v307
  %v328 = vsel %vm322, %v167, %v309
  %v329 = vsel %vm322, %v172, %v311
  %v330 = vsel %vm322, %v175, %v313
  %v331 = vld [vmem:[%s5] sm:$0xff]
  %v332 = vld [vmem:[%s5 + $0x8] sm:$0xff]
  %v333 = vld [vmem:[%s5 + $0x10] sm:$0xff]
  %v334 = vld [vmem:[%s5 + $0x18] sm:$0xff]
  %v335 = vld [vmem:[%s5 + $0x20] sm:$0xff]
  %v336 = vld [vmem:[%s5 + $0x28] sm:$0xff]
  %v337 = vld [vmem:[%s5 + $0x30] sm:$0xff]
  %v338 = vld [vmem:[%s5 + $0x38] sm:$0xff]
  %347 = vrot.lane.b32.xlu0 %v331, 32
  %v348 = vpop.permute.xlu0 %347
  %349 = vrot.lane.b32.xlu0 %v332, 32
  %v350 = vpop.permute.xlu0 %349
  %351 = vrot.lane.b32.xlu0 %v333, 32
  %v352 = vpop.permute.xlu0 %351
  %353 = vrot.lane.b32.xlu0 %v334, 32
  %v354 = vpop.permute.xlu0 %353
  %355 = vrot.lane.b32.xlu0 %v335, 32
  %v356 = vpop.permute.xlu0 %355
  %357 = vrot.lane.b32.xlu0 %v336, 32
  %v358 = vpop.permute.xlu0 %357
  %359 = vrot.lane.b32.xlu0 %v337, 32
  %v360 = vpop.permute.xlu0 %359
  %361 = vrot.lane.b32.xlu0 %v338, 32
  %v362 = vpop.permute.xlu0 %361
  %v371 = vsel %vm322, %v252, %v348
  %v372 = vsel %vm322, %v255, %v350
  %v373 = vsel %vm322, %v260, %v352
  %v374 = vsel %vm322, %v263, %v354
  %v375 = vsel %vm322, %v268, %v356
  %v376 = vsel %vm322, %v271, %v358
  %v377 = vsel %vm322, %v276, %v360
  %v378 = vsel %vm322, %v279, %v362
  %v379 = vld [vmem:[%s2] sm:$0xff]
  %v380 = vld [vmem:[%s2 + $0x8] sm:$0xff]
  %v381 = vld [vmem:[%s2 + $0x10] sm:$0xff]
  %v382 = vld [vmem:[%s2 + $0x18] sm:$0xff]
  %v383 = vld [vmem:[%s2 + $0x20] sm:$0xff]
  %v384 = vld [vmem:[%s2 + $0x28] sm:$0xff]
  %v385 = vld [vmem:[%s2 + $0x30] sm:$0xff]
  %v386 = vld [vmem:[%s2 + $0x38] sm:$0xff]
  %v387 = vld [vmem:[%s3] sm:$0xff]
  %v388 = vld [vmem:[%s3 + $0x8] sm:$0xff]
  %v389 = vld [vmem:[%s3 + $0x10] sm:$0xff]
  %v390 = vld [vmem:[%s3 + $0x18] sm:$0xff]
  %v391 = vld [vmem:[%s3 + $0x20] sm:$0xff]
  %v392 = vld [vmem:[%s3 + $0x28] sm:$0xff]
  %v393 = vld [vmem:[%s3 + $0x30] sm:$0xff]
  %v394 = vld [vmem:[%s3 + $0x38] sm:$0xff]
  %395 = vxpose.xlu0.b32.start [1/16] %v379, 128
  %396 = vxpose.xlu0.b32.cont [2/16] %v380, 128
  %397 = vxpose.xlu0.b32.cont [3/16] %v381, 128
  %398 = vxpose.xlu0.b32.cont [4/16] %v382, 128
  %399 = vxpose.xlu0.b32.cont [5/16] %v383, 128
  %400 = vxpose.xlu0.b32.cont [6/16] %v384, 128
  %401 = vxpose.xlu0.b32.cont [7/16] %v385, 128
  %402 = vxpose.xlu0.b32.cont [8/16] %v386, 128
  %403 = vxpose.xlu0.b32.cont [9/16] %v387, 128
  %404 = vxpose.xlu0.b32.cont [10/16] %v388, 128
  %405 = vxpose.xlu0.b32.cont [11/16] %v389, 128
  %406 = vxpose.xlu0.b32.cont [12/16] %v390, 128
  %407 = vxpose.xlu0.b32.cont [13/16] %v391, 128
  %408 = vxpose.xlu0.b32.cont [14/16] %v392, 128
  %409 = vxpose.xlu0.b32.cont [15/16] %v393, 128
  %410 = vxpose.xlu0.b32.end [16/16] %v394, 128
  %v411 = vpop.trf.xlu0
  %v412 = vpop.trf.xlu0
  %v413 = vpop.trf.xlu0
  %v414 = vpop.trf.xlu0
  %v415 = vpop.trf.xlu0
  %v416 = vpop.trf.xlu0
  %v417 = vpop.trf.xlu0
  %v418 = vpop.trf.xlu0
  %v419 = vpop.trf.xlu0
  %v420 = vpop.trf.xlu0
  %v421 = vpop.trf.xlu0
  %v422 = vpop.trf.xlu0
  %v423 = vpop.trf.xlu0
  %v424 = vpop.trf.xlu0
  %v425 = vpop.trf.xlu0
  %v426 = vpop.trf.xlu0
  %428 = vset.pattern.permute.xlu0 0
  %429 = vperm.xlu0 %428, %v379
  %v430 = vpop.permute.xlu0 %429
  %433 = vset.pattern.permute.xlu0 0
  %434 = vperm.xlu0 %433, %v380
  %v435 = vpop.permute.xlu0 %434
  %438 = vset.pattern.permute.xlu0 0
  %439 = vperm.xlu0 %438, %v381
  %v440 = vpop.permute.xlu0 %439
  %443 = vset.pattern.permute.xlu0 0
  %444 = vperm.xlu0 %443, %v382
  %v445 = vpop.permute.xlu0 %444
  %448 = vset.pattern.permute.xlu0 0
  %449 = vperm.xlu0 %448, %v383
  %v450 = vpop.permute.xlu0 %449
  %453 = vset.pattern.permute.xlu0 0
  %454 = vperm.xlu0 %453, %v384
  %v455 = vpop.permute.xlu0 %454
  %458 = vset.pattern.permute.xlu0 0
  %459 = vperm.xlu0 %458, %v385
  %v460 = vpop.permute.xlu0 %459
  %463 = vset.pattern.permute.xlu0 0
  %464 = vperm.xlu0 %463, %v386
  %v465 = vpop.permute.xlu0 %464
  %468 = vset.pattern.permute.xlu0 0
  %469 = vperm.xlu0 %468, %v387
  %v470 = vpop.permute.xlu0 %469
  %473 = vset.pattern.permute.xlu0 0
  %474 = vperm.xlu0 %473, %v388
  %v475 = vpop.permute.xlu0 %474
  %478 = vset.pattern.permute.xlu0 0
  %479 = vperm.xlu0 %478, %v389
  %v480 = vpop.permute.xlu0 %479
  %483 = vset.pattern.permute.xlu0 0
  %484 = vperm.xlu0 %483, %v390
  %v485 = vpop.permute.xlu0 %484
  %488 = vset.pattern.permute.xlu0 0
  %489 = vperm.xlu0 %488, %v391
  %v490 = vpop.permute.xlu0 %489
  %493 = vset.pattern.permute.xlu0 0
  %494 = vperm.xlu0 %493, %v392
  %v495 = vpop.permute.xlu0 %494
  %498 = vset.pattern.permute.xlu0 0
  %499 = vperm.xlu0 %498, %v393
  %v500 = vpop.permute.xlu0 %499
  %503 = vset.pattern.permute.xlu0 0
  %504 = vperm.xlu0 %503, %v394
  %v505 = vpop.permute.xlu0 %504
  %v507 = vlaneseq
  %v508 = vshrl.u32 %v507, 7
  %v509 = vsub.s32 0, %v508
  %v510 = vrot.slane %v411, %v509
  %v511 = vsub.f32 %v430, %v510
  %v512 = vsub.f32 %v435, %v510
  %v513 = vsub.f32 %v440, %v510
  %v514 = vsub.f32 %v445, %v510
  %v515 = vsub.f32 %v450, %v510
  %v516 = vsub.f32 %v455, %v510
  %v517 = vsub.f32 %v460, %v510
  %v518 = vsub.f32 %v465, %v510
  %v519 = vsub.f32 %v470, %v510
  %v520 = vsub.f32 %v475, %v510
  %v521 = vsub.f32 %v480, %v510
  %v522 = vsub.f32 %v485, %v510
  %v523 = vsub.f32 %v490, %v510
  %v524 = vsub.f32 %v495, %v510
  %v525 = vsub.f32 %v500, %v510
  %v526 = vsub.f32 %v505, %v510
  %527 = vrot.lane.b32.xlu0 %v379, 127
  %v528 = vpop.permute.xlu0 %527
  %529 = vrot.lane.b32.xlu0 %v380, 127
  %v530 = vpop.permute.xlu0 %529
  %531 = vrot.lane.b32.xlu0 %v381, 127
  %v532 = vpop.permute.xlu0 %531
  %533 = vrot.lane.b32.xlu0 %v382, 127
  %v534 = vpop.permute.xlu0 %533
  %535 = vrot.lane.b32.xlu0 %v383, 127
  %v536 = vpop.permute.xlu0 %535
  %537 = vrot.lane.b32.xlu0 %v384, 127
  %v538 = vpop.permute.xlu0 %537
  %539 = vrot.lane.b32.xlu0 %v385, 127
  %v540 = vpop.permute.xlu0 %539
  %541 = vrot.lane.b32.xlu0 %v386, 127
  %v542 = vpop.permute.xlu0 %541
  %543 = vrot.lane.b32.xlu0 %v387, 127
  %v544 = vpop.permute.xlu0 %543
  %545 = vrot.lane.b32.xlu0 %v388, 127
  %v546 = vpop.permute.xlu0 %545
  %547 = vrot.lane.b32.xlu0 %v389, 127
  %v548 = vpop.permute.xlu0 %547
  %549 = vrot.lane.b32.xlu0 %v390, 127
  %v550 = vpop.permute.xlu0 %549
  %551 = vrot.lane.b32.xlu0 %v391, 127
  %v552 = vpop.permute.xlu0 %551
  %553 = vrot.lane.b32.xlu0 %v392, 127
  %v554 = vpop.permute.xlu0 %553
  %555 = vrot.lane.b32.xlu0 %v393, 127
  %v556 = vpop.permute.xlu0 %555
  %557 = vrot.lane.b32.xlu0 %v394, 127
  %v558 = vpop.permute.xlu0 %557
  %575 = vxpose.xlu0.b32.start [1/16] %v528, 128
  %576 = vxpose.xlu0.b32.cont [2/16] %v530, 128
  %577 = vxpose.xlu0.b32.cont [3/16] %v532, 128
  %578 = vxpose.xlu0.b32.cont [4/16] %v534, 128
  %579 = vxpose.xlu0.b32.cont [5/16] %v536, 128
  %580 = vxpose.xlu0.b32.cont [6/16] %v538, 128
  %581 = vxpose.xlu0.b32.cont [7/16] %v540, 128
  %582 = vxpose.xlu0.b32.cont [8/16] %v542, 128
  %583 = vxpose.xlu0.b32.cont [9/16] %v544, 128
  %584 = vxpose.xlu0.b32.cont [10/16] %v546, 128
  %585 = vxpose.xlu0.b32.cont [11/16] %v548, 128
  %586 = vxpose.xlu0.b32.cont [12/16] %v550, 128
  %587 = vxpose.xlu0.b32.cont [13/16] %v552, 128
  %588 = vxpose.xlu0.b32.cont [14/16] %v554, 128
  %589 = vxpose.xlu0.b32.cont [15/16] %v556, 128
  %590 = vxpose.xlu0.b32.end [16/16] %v558, 128
  %v591 = vpop.trf.xlu0
  %v592 = vpop.trf.xlu0
  %v593 = vpop.trf.xlu0
  %v594 = vpop.trf.xlu0
  %v595 = vpop.trf.xlu0
  %v596 = vpop.trf.xlu0
  %v597 = vpop.trf.xlu0
  %v598 = vpop.trf.xlu0
  %v599 = vpop.trf.xlu0
  %v600 = vpop.trf.xlu0
  %v601 = vpop.trf.xlu0
  %v602 = vpop.trf.xlu0
  %v603 = vpop.trf.xlu0
  %v604 = vpop.trf.xlu0
  %v605 = vpop.trf.xlu0
  %v606 = vpop.trf.xlu0
  %607 = vset.pattern.permute.xlu0 1
  %608 = vperm.xlu0 %607, %v379
  %v609 = vpop.permute.xlu0 %608
  %611 = vset.pattern.permute.xlu0 1
  %612 = vperm.xlu0 %611, %v380
  %v613 = vpop.permute.xlu0 %612
  %615 = vset.pattern.permute.xlu0 1
  %616 = vperm.xlu0 %615, %v381
  %v617 = vpop.permute.xlu0 %616
  %619 = vset.pattern.permute.xlu0 1
  %620 = vperm.xlu0 %619, %v382
  %v621 = vpop.permute.xlu0 %620
  %623 = vset.pattern.permute.xlu0 1
  %624 = vperm.xlu0 %623, %v383
  %v625 = vpop.permute.xlu0 %624
  %627 = vset.pattern.permute.xlu0 1
  %628 = vperm.xlu0 %627, %v384
  %v629 = vpop.permute.xlu0 %628
  %631 = vset.pattern.permute.xlu0 1
  %632 = vperm.xlu0 %631, %v385
  %v633 = vpop.permute.xlu0 %632
  %635 = vset.pattern.permute.xlu0 1
  %636 = vperm.xlu0 %635, %v386
  %v637 = vpop.permute.xlu0 %636
  %639 = vset.pattern.permute.xlu0 1
  %640 = vperm.xlu0 %639, %v387
  %v641 = vpop.permute.xlu0 %640
  %643 = vset.pattern.permute.xlu0 1
  %644 = vperm.xlu0 %643, %v388
  %v645 = vpop.permute.xlu0 %644
  %647 = vset.pattern.permute.xlu0 1
  %648 = vperm.xlu0 %647, %v389
  %v649 = vpop.permute.xlu0 %648
  %651 = vset.pattern.permute.xlu0 1
  %652 = vperm.xlu0 %651, %v390
  %v653 = vpop.permute.xlu0 %652
  %655 = vset.pattern.permute.xlu0 1
  %656 = vperm.xlu0 %655, %v391
  %v657 = vpop.permute.xlu0 %656
  %659 = vset.pattern.permute.xlu0 1
  %660 = vperm.xlu0 %659, %v392
  %v661 = vpop.permute.xlu0 %660
  %663 = vset.pattern.permute.xlu0 1
  %664 = vperm.xlu0 %663, %v393
  %v665 = vpop.permute.xlu0 %664
  %667 = vset.pattern.permute.xlu0 1
  %668 = vperm.xlu0 %667, %v394
  %v669 = vpop.permute.xlu0 %668
  %v671 = vlaneseq
  %v672 = vshrl.u32 %v671, 7
  %v673 = vsub.s32 0, %v672
  %v674 = vrot.slane %v591, %v673
  %v675 = vsub.f32 %v609, %v674
  %v676 = vsub.f32 %v613, %v674
  %v677 = vsub.f32 %v617, %v674
  %v678 = vsub.f32 %v621, %v674
  %v679 = vsub.f32 %v625, %v674
  %v680 = vsub.f32 %v629, %v674
  %v681 = vsub.f32 %v633, %v674
  %v682 = vsub.f32 %v637, %v674
  %v683 = vsub.f32 %v641, %v674
  %v684 = vsub.f32 %v645, %v674
  %v685 = vsub.f32 %v649, %v674
  %v686 = vsub.f32 %v653, %v674
  %v687 = vsub.f32 %v657, %v674
  %v688 = vsub.f32 %v661, %v674
  %v689 = vsub.f32 %v665, %v674
  %v690 = vsub.f32 %v669, %v674
  %691 = vrot.lane.b32.xlu0 %v379, 126
  %v692 = vpop.permute.xlu0 %691
  %693 = vrot.lane.b32.xlu0 %v380, 126
  %v694 = vpop.permute.xlu0 %693
  %695 = vrot.lane.b32.xlu0 %v381, 126
  %v696 = vpop.permute.xlu0 %695
  %697 = vrot.lane.b32.xlu0 %v382, 126
  %v698 = vpop.permute.xlu0 %697
  %699 = vrot.lane.b32.xlu0 %v383, 126
  %v700 = vpop.permute.xlu0 %699
  %701 = vrot.lane.b32.xlu0 %v384, 126
  %v702 = vpop.permute.xlu0 %701
  %703 = vrot.lane.b32.xlu0 %v385, 126
  %v704 = vpop.permute.xlu0 %703
  %705 = vrot.lane.b32.xlu0 %v386, 126
  %v706 = vpop.permute.xlu0 %705
  %707 = vrot.lane.b32.xlu0 %v387, 126
  %v708 = vpop.permute.xlu0 %707
  %709 = vrot.lane.b32.xlu0 %v388, 126
  %v710 = vpop.permute.xlu0 %709
  %711 = vrot.lane.b32.xlu0 %v389, 126
  %v712 = vpop.permute.xlu0 %711
  %713 = vrot.lane.b32.xlu0 %v390, 126
  %v714 = vpop.permute.xlu0 %713
  %715 = vrot.lane.b32.xlu0 %v391, 126
  %v716 = vpop.permute.xlu0 %715
  %717 = vrot.lane.b32.xlu0 %v392, 126
  %v718 = vpop.permute.xlu0 %717
  %719 = vrot.lane.b32.xlu0 %v393, 126
  %v720 = vpop.permute.xlu0 %719
  %721 = vrot.lane.b32.xlu0 %v394, 126
  %v722 = vpop.permute.xlu0 %721
  %739 = vxpose.xlu0.b32.start [1/16] %v692, 128
  %740 = vxpose.xlu0.b32.cont [2/16] %v694, 128
  %741 = vxpose.xlu0.b32.cont [3/16] %v696, 128
  %742 = vxpose.xlu0.b32.cont [4/16] %v698, 128
  %743 = vxpose.xlu0.b32.cont [5/16] %v700, 128
  %744 = vxpose.xlu0.b32.cont [6/16] %v702, 128
  %745 = vxpose.xlu0.b32.cont [7/16] %v704, 128
  %746 = vxpose.xlu0.b32.cont [8/16] %v706, 128
  %747 = vxpose.xlu0.b32.cont [9/16] %v708, 128
  %748 = vxpose.xlu0.b32.cont [10/16] %v710, 128
  %749 = vxpose.xlu0.b32.cont [11/16] %v712, 128
  %750 = vxpose.xlu0.b32.cont [12/16] %v714, 128
  %751 = vxpose.xlu0.b32.cont [13/16] %v716, 128
  %752 = vxpose.xlu0.b32.cont [14/16] %v718, 128
  %753 = vxpose.xlu0.b32.cont [15/16] %v720, 128
  %754 = vxpose.xlu0.b32.end [16/16] %v722, 128
  %v755 = vpop.trf.xlu0
  %v756 = vpop.trf.xlu0
  %v757 = vpop.trf.xlu0
  %v758 = vpop.trf.xlu0
  %v759 = vpop.trf.xlu0
  %v760 = vpop.trf.xlu0
  %v761 = vpop.trf.xlu0
  %v762 = vpop.trf.xlu0
  %v763 = vpop.trf.xlu0
  %v764 = vpop.trf.xlu0
  %v765 = vpop.trf.xlu0
  %v766 = vpop.trf.xlu0
  %v767 = vpop.trf.xlu0
  %v768 = vpop.trf.xlu0
  %v769 = vpop.trf.xlu0
  %v770 = vpop.trf.xlu0
  %771 = vset.pattern.permute.xlu0 2
  %772 = vperm.xlu0 %771, %v379
  %v773 = vpop.permute.xlu0 %772
  %775 = vset.pattern.permute.xlu0 2
  %776 = vperm.xlu0 %775, %v380
  %v777 = vpop.permute.xlu0 %776
  %779 = vset.pattern.permute.xlu0 2
  %780 = vperm.xlu0 %779, %v381
  %v781 = vpop.permute.xlu0 %780
  %783 = vset.pattern.permute.xlu0 2
  %784 = vperm.xlu0 %783, %v382
  %v785 = vpop.permute.xlu0 %784
  %787 = vset.pattern.permute.xlu0 2
  %788 = vperm.xlu0 %787, %v383
  %v789 = vpop.permute.xlu0 %788
  %791 = vset.pattern.permute.xlu0 2
  %792 = vperm.xlu0 %791, %v384
  %v793 = vpop.permute.xlu0 %792
  %795 = vset.pattern.permute.xlu0 2
  %796 = vperm.xlu0 %795, %v385
  %v797 = vpop.permute.xlu0 %796
  %799 = vset.pattern.permute.xlu0 2
  %800 = vperm.xlu0 %799, %v386
  %v801 = vpop.permute.xlu0 %800
  %803 = vset.pattern.permute.xlu0 2
  %804 = vperm.xlu0 %803, %v387
  %v805 = vpop.permute.xlu0 %804
  %807 = vset.pattern.permute.xlu0 2
  %808 = vperm.xlu0 %807, %v388
  %v809 = vpop.permute.xlu0 %808
  %811 = vset.pattern.permute.xlu0 2
  %812 = vperm.xlu0 %811, %v389
  %v813 = vpop.permute.xlu0 %812
  %815 = vset.pattern.permute.xlu0 2
  %816 = vperm.xlu0 %815, %v390
  %v817 = vpop.permute.xlu0 %816
  %819 = vset.pattern.permute.xlu0 2
  %820 = vperm.xlu0 %819, %v391
  %v821 = vpop.permute.xlu0 %820
  %823 = vset.pattern.permute.xlu0 2
  %824 = vperm.xlu0 %823, %v392
  %v825 = vpop.permute.xlu0 %824
  %827 = vset.pattern.permute.xlu0 2
  %828 = vperm.xlu0 %827, %v393
  %v829 = vpop.permute.xlu0 %828
  %831 = vset.pattern.permute.xlu0 2
  %832 = vperm.xlu0 %831, %v394
  %v833 = vpop.permute.xlu0 %832
  %v835 = vlaneseq
  %v836 = vshrl.u32 %v835, 7
  %v837 = vsub.s32 0, %v836
  %v838 = vrot.slane %v755, %v837
  %v839 = vsub.f32 %v773, %v838
  %v840 = vsub.f32 %v777, %v838
  %v841 = vsub.f32 %v781, %v838
  %v842 = vsub.f32 %v785, %v838
  %v843 = vsub.f32 %v789, %v838
  %v844 = vsub.f32 %v793, %v838
  %v845 = vsub.f32 %v797, %v838
  %v846 = vsub.f32 %v801, %v838
  %v847 = vsub.f32 %v805, %v838
  %v848 = vsub.f32 %v809, %v838
  %v849 = vsub.f32 %v813, %v838
  %v850 = vsub.f32 %v817, %v838
  %v851 = vsub.f32 %v821, %v838
  %v852 = vsub.f32 %v825, %v838
  %v853 = vsub.f32 %v829, %v838
  %v854 = vsub.f32 %v833, %v838
  %v855 = vmul.f32 %v511, %v511
  %v856 = vmul.f32 %v512, %v512
  %v857 = vmul.f32 %v513, %v513
  %v858 = vmul.f32 %v514, %v514
  %v859 = vmul.f32 %v515, %v515
  %v860 = vmul.f32 %v516, %v516
  %v861 = vmul.f32 %v517, %v517
  %v862 = vmul.f32 %v518, %v518
  %v863 = vmul.f32 %v519, %v519
  %v864 = vmul.f32 %v520, %v520
  %v865 = vmul.f32 %v521, %v521
  %v866 = vmul.f32 %v522, %v522
  %v867 = vmul.f32 %v523, %v523
  %v868 = vmul.f32 %v524, %v524
  %v869 = vmul.f32 %v525, %v525
  %v870 = vmul.f32 %v526, %v526
  %v871 = vmul.f32 %v675, %v675
  %v872 = vmul.f32 %v676, %v676
  %v873 = vmul.f32 %v677, %v677
  %v874 = vmul.f32 %v678, %v678
  %v875 = vmul.f32 %v679, %v679
  %v876 = vmul.f32 %v680, %v680
  %v877 = vmul.f32 %v681, %v681
  %v878 = vmul.f32 %v682, %v682
  %v879 = vmul.f32 %v683, %v683
  %v880 = vmul.f32 %v684, %v684
  %v881 = vmul.f32 %v685, %v685
  %v882 = vmul.f32 %v686, %v686
  %v883 = vmul.f32 %v687, %v687
  %v884 = vmul.f32 %v688, %v688
  %v885 = vmul.f32 %v689, %v689
  %v886 = vmul.f32 %v690, %v690
  %v887 = vadd.f32 %v855, %v871
  %v888 = vadd.f32 %v856, %v872
  %v889 = vadd.f32 %v857, %v873
  %v890 = vadd.f32 %v858, %v874
  %v891 = vadd.f32 %v859, %v875
  %v892 = vadd.f32 %v860, %v876
  %v893 = vadd.f32 %v861, %v877
  %v894 = vadd.f32 %v862, %v878
  %v895 = vadd.f32 %v863, %v879
  %v896 = vadd.f32 %v864, %v880
  %v897 = vadd.f32 %v865, %v881
  %v898 = vadd.f32 %v866, %v882
  %v899 = vadd.f32 %v867, %v883
  %v900 = vadd.f32 %v868, %v884
  %v901 = vadd.f32 %v869, %v885
  %v902 = vadd.f32 %v870, %v886
  %v903 = vmul.f32 %v839, %v839
  %v904 = vmul.f32 %v840, %v840
  %v905 = vmul.f32 %v841, %v841
  %v906 = vmul.f32 %v842, %v842
  %v907 = vmul.f32 %v843, %v843
  %v908 = vmul.f32 %v844, %v844
  %v909 = vmul.f32 %v845, %v845
  %v910 = vmul.f32 %v846, %v846
  %v911 = vmul.f32 %v847, %v847
  %v912 = vmul.f32 %v848, %v848
  %v913 = vmul.f32 %v849, %v849
  %v914 = vmul.f32 %v850, %v850
  %v915 = vmul.f32 %v851, %v851
  %v916 = vmul.f32 %v852, %v852
  %v917 = vmul.f32 %v853, %v853
  %v918 = vmul.f32 %v854, %v854
  %v919 = vadd.f32 %v887, %v903
  %v920 = vadd.f32 %v888, %v904
  %v921 = vadd.f32 %v889, %v905
  %v922 = vadd.f32 %v890, %v906
  %v923 = vadd.f32 %v891, %v907
  %v924 = vadd.f32 %v892, %v908
  %v925 = vadd.f32 %v893, %v909
  %v926 = vadd.f32 %v894, %v910
  %v927 = vadd.f32 %v895, %v911
  %v928 = vadd.f32 %v896, %v912
  %v929 = vadd.f32 %v897, %v913
  %v930 = vadd.f32 %v898, %v914
  %v931 = vadd.f32 %v899, %v915
  %v932 = vadd.f32 %v900, %v916
  %v933 = vadd.f32 %v901, %v917
  %v934 = vadd.f32 %v902, %v918
  %v935 = vld [vmem:[%s6] sm:$0x1]
  %936 = vxpose.xlu0.b32.start [1/16] %v935, 128
  %937 = vxpose.xlu0.b32.cont [2/16] 0.0, 128
  %938 = vxpose.xlu0.b32.cont [3/16] 0.0, 128
  %939 = vxpose.xlu0.b32.cont [4/16] 0.0, 128
  %940 = vxpose.xlu0.b32.cont [5/16] 0.0, 128
  %941 = vxpose.xlu0.b32.cont [6/16] 0.0, 128
  %942 = vxpose.xlu0.b32.cont [7/16] 0.0, 128
  %943 = vxpose.xlu0.b32.cont [8/16] 0.0, 128
  %944 = vxpose.xlu0.b32.cont [9/16] 0.0, 128
  %945 = vxpose.xlu0.b32.cont [10/16] 0.0, 128
  %946 = vxpose.xlu0.b32.cont [11/16] 0.0, 128
  %947 = vxpose.xlu0.b32.cont [12/16] 0.0, 128
  %948 = vxpose.xlu0.b32.cont [13/16] 0.0, 128
  %949 = vxpose.xlu0.b32.cont [14/16] 0.0, 128
  %950 = vxpose.xlu0.b32.cont [15/16] 0.0, 128
  %951 = vxpose.xlu0.b32.end [16/16] 0.0, 128
  %v952 = vpop.trf.xlu0
  %v953 = vpop.trf.xlu0
  %v954 = vpop.trf.xlu0
  %v955 = vpop.trf.xlu0
  %v956 = vpop.trf.xlu0
  %v957 = vpop.trf.xlu0
  %v958 = vpop.trf.xlu0
  %v959 = vpop.trf.xlu0
  %v960 = vpop.trf.xlu0
  %v961 = vpop.trf.xlu0
  %v962 = vpop.trf.xlu0
  %v963 = vpop.trf.xlu0
  %v964 = vpop.trf.xlu0
  %v965 = vpop.trf.xlu0
  %v966 = vpop.trf.xlu0
  %v967 = vpop.trf.xlu0
  %v968 = vld [vmem:[%s7] sm:$0xff]
  %v969 = vld [vmem:[%s7 + $0x8] sm:$0xff]
  %v970 = vld [vmem:[%s7 + $0x10] sm:$0xff]
  %v971 = vld [vmem:[%s7 + $0x18] sm:$0xff]
  %v972 = vld [vmem:[%s7 + $0x20] sm:$0xff]
  %v973 = vld [vmem:[%s7 + $0x28] sm:$0xff]
  %v974 = vld [vmem:[%s7 + $0x30] sm:$0xff]
  %v975 = vld [vmem:[%s7 + $0x38] sm:$0xff]
  %v976 = vld [vmem:[%s7 + $0x40] sm:$0xff]
  %v977 = vld [vmem:[%s7 + $0x48] sm:$0xff]
  %v978 = vld [vmem:[%s7 + $0x50] sm:$0xff]
  %v979 = vld [vmem:[%s7 + $0x58] sm:$0xff]
  %v980 = vld [vmem:[%s7 + $0x60] sm:$0xff]
  %v981 = vld [vmem:[%s7 + $0x68] sm:$0xff]
  %v982 = vld [vmem:[%s7 + $0x70] sm:$0xff]
  %v983 = vld [vmem:[%s7 + $0x78] sm:$0xff]
  %vm984 = vcmp.le.f32.partialorder %v919, %v968
  %vm985 = vcmp.le.f32.partialorder %v920, %v969
  %vm986 = vcmp.le.f32.partialorder %v921, %v970
  %vm987 = vcmp.le.f32.partialorder %v922, %v971
  %vm988 = vcmp.le.f32.partialorder %v923, %v972
  %vm989 = vcmp.le.f32.partialorder %v924, %v973
  %vm990 = vcmp.le.f32.partialorder %v925, %v974
  %vm991 = vcmp.le.f32.partialorder %v926, %v975
  %vm992 = vcmp.le.f32.partialorder %v927, %v976
  %vm993 = vcmp.le.f32.partialorder %v928, %v977
  %vm994 = vcmp.le.f32.partialorder %v929, %v978
  %vm995 = vcmp.le.f32.partialorder %v930, %v979
  %vm996 = vcmp.le.f32.partialorder %v931, %v980
  %vm997 = vcmp.le.f32.partialorder %v932, %v981
  %vm998 = vcmp.le.f32.partialorder %v933, %v982
  %vm999 = vcmp.le.f32.partialorder %v934, %v983
  %1001 = vset.pattern.permute.xlu0 0
  %1002 = vperm.xlu0 %1001, %v952
  %v1003 = vpop.permute.xlu0 %1002
  %1006 = vset.pattern.permute.xlu0 0
  %1007 = vperm.xlu0 %1006, %v953
  %v1008 = vpop.permute.xlu0 %1007
  %1011 = vset.pattern.permute.xlu0 0
  %1012 = vperm.xlu0 %1011, %v954
  %v1013 = vpop.permute.xlu0 %1012
  %1016 = vset.pattern.permute.xlu0 0
  %1017 = vperm.xlu0 %1016, %v955
  %v1018 = vpop.permute.xlu0 %1017
  %1021 = vset.pattern.permute.xlu0 0
  %1022 = vperm.xlu0 %1021, %v956
  %v1023 = vpop.permute.xlu0 %1022
  %1026 = vset.pattern.permute.xlu0 0
  %1027 = vperm.xlu0 %1026, %v957
  %v1028 = vpop.permute.xlu0 %1027
  %1031 = vset.pattern.permute.xlu0 0
  %1032 = vperm.xlu0 %1031, %v958
  %v1033 = vpop.permute.xlu0 %1032
  %1036 = vset.pattern.permute.xlu0 0
  %1037 = vperm.xlu0 %1036, %v959
  %v1038 = vpop.permute.xlu0 %1037
  %1041 = vset.pattern.permute.xlu0 0
  %1042 = vperm.xlu0 %1041, %v960
  %v1043 = vpop.permute.xlu0 %1042
  %1046 = vset.pattern.permute.xlu0 0
  %1047 = vperm.xlu0 %1046, %v961
  %v1048 = vpop.permute.xlu0 %1047
  %1051 = vset.pattern.permute.xlu0 0
  %1052 = vperm.xlu0 %1051, %v962
  %v1053 = vpop.permute.xlu0 %1052
  %1056 = vset.pattern.permute.xlu0 0
  %1057 = vperm.xlu0 %1056, %v963
  %v1058 = vpop.permute.xlu0 %1057
  %1061 = vset.pattern.permute.xlu0 0
  %1062 = vperm.xlu0 %1061, %v964
  %v1063 = vpop.permute.xlu0 %1062
  %1066 = vset.pattern.permute.xlu0 0
  %1067 = vperm.xlu0 %1066, %v965
  %v1068 = vpop.permute.xlu0 %1067
  %1071 = vset.pattern.permute.xlu0 0
  %1072 = vperm.xlu0 %1071, %v966
  %v1073 = vpop.permute.xlu0 %1072
  %1076 = vset.pattern.permute.xlu0 0
  %1077 = vperm.xlu0 %1076, %v967
  %v1078 = vpop.permute.xlu0 %1077
  %v1081 = vlaneseq
  %v1082 = vshrl.u32 %v1081, 7
  %v1083 = vsub.s32 0, %v1082
  %v1084 = vrot.slane %v935, %v1083
  %v1086 = vmul.f32 %v1003, %v1084
  %v1087 = vmul.f32 %v1008, %v1084
  %v1088 = vmul.f32 %v1013, %v1084
  %v1089 = vmul.f32 %v1018, %v1084
  %v1090 = vmul.f32 %v1023, %v1084
  %v1091 = vmul.f32 %v1028, %v1084
  %v1092 = vmul.f32 %v1033, %v1084
  %v1093 = vmul.f32 %v1038, %v1084
  %v1094 = vmul.f32 %v1043, %v1084
  %v1095 = vmul.f32 %v1048, %v1084
  %v1096 = vmul.f32 %v1053, %v1084
  %v1097 = vmul.f32 %v1058, %v1084
  %v1098 = vmul.f32 %v1063, %v1084
  %v1099 = vmul.f32 %v1068, %v1084
  %v1100 = vmul.f32 %v1073, %v1084
  %v1101 = vmul.f32 %v1078, %v1084
  %v1102 = vsel %vm984, %v1086, 0.0
  %v1103 = vsel %vm985, %v1087, 0.0
  %v1104 = vsel %vm986, %v1088, 0.0
  %v1105 = vsel %vm987, %v1089, 0.0
  %v1106 = vsel %vm988, %v1090, 0.0
  %v1107 = vsel %vm989, %v1091, 0.0
  %v1108 = vsel %vm990, %v1092, 0.0
  %v1109 = vsel %vm991, %v1093, 0.0
  %v1110 = vsel %vm992, %v1094, 0.0
  %v1111 = vsel %vm993, %v1095, 0.0
  %v1112 = vsel %vm994, %v1096, 0.0
  %v1113 = vsel %vm995, %v1097, 0.0
  %v1114 = vsel %vm996, %v1098, 0.0
  %v1115 = vsel %vm997, %v1099, 0.0
  %v1116 = vsel %vm998, %v1100, 0.0
  %v1117 = vsel %vm999, %v1101, 0.0
  %v1118 = vld [vmem:[%s12] sm:$0xff]
  %v1119 = vld [vmem:[%s12 + $0x8] sm:$0xff]
  %v1120 = vld [vmem:[%s12 + $0x10] sm:$0xff]
  %v1121 = vld [vmem:[%s12 + $0x18] sm:$0xff]
  %v1122 = vld [vmem:[%s12 + $0x20] sm:$0xf]
  %v1123 = vpack.c.bf16 %v324, %v323
  %v1124 = vpack.c.bf16 %v326, %v325
  %v1125 = vpack.c.bf16 %v328, %v327
  %v1126 = vpack.c.bf16 %v330, %v329
  %v1127 = vpack.c.bf16 %v372, %v371
  %v1128 = vpack.c.bf16 %v374, %v373
  %v1129 = vpack.c.bf16 %v376, %v375
  %v1130 = vpack.c.bf16 %v378, %v377
  %v1131 = vpack.c.bf16 %v1119, %v1118
  %v1132 = vpack.c.bf16 %v1121, %v1120
  %v1133 = vpack.c.bf16 %v1122, %v1122
  %v1134 = vld [vmem:[%s13] sm:$0x1]
  %v1136 = vlaneseq
  %v1137 = vshrl.u32 %v1136, 7
  %v1138 = vsub.s32 0, %v1137
  %v1139 = vrot.slane %v1134, %v1138
  %vm1141 = vcmask 293888
  %v1143 = vsel %vm1141, %v1123, 0
  %v1146 = vsel %vm1141, %v1124, 0
  %v1149 = vsel %vm1141, %v1125, 0
  %v1152 = vsel %vm1141, %v1126, 0
  %v1155 = vsel %vm1141, %v1127, 0
  %v1158 = vsel %vm1141, %v1128, 0
  %v1161 = vsel %vm1141, %v1129, 0
  %v1164 = vsel %vm1141, %v1130, 0
  %vm1166 = vcmask 1041408
  %v1168 = vsel %vm1166, %v1133, 0
  %1170 = vmatprep.subr.bf16.mxu0 0
  %1171 = vmatpush1.bf16.msra.mxu0 0
  %1172 = vmatprep.subr.bf16.mxu0 0
  %1173 = vmatpush1.bf16.msra.mxu0 0
  %1174 = vmatprep.subr.bf16.mxu0 0
  %1175 = vmatpush1.bf16.msra.mxu0 0
  %1176 = vmatprep.subr.bf16.mxu0 0
  %1177 = vmatpush1.bf16.msra.mxu0 0
  %1178 = vmatprep.subr.bf16.mxu0 0
  %1179 = vmatpush1.bf16.msra.mxu0 0
  %1180 = vmatprep.subr.bf16.mxu0 0
  %1181 = vmatpush1.bf16.msra.mxu0 %v1168
  %1182 = vmatprep.subr.bf16.mxu0 0
  %1183 = vmatpush1.bf16.msra.mxu0 %v1132
  %1184 = vmatprep.subr.bf16.mxu0 0
  %1185 = vmatpush1.bf16.msra.mxu0 %v1131
  %1186 = vmatprep.subr.bf16.mxu0 0
  %1187 = vmatpush2.bf16.msra.mxu0 0
  %1188 = vmatprep.subr.bf16.mxu0 0
  %1189 = vmatpush2.bf16.msra.mxu0 0
  %1190 = vmatprep.subr.bf16.mxu0 0
  %1191 = vmatpush2.bf16.msra.mxu0 0
  %1192 = vmatprep.subr.bf16.mxu0 0
  %1193 = vmatpush2.bf16.msra.mxu0 0
  %1194 = vmatprep.subr.bf16.mxu0 0
  %1195 = vmatpush2.bf16.msra.mxu0 0
  %1196 = vmatprep.subr.bf16.mxu0 0
  %1197 = vmatpush2.bf16.msra.mxu0 0
  %1198 = vmatprep.subr.bf16.mxu0 0
  %1199 = vmatpush2.bf16.msra.mxu0 0
  %1200 = vmatprep.subr.bf16.mxu0 0
  %1201 = vmatpush2.bf16.msra.mxu0 0
  %1202 = vmatprep.mubr.bf16.mxu0 0
  %1203 = vmatmul.mubr.bf16.gmra.mxu0 %v1143
  %v1204 = vpop.f32.mrf.mxu0
  %v1205 = vadd.f32 %v1139, %v1204
  %v1206 = vpop.f32.mrf.mxu0
  %v1207 = vpop.f32.mrf.mxu0
  %v1208 = vadd.f32 %v1139, %v1207
  %v1209 = vpop.f32.mrf.mxu0
  %1210 = vmatprep.mubr.bf16.mxu0 0
  %1211 = vmatmul.mubr.bf16.gmra.mxu0 %v1146
  %v1212 = vpop.f32.mrf.mxu0
  %v1213 = vadd.f32 %v1139, %v1212
  %v1214 = vpop.f32.mrf.mxu0
  %v1215 = vpop.f32.mrf.mxu0
  %v1216 = vadd.f32 %v1139, %v1215
  %v1217 = vpop.f32.mrf.mxu0
  %1218 = vmatprep.mubr.bf16.mxu0 0
  %1219 = vmatmul.mubr.bf16.gmra.mxu0 %v1149
  %v1220 = vpop.f32.mrf.mxu0
  %v1221 = vadd.f32 %v1139, %v1220
  %v1222 = vpop.f32.mrf.mxu0
  %v1223 = vpop.f32.mrf.mxu0
  %v1224 = vadd.f32 %v1139, %v1223
  %v1225 = vpop.f32.mrf.mxu0
  %1226 = vmatprep.mubr.bf16.mxu0 0
  %1227 = vmatmul.mubr.bf16.gmra.mxu0 %v1152
  %v1228 = vpop.f32.mrf.mxu0
  %v1229 = vadd.f32 %v1139, %v1228
  %v1230 = vpop.f32.mrf.mxu0
  %v1231 = vpop.f32.mrf.mxu0
  %v1232 = vadd.f32 %v1139, %v1231
  %v1233 = vpop.f32.mrf.mxu0
  %1234 = vmatprep.mubr.bf16.mxu0 0
  %1235 = vmatmul.mubr.bf16.gmra.mxu0 %v1155
  %v1236 = vpop.f32.mrf.mxu0
  %v1237 = vadd.f32 %v1139, %v1236
  %v1238 = vpop.f32.mrf.mxu0
  %v1239 = vpop.f32.mrf.mxu0
  %v1240 = vadd.f32 %v1139, %v1239
  %v1241 = vpop.f32.mrf.mxu0
  %1242 = vmatprep.mubr.bf16.mxu0 0
  %1243 = vmatmul.mubr.bf16.gmra.mxu0 %v1158
  %v1244 = vpop.f32.mrf.mxu0
  %v1245 = vadd.f32 %v1139, %v1244
  %v1246 = vpop.f32.mrf.mxu0
  %v1247 = vpop.f32.mrf.mxu0
  %v1248 = vadd.f32 %v1139, %v1247
  %v1249 = vpop.f32.mrf.mxu0
  %1250 = vmatprep.mubr.bf16.mxu0 0
  %1251 = vmatmul.mubr.bf16.gmra.mxu0 %v1161
  %v1252 = vpop.f32.mrf.mxu0
  %v1253 = vadd.f32 %v1139, %v1252
  %v1254 = vpop.f32.mrf.mxu0
  %v1255 = vpop.f32.mrf.mxu0
  %v1256 = vadd.f32 %v1139, %v1255
  %v1257 = vpop.f32.mrf.mxu0
  %1258 = vmatprep.mubr.bf16.mxu0 0
  %1259 = vmatmul.mubr.bf16.gmra.mxu0 %v1164
  %v1260 = vpop.f32.mrf.mxu0
  %v1261 = vadd.f32 %v1139, %v1260
  %v1262 = vpop.f32.mrf.mxu0
  %v1263 = vpop.f32.mrf.mxu0
  %v1264 = vadd.f32 %v1139, %v1263
  %v1265 = vpop.f32.mrf.mxu0
  %1266 = vdwg.mxu0
  %v1267 = vxor.u32 %v1205, 2147483648
  %v1268 = vxor.u32 %v1208, 2147483648
  %v1269 = vxor.u32 %v1213, 2147483648
  %v1270 = vxor.u32 %v1216, 2147483648
  %v1271 = vxor.u32 %v1221, 2147483648
  %v1272 = vxor.u32 %v1224, 2147483648
  %v1273 = vxor.u32 %v1229, 2147483648
  %v1274 = vxor.u32 %v1232, 2147483648
  %v1275 = vxor.u32 %v1237, 2147483648
  %v1276 = vxor.u32 %v1240, 2147483648
  %v1277 = vxor.u32 %v1245, 2147483648
  %v1278 = vxor.u32 %v1248, 2147483648
  %v1279 = vxor.u32 %v1253, 2147483648
  %v1280 = vxor.u32 %v1256, 2147483648
  %v1281 = vxor.u32 %v1261, 2147483648
  %v1282 = vxor.u32 %v1264, 2147483648
  %v1283 = vmul.f32 %v1267, 1.442695
  %v1284 = vpow.pop %v1283
  %v1285 = vmul.f32 %v1268, 1.442695
  %v1286 = vpow.pop %v1285
  %v1287 = vmul.f32 %v1269, 1.442695
  %v1288 = vpow.pop %v1287
  %v1289 = vmul.f32 %v1270, 1.442695
  %v1290 = vpow.pop %v1289
  %v1291 = vmul.f32 %v1271, 1.442695
  %v1292 = vpow.pop %v1291
  %v1293 = vmul.f32 %v1272, 1.442695
  %v1294 = vpow.pop %v1293
  %v1295 = vmul.f32 %v1273, 1.442695
  %v1296 = vpow.pop %v1295
  %v1297 = vmul.f32 %v1274, 1.442695
  %v1298 = vpow.pop %v1297
  %v1299 = vmul.f32 %v1275, 1.442695
  %v1300 = vpow.pop %v1299
  %v1301 = vmul.f32 %v1276, 1.442695
  %v1302 = vpow.pop %v1301
  %v1303 = vmul.f32 %v1277, 1.442695
  %v1304 = vpow.pop %v1303
  %v1305 = vmul.f32 %v1278, 1.442695
  %v1306 = vpow.pop %v1305
  %v1307 = vmul.f32 %v1279, 1.442695
  %v1308 = vpow.pop %v1307
  %v1309 = vmul.f32 %v1280, 1.442695
  %v1310 = vpow.pop %v1309
  %v1311 = vmul.f32 %v1281, 1.442695
  %v1312 = vpow.pop %v1311
  %v1313 = vmul.f32 %v1282, 1.442695
  %v1314 = vpow.pop %v1313
  %v1315 = vadd.f32 %v1284, 1.0
  %v1316 = vadd.f32 %v1286, 1.0
  %v1317 = vadd.f32 %v1288, 1.0
  %v1318 = vadd.f32 %v1290, 1.0
  %v1319 = vadd.f32 %v1292, 1.0
  %v1320 = vadd.f32 %v1294, 1.0
  %v1321 = vadd.f32 %v1296, 1.0
  %v1322 = vadd.f32 %v1298, 1.0
  %v1323 = vadd.f32 %v1300, 1.0
  %v1324 = vadd.f32 %v1302, 1.0
  %v1325 = vadd.f32 %v1304, 1.0
  %v1326 = vadd.f32 %v1306, 1.0
  %v1327 = vadd.f32 %v1308, 1.0
  %v1328 = vadd.f32 %v1310, 1.0
  %v1329 = vadd.f32 %v1312, 1.0
  %v1330 = vadd.f32 %v1314, 1.0
  %v1331 = vrcp.pop %v1315
  %v1332 = vmul.f32 1.0, %v1331
  %v1333 = vrcp.pop %v1316
  %v1334 = vmul.f32 1.0, %v1333
  %v1335 = vrcp.pop %v1317
  %v1336 = vmul.f32 1.0, %v1335
  %v1337 = vrcp.pop %v1318
  %v1338 = vmul.f32 1.0, %v1337
  %v1339 = vrcp.pop %v1319
  %v1340 = vmul.f32 1.0, %v1339
  %v1341 = vrcp.pop %v1320
  %v1342 = vmul.f32 1.0, %v1341
  %v1343 = vrcp.pop %v1321
  %v1344 = vmul.f32 1.0, %v1343
  %v1345 = vrcp.pop %v1322
  %v1346 = vmul.f32 1.0, %v1345
  %v1347 = vrcp.pop %v1323
  %v1348 = vmul.f32 1.0, %v1347
  %v1349 = vrcp.pop %v1324
  %v1350 = vmul.f32 1.0, %v1349
  %v1351 = vrcp.pop %v1325
  %v1352 = vmul.f32 1.0, %v1351
  %v1353 = vrcp.pop %v1326
  %v1354 = vmul.f32 1.0, %v1353
  %v1355 = vrcp.pop %v1327
  %v1356 = vmul.f32 1.0, %v1355
  %v1357 = vrcp.pop %v1328
  %v1358 = vmul.f32 1.0, %v1357
  %v1359 = vrcp.pop %v1329
  %v1360 = vmul.f32 1.0, %v1359
  %v1361 = vrcp.pop %v1330
  %v1362 = vmul.f32 1.0, %v1361
  %v1363 = vmul.f32 %v1205, %v1332
  %v1364 = vmul.f32 %v1208, %v1334
  %v1365 = vmul.f32 %v1213, %v1336
  %v1366 = vmul.f32 %v1216, %v1338
  %v1367 = vmul.f32 %v1221, %v1340
  %v1368 = vmul.f32 %v1224, %v1342
  %v1369 = vmul.f32 %v1229, %v1344
  %v1370 = vmul.f32 %v1232, %v1346
  %v1371 = vmul.f32 %v1237, %v1348
  %v1372 = vmul.f32 %v1240, %v1350
  %v1373 = vmul.f32 %v1245, %v1352
  %v1374 = vmul.f32 %v1248, %v1354
  %v1375 = vmul.f32 %v1253, %v1356
  %v1376 = vmul.f32 %v1256, %v1358
  %v1377 = vmul.f32 %v1261, %v1360
  %v1378 = vmul.f32 %v1264, %v1362
  %v1379 = vld [vmem:[%s14] sm:$0xff]
  %v1380 = vld [vmem:[%s14 + $0x8] sm:$0xff]
  %v1381 = vld [vmem:[%s14 + $0x10] sm:$0xff]
  %v1382 = vld [vmem:[%s14 + $0x18] sm:$0xff]
  %v1383 = vld [vmem:[%s14 + $0x20] sm:$0xff]
  %v1384 = vld [vmem:[%s14 + $0x28] sm:$0xff]
  %v1385 = vld [vmem:[%s14 + $0x30] sm:$0xff]
  %v1386 = vld [vmem:[%s14 + $0x38] sm:$0xff]
  %v1387 = vpack.c.bf16 %v1364, %v1363
  %v1388 = vpack.c.bf16 %v1366, %v1365
  %v1389 = vpack.c.bf16 %v1368, %v1367
  %v1390 = vpack.c.bf16 %v1370, %v1369
  %v1391 = vpack.c.bf16 %v1372, %v1371
  %v1392 = vpack.c.bf16 %v1374, %v1373
  %v1393 = vpack.c.bf16 %v1376, %v1375
  %v1394 = vpack.c.bf16 %v1378, %v1377
  %v1395 = vpack.c.bf16 %v1380, %v1379
  %v1396 = vpack.c.bf16 %v1382, %v1381
  %v1397 = vpack.c.bf16 %v1384, %v1383
  %v1398 = vpack.c.bf16 %v1386, %v1385
  %vm1399 = vcmask 523264
  %v1401 = vsel %vm1399, %v1387, 0
  %v1404 = vsel %vm1399, %v1388, 0
  %v1407 = vsel %vm1399, %v1389, 0
  %v1410 = vsel %vm1399, %v1390, 0
  %v1413 = vsel %vm1399, %v1391, 0
  %v1416 = vsel %vm1399, %v1392, 0
  %v1419 = vsel %vm1399, %v1393, 0
  %v1422 = vsel %vm1399, %v1394, 0
  %1424 = vmatprep.subr.bf16.mxu0 0
  %1425 = vmatpush1.bf16.msra.mxu0 0
  %1426 = vmatprep.subr.bf16.mxu0 0
  %1427 = vmatpush1.bf16.msra.mxu0 0
  %1428 = vmatprep.subr.bf16.mxu0 0
  %1429 = vmatpush1.bf16.msra.mxu0 0
  %1430 = vmatprep.subr.bf16.mxu0 0
  %1431 = vmatpush1.bf16.msra.mxu0 0
  %1432 = vmatprep.subr.bf16.mxu0 0
  %1433 = vmatpush1.bf16.msra.mxu0 %v1398
  %1434 = vmatprep.subr.bf16.mxu0 0
  %1435 = vmatpush1.bf16.msra.mxu0 %v1397
  %1436 = vmatprep.subr.bf16.mxu0 0
  %1437 = vmatpush1.bf16.msra.mxu0 %v1396
  %1438 = vmatprep.subr.bf16.mxu0 0
  %1439 = vmatpush1.bf16.msra.mxu0 %v1395
  %1440 = vmatprep.subr.bf16.mxu0 0
  %1441 = vmatpush2.bf16.msra.mxu0 0
  %1442 = vmatprep.subr.bf16.mxu0 0
  %1443 = vmatpush2.bf16.msra.mxu0 0
  %1444 = vmatprep.subr.bf16.mxu0 0
  %1445 = vmatpush2.bf16.msra.mxu0 0
  %1446 = vmatprep.subr.bf16.mxu0 0
  %1447 = vmatpush2.bf16.msra.mxu0 0
  %1448 = vmatprep.subr.bf16.mxu0 0
  %1449 = vmatpush2.bf16.msra.mxu0 0
  %1450 = vmatprep.subr.bf16.mxu0 0
  %1451 = vmatpush2.bf16.msra.mxu0 0
  %1452 = vmatprep.subr.bf16.mxu0 0
  %1453 = vmatpush2.bf16.msra.mxu0 0
  %1454 = vmatprep.subr.bf16.mxu0 0
  %1455 = vmatpush2.bf16.msra.mxu0 0
  %1456 = vmatprep.mubr.bf16.mxu0 0
  %1457 = vmatmul.mubr.bf16.gmra.mxu0 %v1401
  %v1458 = vpop.f32.mrf.mxu0
  %v1459 = vadd.f32 0.0, %v1458
  %v1460 = vpop.f32.mrf.mxu0
  %v1461 = vpop.f32.mrf.mxu0
  %v1462 = vadd.f32 0.0, %v1461
  %v1463 = vpop.f32.mrf.mxu0
  %1464 = vmatprep.mubr.bf16.mxu0 0
  %1465 = vmatmul.mubr.bf16.gmra.mxu0 %v1404
  %v1466 = vpop.f32.mrf.mxu0
  %v1467 = vadd.f32 0.0, %v1466
  %v1468 = vpop.f32.mrf.mxu0
  %v1469 = vpop.f32.mrf.mxu0
  %v1470 = vadd.f32 0.0, %v1469
  %v1471 = vpop.f32.mrf.mxu0
  %1472 = vmatprep.mubr.bf16.mxu0 0
  %1473 = vmatmul.mubr.bf16.gmra.mxu0 %v1407
  %v1474 = vpop.f32.mrf.mxu0
  %v1475 = vadd.f32 0.0, %v1474
  %v1476 = vpop.f32.mrf.mxu0
  %v1477 = vpop.f32.mrf.mxu0
  %v1478 = vadd.f32 0.0, %v1477
  %v1479 = vpop.f32.mrf.mxu0
  %1480 = vmatprep.mubr.bf16.mxu0 0
  %1481 = vmatmul.mubr.bf16.gmra.mxu0 %v1410
  %v1482 = vpop.f32.mrf.mxu0
  %v1483 = vadd.f32 0.0, %v1482
  %v1484 = vpop.f32.mrf.mxu0
  %v1485 = vpop.f32.mrf.mxu0
  %v1486 = vadd.f32 0.0, %v1485
  %v1487 = vpop.f32.mrf.mxu0
  %1488 = vmatprep.mubr.bf16.mxu0 0
  %1489 = vmatmul.mubr.bf16.gmra.mxu0 %v1413
  %v1490 = vpop.f32.mrf.mxu0
  %v1491 = vadd.f32 0.0, %v1490
  %v1492 = vpop.f32.mrf.mxu0
  %v1493 = vpop.f32.mrf.mxu0
  %v1494 = vadd.f32 0.0, %v1493
  %v1495 = vpop.f32.mrf.mxu0
  %1496 = vmatprep.mubr.bf16.mxu0 0
  %1497 = vmatmul.mubr.bf16.gmra.mxu0 %v1416
  %v1498 = vpop.f32.mrf.mxu0
  %v1499 = vadd.f32 0.0, %v1498
  %v1500 = vpop.f32.mrf.mxu0
  %v1501 = vpop.f32.mrf.mxu0
  %v1502 = vadd.f32 0.0, %v1501
  %v1503 = vpop.f32.mrf.mxu0
  %1504 = vmatprep.mubr.bf16.mxu0 0
  %1505 = vmatmul.mubr.bf16.gmra.mxu0 %v1419
  %v1506 = vpop.f32.mrf.mxu0
  %v1507 = vadd.f32 0.0, %v1506
  %v1508 = vpop.f32.mrf.mxu0
  %v1509 = vpop.f32.mrf.mxu0
  %v1510 = vadd.f32 0.0, %v1509
  %v1511 = vpop.f32.mrf.mxu0
  %1512 = vmatprep.mubr.bf16.mxu0 0
  %1513 = vmatmul.mubr.bf16.gmra.mxu0 %v1422
  %v1514 = vpop.f32.mrf.mxu0
  %v1515 = vadd.f32 0.0, %v1514
  %v1516 = vpop.f32.mrf.mxu0
  %v1517 = vpop.f32.mrf.mxu0
  %v1518 = vadd.f32 0.0, %v1517
  %v1519 = vpop.f32.mrf.mxu0
  %1520 = vdwg.mxu0
  %v1521 = vxor.u32 %v1459, 2147483648
  %v1522 = vxor.u32 %v1462, 2147483648
  %v1523 = vxor.u32 %v1467, 2147483648
  %v1524 = vxor.u32 %v1470, 2147483648
  %v1525 = vxor.u32 %v1475, 2147483648
  %v1526 = vxor.u32 %v1478, 2147483648
  %v1527 = vxor.u32 %v1483, 2147483648
  %v1528 = vxor.u32 %v1486, 2147483648
  %v1529 = vxor.u32 %v1491, 2147483648
  %v1530 = vxor.u32 %v1494, 2147483648
  %v1531 = vxor.u32 %v1499, 2147483648
  %v1532 = vxor.u32 %v1502, 2147483648
  %v1533 = vxor.u32 %v1507, 2147483648
  %v1534 = vxor.u32 %v1510, 2147483648
  %v1535 = vxor.u32 %v1515, 2147483648
  %v1536 = vxor.u32 %v1518, 2147483648
  %v1537 = vmul.f32 %v1521, 1.442695
  %v1538 = vpow.pop %v1537
  %v1539 = vmul.f32 %v1522, 1.442695
  %v1540 = vpow.pop %v1539
  %v1541 = vmul.f32 %v1523, 1.442695
  %v1542 = vpow.pop %v1541
  %v1543 = vmul.f32 %v1524, 1.442695
  %v1544 = vpow.pop %v1543
  %v1545 = vmul.f32 %v1525, 1.442695
  %v1546 = vpow.pop %v1545
  %v1547 = vmul.f32 %v1526, 1.442695
  %v1548 = vpow.pop %v1547
  %v1549 = vmul.f32 %v1527, 1.442695
  %v1550 = vpow.pop %v1549
  %v1551 = vmul.f32 %v1528, 1.442695
  %v1552 = vpow.pop %v1551
  %v1553 = vmul.f32 %v1529, 1.442695
  %v1554 = vpow.pop %v1553
  %v1555 = vmul.f32 %v1530, 1.442695
  %v1556 = vpow.pop %v1555
  %v1557 = vmul.f32 %v1531, 1.442695
  %v1558 = vpow.pop %v1557
  %v1559 = vmul.f32 %v1532, 1.442695
  %v1560 = vpow.pop %v1559
  %v1561 = vmul.f32 %v1533, 1.442695
  %v1562 = vpow.pop %v1561
  %v1563 = vmul.f32 %v1534, 1.442695
  %v1564 = vpow.pop %v1563
  %v1565 = vmul.f32 %v1535, 1.442695
  %v1566 = vpow.pop %v1565
  %v1567 = vmul.f32 %v1536, 1.442695
  %v1568 = vpow.pop %v1567
  %v1569 = vadd.f32 %v1538, 1.0
  %v1570 = vadd.f32 %v1540, 1.0
  %v1571 = vadd.f32 %v1542, 1.0
  %v1572 = vadd.f32 %v1544, 1.0
  %v1573 = vadd.f32 %v1546, 1.0
  %v1574 = vadd.f32 %v1548, 1.0
  %v1575 = vadd.f32 %v1550, 1.0
  %v1576 = vadd.f32 %v1552, 1.0
  %v1577 = vadd.f32 %v1554, 1.0
  %v1578 = vadd.f32 %v1556, 1.0
  %v1579 = vadd.f32 %v1558, 1.0
  %v1580 = vadd.f32 %v1560, 1.0
  %v1581 = vadd.f32 %v1562, 1.0
  %v1582 = vadd.f32 %v1564, 1.0
  %v1583 = vadd.f32 %v1566, 1.0
  %v1584 = vadd.f32 %v1568, 1.0
  %v1585 = vrcp.pop %v1569
  %v1586 = vmul.f32 1.0, %v1585
  %v1587 = vrcp.pop %v1570
  %v1588 = vmul.f32 1.0, %v1587
  %v1589 = vrcp.pop %v1571
  %v1590 = vmul.f32 1.0, %v1589
  %v1591 = vrcp.pop %v1572
  %v1592 = vmul.f32 1.0, %v1591
  %v1593 = vrcp.pop %v1573
  %v1594 = vmul.f32 1.0, %v1593
  %v1595 = vrcp.pop %v1574
  %v1596 = vmul.f32 1.0, %v1595
  %v1597 = vrcp.pop %v1575
  %v1598 = vmul.f32 1.0, %v1597
  %v1599 = vrcp.pop %v1576
  %v1600 = vmul.f32 1.0, %v1599
  %v1601 = vrcp.pop %v1577
  %v1602 = vmul.f32 1.0, %v1601
  %v1603 = vrcp.pop %v1578
  %v1604 = vmul.f32 1.0, %v1603
  %v1605 = vrcp.pop %v1579
  %v1606 = vmul.f32 1.0, %v1605
  %v1607 = vrcp.pop %v1580
  %v1608 = vmul.f32 1.0, %v1607
  %v1609 = vrcp.pop %v1581
  %v1610 = vmul.f32 1.0, %v1609
  %v1611 = vrcp.pop %v1582
  %v1612 = vmul.f32 1.0, %v1611
  %v1613 = vrcp.pop %v1583
  %v1614 = vmul.f32 1.0, %v1613
  %v1615 = vrcp.pop %v1584
  %v1616 = vmul.f32 1.0, %v1615
  %v1617 = vmul.f32 %v1586, %v430
  %v1618 = vmul.f32 %v1588, %v435
  %v1619 = vmul.f32 %v1590, %v440
  %v1620 = vmul.f32 %v1592, %v445
  %v1621 = vmul.f32 %v1594, %v450
  %v1622 = vmul.f32 %v1596, %v455
  %v1623 = vmul.f32 %v1598, %v460
  %v1624 = vmul.f32 %v1600, %v465
  %v1625 = vmul.f32 %v1602, %v470
  %v1626 = vmul.f32 %v1604, %v475
  %v1627 = vmul.f32 %v1606, %v480
  %v1628 = vmul.f32 %v1608, %v485
  %v1629 = vmul.f32 %v1610, %v490
  %v1630 = vmul.f32 %v1612, %v495
  %v1631 = vmul.f32 %v1614, %v500
  %v1632 = vmul.f32 %v1616, %v505
  %v1633 = vmul.f32 %v1586, %v609
  %v1634 = vmul.f32 %v1588, %v613
  %v1635 = vmul.f32 %v1590, %v617
  %v1636 = vmul.f32 %v1592, %v621
  %v1637 = vmul.f32 %v1594, %v625
  %v1638 = vmul.f32 %v1596, %v629
  %v1639 = vmul.f32 %v1598, %v633
  %v1640 = vmul.f32 %v1600, %v637
  %v1641 = vmul.f32 %v1602, %v641
  %v1642 = vmul.f32 %v1604, %v645
  %v1643 = vmul.f32 %v1606, %v649
  %v1644 = vmul.f32 %v1608, %v653
  %v1645 = vmul.f32 %v1610, %v657
  %v1646 = vmul.f32 %v1612, %v661
  %v1647 = vmul.f32 %v1614, %v665
  %v1648 = vmul.f32 %v1616, %v669
  %v1649 = vmul.f32 %v1586, %v773
  %v1650 = vmul.f32 %v1588, %v777
  %v1651 = vmul.f32 %v1590, %v781
  %v1652 = vmul.f32 %v1592, %v785
  %v1653 = vmul.f32 %v1594, %v789
  %v1654 = vmul.f32 %v1596, %v793
  %v1655 = vmul.f32 %v1598, %v797
  %v1656 = vmul.f32 %v1600, %v801
  %v1657 = vmul.f32 %v1602, %v805
  %v1658 = vmul.f32 %v1604, %v809
  %v1659 = vmul.f32 %v1606, %v813
  %v1660 = vmul.f32 %v1608, %v817
  %v1661 = vmul.f32 %v1610, %v821
  %v1662 = vmul.f32 %v1612, %v825
  %v1663 = vmul.f32 %v1614, %v829
  %v1664 = vmul.f32 %v1616, %v833
  %1681 = vrot.lane.b32.xlu0 %v1633, 32
  %v1682 = vpop.permute.xlu0 %1681
  %1683 = vrot.lane.b32.xlu0 %v1634, 32
  %v1684 = vpop.permute.xlu0 %1683
  %1685 = vrot.lane.b32.xlu0 %v1635, 32
  %v1686 = vpop.permute.xlu0 %1685
  %1687 = vrot.lane.b32.xlu0 %v1636, 32
  %v1688 = vpop.permute.xlu0 %1687
  %1689 = vrot.lane.b32.xlu0 %v1637, 32
  %v1690 = vpop.permute.xlu0 %1689
  %1691 = vrot.lane.b32.xlu0 %v1638, 32
  %v1692 = vpop.permute.xlu0 %1691
  %1693 = vrot.lane.b32.xlu0 %v1639, 32
  %v1694 = vpop.permute.xlu0 %1693
  %1695 = vrot.lane.b32.xlu0 %v1640, 32
  %v1696 = vpop.permute.xlu0 %1695
  %1697 = vrot.lane.b32.xlu0 %v1641, 32
  %v1698 = vpop.permute.xlu0 %1697
  %1699 = vrot.lane.b32.xlu0 %v1642, 32
  %v1700 = vpop.permute.xlu0 %1699
  %1701 = vrot.lane.b32.xlu0 %v1643, 32
  %v1702 = vpop.permute.xlu0 %1701
  %1703 = vrot.lane.b32.xlu0 %v1644, 32
  %v1704 = vpop.permute.xlu0 %1703
  %1705 = vrot.lane.b32.xlu0 %v1645, 32
  %v1706 = vpop.permute.xlu0 %1705
  %1707 = vrot.lane.b32.xlu0 %v1646, 32
  %v1708 = vpop.permute.xlu0 %1707
  %1709 = vrot.lane.b32.xlu0 %v1647, 32
  %v1710 = vpop.permute.xlu0 %1709
  %1711 = vrot.lane.b32.xlu0 %v1648, 32
  %v1712 = vpop.permute.xlu0 %1711
  %1745 = vrot.lane.b32.xlu0 %v1649, 64
  %v1746 = vpop.permute.xlu0 %1745
  %1747 = vrot.lane.b32.xlu0 %v1650, 64
  %v1748 = vpop.permute.xlu0 %1747
  %1749 = vrot.lane.b32.xlu0 %v1651, 64
  %v1750 = vpop.permute.xlu0 %1749
  %1751 = vrot.lane.b32.xlu0 %v1652, 64
  %v1752 = vpop.permute.xlu0 %1751
  %1753 = vrot.lane.b32.xlu0 %v1653, 64
  %v1754 = vpop.permute.xlu0 %1753
  %1755 = vrot.lane.b32.xlu0 %v1654, 64
  %v1756 = vpop.permute.xlu0 %1755
  %1757 = vrot.lane.b32.xlu0 %v1655, 64
  %v1758 = vpop.permute.xlu0 %1757
  %1759 = vrot.lane.b32.xlu0 %v1656, 64
  %v1760 = vpop.permute.xlu0 %1759
  %1761 = vrot.lane.b32.xlu0 %v1657, 64
  %v1762 = vpop.permute.xlu0 %1761
  %1763 = vrot.lane.b32.xlu0 %v1658, 64
  %v1764 = vpop.permute.xlu0 %1763
  %1765 = vrot.lane.b32.xlu0 %v1659, 64
  %v1766 = vpop.permute.xlu0 %1765
  %1767 = vrot.lane.b32.xlu0 %v1660, 64
  %v1768 = vpop.permute.xlu0 %1767
  %1769 = vrot.lane.b32.xlu0 %v1661, 64
  %v1770 = vpop.permute.xlu0 %1769
  %1771 = vrot.lane.b32.xlu0 %v1662, 64
  %v1772 = vpop.permute.xlu0 %1771
  %1773 = vrot.lane.b32.xlu0 %v1663, 64
  %v1774 = vpop.permute.xlu0 %1773
  %1775 = vrot.lane.b32.xlu0 %v1664, 64
  %v1776 = vpop.permute.xlu0 %1775
  %1809 = vrot.lane.b32.xlu0 %v1586, 96
  %v1810 = vpop.permute.xlu0 %1809
  %1811 = vrot.lane.b32.xlu0 %v1588, 96
  %v1812 = vpop.permute.xlu0 %1811
  %1813 = vrot.lane.b32.xlu0 %v1590, 96
  %v1814 = vpop.permute.xlu0 %1813
  %1815 = vrot.lane.b32.xlu0 %v1592, 96
  %v1816 = vpop.permute.xlu0 %1815
  %1817 = vrot.lane.b32.xlu0 %v1594, 96
  %v1818 = vpop.permute.xlu0 %1817
  %1819 = vrot.lane.b32.xlu0 %v1596, 96
  %v1820 = vpop.permute.xlu0 %1819
  %1821 = vrot.lane.b32.xlu0 %v1598, 96
  %v1822 = vpop.permute.xlu0 %1821
  %1823 = vrot.lane.b32.xlu0 %v1600, 96
  %v1824 = vpop.permute.xlu0 %1823
  %1825 = vrot.lane.b32.xlu0 %v1602, 96
  %v1826 = vpop.permute.xlu0 %1825
  %1827 = vrot.lane.b32.xlu0 %v1604, 96
  %v1828 = vpop.permute.xlu0 %1827
  %1829 = vrot.lane.b32.xlu0 %v1606, 96
  %v1830 = vpop.permute.xlu0 %1829
  %1831 = vrot.lane.b32.xlu0 %v1608, 96
  %v1832 = vpop.permute.xlu0 %1831
  %1833 = vrot.lane.b32.xlu0 %v1610, 96
  %v1834 = vpop.permute.xlu0 %1833
  %1835 = vrot.lane.b32.xlu0 %v1612, 96
  %v1836 = vpop.permute.xlu0 %1835
  %1837 = vrot.lane.b32.xlu0 %v1614, 96
  %v1838 = vpop.permute.xlu0 %1837
  %1839 = vrot.lane.b32.xlu0 %v1616, 96
  %v1840 = vpop.permute.xlu0 %1839
  %v1857 = vsel %vm322, %v1617, %v1682
  %v1858 = vsel %vm322, %v1618, %v1684
  %v1859 = vsel %vm322, %v1619, %v1686
  %v1860 = vsel %vm322, %v1620, %v1688
  %v1861 = vsel %vm322, %v1621, %v1690
  %v1862 = vsel %vm322, %v1622, %v1692
  %v1863 = vsel %vm322, %v1623, %v1694
  %v1864 = vsel %vm322, %v1624, %v1696
  %v1865 = vsel %vm322, %v1625, %v1698
  %v1866 = vsel %vm322, %v1626, %v1700
  %v1867 = vsel %vm322, %v1627, %v1702
  %v1868 = vsel %vm322, %v1628, %v1704
  %v1869 = vsel %vm322, %v1629, %v1706
  %v1870 = vsel %vm322, %v1630, %v1708
  %v1871 = vsel %vm322, %v1631, %v1710
  %v1872 = vsel %vm322, %v1632, %v1712
  %v1873 = vsel %vm1399, %v1857, %v1746
  %v1874 = vsel %vm1399, %v1858, %v1748
  %v1875 = vsel %vm1399, %v1859, %v1750
  %v1876 = vsel %vm1399, %v1860, %v1752
  %v1877 = vsel %vm1399, %v1861, %v1754
  %v1878 = vsel %vm1399, %v1862, %v1756
  %v1879 = vsel %vm1399, %v1863, %v1758
  %v1880 = vsel %vm1399, %v1864, %v1760
  %v1881 = vsel %vm1399, %v1865, %v1762
  %v1882 = vsel %vm1399, %v1866, %v1764
  %v1883 = vsel %vm1399, %v1867, %v1766
  %v1884 = vsel %vm1399, %v1868, %v1768
  %v1885 = vsel %vm1399, %v1869, %v1770
  %v1886 = vsel %vm1399, %v1870, %v1772
  %v1887 = vsel %vm1399, %v1871, %v1774
  %v1888 = vsel %vm1399, %v1872, %v1776
  %vm1889 = vcmask 785408
  %v1890 = vsel %vm1889, %v1873, %v1810
  %v1891 = vsel %vm1889, %v1874, %v1812
  %v1892 = vsel %vm1889, %v1875, %v1814
  %v1893 = vsel %vm1889, %v1876, %v1816
  %v1894 = vsel %vm1889, %v1877, %v1818
  %v1895 = vsel %vm1889, %v1878, %v1820
  %v1896 = vsel %vm1889, %v1879, %v1822
  %v1897 = vsel %vm1889, %v1880, %v1824
  %v1898 = vsel %vm1889, %v1881, %v1826
  %v1899 = vsel %vm1889, %v1882, %v1828
  %v1900 = vsel %vm1889, %v1883, %v1830
  %v1901 = vsel %vm1889, %v1884, %v1832
  %v1902 = vsel %vm1889, %v1885, %v1834
  %v1903 = vsel %vm1889, %v1886, %v1836
  %v1904 = vsel %vm1889, %v1887, %v1838
  %v1905 = vsel %vm1889, %v1888, %v1840
  %v1906 = vpack.c.bf16 %v1103, %v1102
  %v1907 = vpack.c.bf16 %v1105, %v1104
  %v1908 = vpack.c.bf16 %v1107, %v1106
  %v1909 = vpack.c.bf16 %v1109, %v1108
  %v1910 = vpack.c.bf16 %v1111, %v1110
  %v1911 = vpack.c.bf16 %v1113, %v1112
  %v1912 = vpack.c.bf16 %v1115, %v1114
  %v1913 = vpack.c.bf16 %v1117, %v1116
  %v1914 = vpack.c.bf16 %v1891, %v1890
  %v1915 = vpack.c.bf16 %v1893, %v1892
  %v1916 = vpack.c.bf16 %v1895, %v1894
  %v1917 = vpack.c.bf16 %v1897, %v1896
  %v1918 = vpack.c.bf16 %v1899, %v1898
  %v1919 = vpack.c.bf16 %v1901, %v1900
  %v1920 = vpack.c.bf16 %v1903, %v1902
  %v1921 = vpack.c.bf16 %v1905, %v1904
  %1922 = vmatprep.subr.bf16.mxu0 %v1394
  %1923 = vmatpush1.bf16.msra.mxu0 %v1921
  %1924 = vmatprep.subr.bf16.mxu0 %v1393
  %1925 = vmatpush1.bf16.msra.mxu0 %v1920
  %1926 = vmatprep.subr.bf16.mxu0 %v1392
  %1927 = vmatpush1.bf16.msra.mxu0 %v1919
  %1928 = vmatprep.subr.bf16.mxu0 %v1391
  %1929 = vmatpush1.bf16.msra.mxu0 %v1918
  %1930 = vmatprep.subr.bf16.mxu0 %v1390
  %1931 = vmatpush1.bf16.msra.mxu0 %v1917
  %1932 = vmatprep.subr.bf16.mxu0 %v1389
  %1933 = vmatpush1.bf16.msra.mxu0 %v1916
  %1934 = vmatprep.subr.bf16.mxu0 %v1388
  %1935 = vmatpush1.bf16.msra.mxu0 %v1915
  %1936 = vmatprep.subr.bf16.mxu0 %v1387
  %1937 = vmatpush1.bf16.msra.mxu0 %v1914
  %1938 = vmatprep.subr.bf16.mxu0 0
  %1939 = vmatpush2.bf16.msra.mxu0 0
  %1940 = vmatprep.subr.bf16.mxu0 0
  %1941 = vmatpush2.bf16.msra.mxu0 0
  %1942 = vmatprep.subr.bf16.mxu0 0
  %1943 = vmatpush2.bf16.msra.mxu0 0
  %1944 = vmatprep.subr.bf16.mxu0 0
  %1945 = vmatpush2.bf16.msra.mxu0 0
  %1946 = vmatprep.subr.bf16.mxu0 0
  %1947 = vmatpush2.bf16.msra.mxu0 0
  %1948 = vmatprep.subr.bf16.mxu0 0
  %1949 = vmatpush2.bf16.msra.mxu0 0
  %1950 = vmatprep.subr.bf16.mxu0 0
  %1951 = vmatpush2.bf16.msra.mxu0 0
  %1952 = vmatprep.subr.bf16.mxu0 0
  %1953 = vmatpush2.bf16.msra.mxu0 0
  %1954 = vmatprep.mubr.bf16.mxu0 0
  %1955 = vmatmul.mubr.bf16.gmra.mxu0 %v1906
  %v1956 = vpop.f32.mrf.mxu0
  %v1957 = vadd.f32 0.0, %v1956
  %v1958 = vpop.f32.mrf.mxu0
  %v1959 = vadd.f32 0.0, %v1958
  %v1960 = vpop.f32.mrf.mxu0
  %v1961 = vadd.f32 0.0, %v1960
  %v1962 = vpop.f32.mrf.mxu0
  %v1963 = vadd.f32 0.0, %v1962
  %1964 = vmatprep.mubr.bf16.mxu0 0
  %1965 = vmatmul.mubr.bf16.gmra.mxu0 %v1907
  %v1966 = vpop.f32.mrf.mxu0
  %v1967 = vadd.f32 0.0, %v1966
  %v1968 = vpop.f32.mrf.mxu0
  %v1969 = vadd.f32 0.0, %v1968
  %v1970 = vpop.f32.mrf.mxu0
  %v1971 = vadd.f32 0.0, %v1970
  %v1972 = vpop.f32.mrf.mxu0
  %v1973 = vadd.f32 0.0, %v1972
  %1974 = vmatprep.mubr.bf16.mxu0 0
  %1975 = vmatmul.mubr.bf16.gmra.mxu0 %v1908
  %v1976 = vpop.f32.mrf.mxu0
  %v1977 = vadd.f32 0.0, %v1976
  %v1978 = vpop.f32.mrf.mxu0
  %v1979 = vadd.f32 0.0, %v1978
  %v1980 = vpop.f32.mrf.mxu0
  %v1981 = vadd.f32 0.0, %v1980
  %v1982 = vpop.f32.mrf.mxu0
  %v1983 = vadd.f32 0.0, %v1982
  %1984 = vmatprep.mubr.bf16.mxu0 0
  %1985 = vmatmul.mubr.bf16.gmra.mxu0 %v1909
  %v1986 = vpop.f32.mrf.mxu0
  %v1987 = vadd.f32 0.0, %v1986
  %v1988 = vpop.f32.mrf.mxu0
  %v1989 = vadd.f32 0.0, %v1988
  %v1990 = vpop.f32.mrf.mxu0
  %v1991 = vadd.f32 0.0, %v1990
  %v1992 = vpop.f32.mrf.mxu0
  %v1993 = vadd.f32 0.0, %v1992
  %1994 = vmatprep.mubr.bf16.mxu0 0
  %1995 = vmatmul.mubr.bf16.gmra.mxu0 %v1910
  %v1996 = vpop.f32.mrf.mxu0
  %v1997 = vpop.f32.mrf.mxu0
  %v1998 = vadd.f32 0.0, %v1997
  %v1999 = vpop.f32.mrf.mxu0
  %v2000 = vpop.f32.mrf.mxu0
  %v2001 = vadd.f32 0.0, %v2000
  %2002 = vmatprep.mubr.bf16.mxu0 0
  %2003 = vmatmul.mubr.bf16.gmra.mxu0 %v1911
  %v2004 = vpop.f32.mrf.mxu0
  %v2005 = vpop.f32.mrf.mxu0
  %v2006 = vadd.f32 0.0, %v2005
  %v2007 = vpop.f32.mrf.mxu0
  %v2008 = vpop.f32.mrf.mxu0
  %v2009 = vadd.f32 0.0, %v2008
  %2010 = vmatprep.mubr.bf16.mxu0 0
  %2011 = vmatmul.mubr.bf16.gmra.mxu0 %v1912
  %v2012 = vpop.f32.mrf.mxu0
  %v2013 = vpop.f32.mrf.mxu0
  %v2014 = vadd.f32 0.0, %v2013
  %v2015 = vpop.f32.mrf.mxu0
  %v2016 = vpop.f32.mrf.mxu0
  %v2017 = vadd.f32 0.0, %v2016
  %2018 = vmatprep.mubr.bf16.mxu0 0
  %2019 = vmatmul.mubr.bf16.gmra.mxu0 %v1913
  %v2020 = vpop.f32.mrf.mxu0
  %v2021 = vpop.f32.mrf.mxu0
  %v2022 = vadd.f32 0.0, %v2021
  %v2023 = vpop.f32.mrf.mxu0
  %v2024 = vpop.f32.mrf.mxu0
  %v2025 = vadd.f32 0.0, %v2024
  %2026 = vdwg.mxu0
  %v2027 = vmul.f32 %v430, %v1957
  %v2028 = vmul.f32 %v435, %v1961
  %v2029 = vmul.f32 %v440, %v1967
  %v2030 = vmul.f32 %v445, %v1971
  %v2031 = vmul.f32 %v450, %v1977
  %v2032 = vmul.f32 %v455, %v1981
  %v2033 = vmul.f32 %v460, %v1987
  %v2034 = vmul.f32 %v465, %v1991
  %2043 = vrot.lane.b32.xlu0 %v2027, 32
  %v2044 = vpop.permute.xlu0 %2043
  %2045 = vrot.lane.b32.xlu0 %v2028, 32
  %v2046 = vpop.permute.xlu0 %2045
  %2047 = vrot.lane.b32.xlu0 %v2029, 32
  %v2048 = vpop.permute.xlu0 %2047
  %2049 = vrot.lane.b32.xlu0 %v2030, 32
  %v2050 = vpop.permute.xlu0 %2049
  %2051 = vrot.lane.b32.xlu0 %v2031, 32
  %v2052 = vpop.permute.xlu0 %2051
  %2053 = vrot.lane.b32.xlu0 %v2032, 32
  %v2054 = vpop.permute.xlu0 %2053
  %2055 = vrot.lane.b32.xlu0 %v2033, 32
  %v2056 = vpop.permute.xlu0 %2055
  %2057 = vrot.lane.b32.xlu0 %v2034, 32
  %v2058 = vpop.permute.xlu0 %2057
  %v2067 = vsub.f32 %v1957, %v2044
  %v2068 = vsub.f32 %v1961, %v2046
  %v2069 = vsub.f32 %v1967, %v2048
  %v2070 = vsub.f32 %v1971, %v2050
  %v2071 = vsub.f32 %v1977, %v2052
  %v2072 = vsub.f32 %v1981, %v2054
  %v2073 = vsub.f32 %v1987, %v2056
  %v2074 = vsub.f32 %v1991, %v2058
  %v2075 = vmul.f32 %v2067, 0.01
  %v2076 = vmul.f32 %v2068, 0.01
  %v2077 = vmul.f32 %v2069, 0.01
  %v2078 = vmul.f32 %v2070, 0.01
  %v2079 = vmul.f32 %v2071, 0.01
  %v2080 = vmul.f32 %v2072, 0.01
  %v2081 = vmul.f32 %v2073, 0.01
  %v2082 = vmul.f32 %v2074, 0.01
  %v2083 = vmul.f32 %v609, %v1957
  %v2084 = vmul.f32 %v613, %v1961
  %v2085 = vmul.f32 %v617, %v1967
  %v2086 = vmul.f32 %v621, %v1971
  %v2087 = vmul.f32 %v625, %v1977
  %v2088 = vmul.f32 %v629, %v1981
  %v2089 = vmul.f32 %v633, %v1987
  %v2090 = vmul.f32 %v637, %v1991
  %2099 = vrot.lane.b32.xlu0 %v2083, 64
  %v2100 = vpop.permute.xlu0 %2099
  %2101 = vrot.lane.b32.xlu0 %v2084, 64
  %v2102 = vpop.permute.xlu0 %2101
  %2103 = vrot.lane.b32.xlu0 %v2085, 64
  %v2104 = vpop.permute.xlu0 %2103
  %2105 = vrot.lane.b32.xlu0 %v2086, 64
  %v2106 = vpop.permute.xlu0 %2105
  %2107 = vrot.lane.b32.xlu0 %v2087, 64
  %v2108 = vpop.permute.xlu0 %2107
  %2109 = vrot.lane.b32.xlu0 %v2088, 64
  %v2110 = vpop.permute.xlu0 %2109
  %2111 = vrot.lane.b32.xlu0 %v2089, 64
  %v2112 = vpop.permute.xlu0 %2111
  %2113 = vrot.lane.b32.xlu0 %v2090, 64
  %v2114 = vpop.permute.xlu0 %2113
  %v2123 = vsub.f32 %v1957, %v2100
  %v2124 = vsub.f32 %v1961, %v2102
  %v2125 = vsub.f32 %v1967, %v2104
  %v2126 = vsub.f32 %v1971, %v2106
  %v2127 = vsub.f32 %v1977, %v2108
  %v2128 = vsub.f32 %v1981, %v2110
  %v2129 = vsub.f32 %v1987, %v2112
  %v2130 = vsub.f32 %v1991, %v2114
  %v2131 = vmul.f32 %v2123, 0.01
  %v2132 = vmul.f32 %v2124, 0.01
  %v2133 = vmul.f32 %v2125, 0.01
  %v2134 = vmul.f32 %v2126, 0.01
  %v2135 = vmul.f32 %v2127, 0.01
  %v2136 = vmul.f32 %v2128, 0.01
  %v2137 = vmul.f32 %v2129, 0.01
  %v2138 = vmul.f32 %v2130, 0.01
  %v2139 = vmul.f32 %v773, %v1957
  %v2140 = vmul.f32 %v777, %v1961
  %v2141 = vmul.f32 %v781, %v1967
  %v2142 = vmul.f32 %v785, %v1971
  %v2143 = vmul.f32 %v789, %v1977
  %v2144 = vmul.f32 %v793, %v1981
  %v2145 = vmul.f32 %v797, %v1987
  %v2146 = vmul.f32 %v801, %v1991
  %2155 = vrot.lane.b32.xlu0 %v2139, 96
  %v2156 = vpop.permute.xlu0 %2155
  %2157 = vrot.lane.b32.xlu0 %v2140, 96
  %v2158 = vpop.permute.xlu0 %2157
  %2159 = vrot.lane.b32.xlu0 %v2141, 96
  %v2160 = vpop.permute.xlu0 %2159
  %2161 = vrot.lane.b32.xlu0 %v2142, 96
  %v2162 = vpop.permute.xlu0 %2161
  %2163 = vrot.lane.b32.xlu0 %v2143, 96
  %v2164 = vpop.permute.xlu0 %2163
  %2165 = vrot.lane.b32.xlu0 %v2144, 96
  %v2166 = vpop.permute.xlu0 %2165
  %2167 = vrot.lane.b32.xlu0 %v2145, 96
  %v2168 = vpop.permute.xlu0 %2167
  %2169 = vrot.lane.b32.xlu0 %v2146, 96
  %v2170 = vpop.permute.xlu0 %2169
  %v2179 = vsub.f32 %v1957, %v2156
  %v2180 = vsub.f32 %v1961, %v2158
  %v2181 = vsub.f32 %v1967, %v2160
  %v2182 = vsub.f32 %v1971, %v2162
  %v2183 = vsub.f32 %v1977, %v2164
  %v2184 = vsub.f32 %v1981, %v2166
  %v2185 = vsub.f32 %v1987, %v2168
  %v2186 = vsub.f32 %v1991, %v2170
  %v2187 = vmul.f32 %v2179, 0.01
  %v2188 = vmul.f32 %v2180, 0.01
  %v2189 = vmul.f32 %v2181, 0.01
  %v2190 = vmul.f32 %v2182, 0.01
  %v2191 = vmul.f32 %v2183, 0.01
  %v2192 = vmul.f32 %v2184, 0.01
  %v2193 = vmul.f32 %v2185, 0.01
  %v2194 = vmul.f32 %v2186, 0.01
  %v2195 = vmul.f32 %v1959, 0.01
  %v2196 = vmul.f32 %v1963, 0.01
  %v2197 = vmul.f32 %v1969, 0.01
  %v2198 = vmul.f32 %v1973, 0.01
  %v2199 = vmul.f32 %v1979, 0.01
  %v2200 = vmul.f32 %v1983, 0.01
  %v2201 = vmul.f32 %v1989, 0.01
  %v2202 = vmul.f32 %v1993, 0.01
  %v2203 = vmul.f32 %v1998, 0.01
  %v2204 = vmul.f32 %v2001, 0.01
  %v2205 = vmul.f32 %v2006, 0.01
  %v2206 = vmul.f32 %v2009, 0.01
  %v2207 = vmul.f32 %v2014, 0.01
  %v2208 = vmul.f32 %v2017, 0.01
  %v2209 = vmul.f32 %v2022, 0.01
  %v2210 = vmul.f32 %v2025, 0.01
  %2227 = vrot.lane.b32.xlu0 %v1363, 64
  %v2228 = vpop.permute.xlu0 %2227
  %2229 = vrot.lane.b32.xlu0 %v1364, 64
  %v2230 = vpop.permute.xlu0 %2229
  %2231 = vrot.lane.b32.xlu0 %v1365, 64
  %v2232 = vpop.permute.xlu0 %2231
  %2233 = vrot.lane.b32.xlu0 %v1366, 64
  %v2234 = vpop.permute.xlu0 %2233
  %2235 = vrot.lane.b32.xlu0 %v1367, 64
  %v2236 = vpop.permute.xlu0 %2235
  %2237 = vrot.lane.b32.xlu0 %v1368, 64
  %v2238 = vpop.permute.xlu0 %2237
  %2239 = vrot.lane.b32.xlu0 %v1369, 64
  %v2240 = vpop.permute.xlu0 %2239
  %2241 = vrot.lane.b32.xlu0 %v1370, 64
  %v2242 = vpop.permute.xlu0 %2241
  %2243 = vrot.lane.b32.xlu0 %v1371, 64
  %v2244 = vpop.permute.xlu0 %2243
  %2245 = vrot.lane.b32.xlu0 %v1372, 64
  %v2246 = vpop.permute.xlu0 %2245
  %2247 = vrot.lane.b32.xlu0 %v1373, 64
  %v2248 = vpop.permute.xlu0 %2247
  %2249 = vrot.lane.b32.xlu0 %v1374, 64
  %v2250 = vpop.permute.xlu0 %2249
  %2251 = vrot.lane.b32.xlu0 %v1375, 64
  %v2252 = vpop.permute.xlu0 %2251
  %2253 = vrot.lane.b32.xlu0 %v1376, 64
  %v2254 = vpop.permute.xlu0 %2253
  %2255 = vrot.lane.b32.xlu0 %v1377, 64
  %v2256 = vpop.permute.xlu0 %2255
  %2257 = vrot.lane.b32.xlu0 %v1378, 64
  %v2258 = vpop.permute.xlu0 %2257
  %v2275 = vsel %vm1399, %v2195, %v2228
  %v2276 = vsel %vm1399, %v2196, %v2230
  %v2277 = vsel %vm1399, %v2197, %v2232
  %v2278 = vsel %vm1399, %v2198, %v2234
  %v2279 = vsel %vm1399, %v2199, %v2236
  %v2280 = vsel %vm1399, %v2200, %v2238
  %v2281 = vsel %vm1399, %v2201, %v2240
  %v2282 = vsel %vm1399, %v2202, %v2242
  %v2283 = vsel %vm1399, %v2203, %v2244
  %v2284 = vsel %vm1399, %v2204, %v2246
  %v2285 = vsel %vm1399, %v2205, %v2248
  %v2286 = vsel %vm1399, %v2206, %v2250
  %v2287 = vsel %vm1399, %v2207, %v2252
  %v2288 = vsel %vm1399, %v2208, %v2254
  %v2289 = vsel %vm1399, %v2209, %v2256
  %v2290 = vsel %vm1399, %v2210, %v2258
  %v2291 = vld [vmem:[%s16] sm:$0xff]
  %v2292 = vld [vmem:[%s16 + $0x8] sm:$0xff]
  %v2293 = vld [vmem:[%s16 + $0x10] sm:$0xff]
  %v2294 = vld [vmem:[%s16 + $0x18] sm:$0xff]
  %v2295 = vld [vmem:[%s16 + $0x20] sm:$0xff]
  %v2296 = vld [vmem:[%s16 + $0x28] sm:$0xff]
  %v2297 = vld [vmem:[%s16 + $0x30] sm:$0xff]
  %v2298 = vld [vmem:[%s16 + $0x38] sm:$0xff]
  %v2299 = vld [vmem:[%s16 + $0x40] sm:$0xff]
  %v2300 = vld [vmem:[%s16 + $0x48] sm:$0xff]
  %v2301 = vld [vmem:[%s16 + $0x50] sm:$0xff]
  %v2302 = vld [vmem:[%s16 + $0x58] sm:$0xff]
  %v2303 = vld [vmem:[%s16 + $0x60] sm:$0xff]
  %v2304 = vld [vmem:[%s16 + $0x68] sm:$0xff]
  %v2305 = vld [vmem:[%s16 + $0x70] sm:$0xff]
  %v2306 = vld [vmem:[%s16 + $0x78] sm:$0xff]
  %v2307 = vpack.c.bf16 %v2276, %v2275
  %v2308 = vpack.c.bf16 %v2278, %v2277
  %v2309 = vpack.c.bf16 %v2280, %v2279
  %v2310 = vpack.c.bf16 %v2282, %v2281
  %v2311 = vpack.c.bf16 %v2284, %v2283
  %v2312 = vpack.c.bf16 %v2286, %v2285
  %v2313 = vpack.c.bf16 %v2288, %v2287
  %v2314 = vpack.c.bf16 %v2290, %v2289
  %v2315 = vpack.c.bf16 %v2292, %v2291
  %v2316 = vpack.c.bf16 %v2294, %v2293
  %v2317 = vpack.c.bf16 %v2296, %v2295
  %v2318 = vpack.c.bf16 %v2298, %v2297
  %v2319 = vpack.c.bf16 %v2300, %v2299
  %v2320 = vpack.c.bf16 %v2302, %v2301
  %v2321 = vpack.c.bf16 %v2304, %v2303
  %v2322 = vpack.c.bf16 %v2306, %v2305
  %v2323 = vld [vmem:[%s17] sm:$0x1]
  %v2325 = vlaneseq
  %v2326 = vshrl.u32 %v2325, 7
  %v2327 = vsub.s32 0, %v2326
  %v2328 = vrot.slane %v2323, %v2327
  %2330 = vmatprep.subr.bf16.mxu0 0
  %2331 = vmatpush1.bf16.msra.mxu0 %v2322
  %2332 = vmatprep.subr.bf16.mxu0 0
  %2333 = vmatpush1.bf16.msra.mxu0 %v2321
  %2334 = vmatprep.subr.bf16.mxu0 0
  %2335 = vmatpush1.bf16.msra.mxu0 %v2320
  %2336 = vmatprep.subr.bf16.mxu0 0
  %2337 = vmatpush1.bf16.msra.mxu0 %v2319
  %2338 = vmatprep.subr.bf16.mxu0 0
  %2339 = vmatpush1.bf16.msra.mxu0 %v2318
  %2340 = vmatprep.subr.bf16.mxu0 0
  %2341 = vmatpush1.bf16.msra.mxu0 %v2317
  %2342 = vmatprep.subr.bf16.mxu0 0
  %2343 = vmatpush1.bf16.msra.mxu0 %v2316
  %2344 = vmatprep.subr.bf16.mxu0 0
  %2345 = vmatpush1.bf16.msra.mxu0 %v2315
  %2346 = vmatprep.subr.bf16.mxu0 0
  %2347 = vmatpush2.bf16.msra.mxu0 0
  %2348 = vmatprep.subr.bf16.mxu0 0
  %2349 = vmatpush2.bf16.msra.mxu0 0
  %2350 = vmatprep.subr.bf16.mxu0 0
  %2351 = vmatpush2.bf16.msra.mxu0 0
  %2352 = vmatprep.subr.bf16.mxu0 0
  %2353 = vmatpush2.bf16.msra.mxu0 0
  %2354 = vmatprep.subr.bf16.mxu0 0
  %2355 = vmatpush2.bf16.msra.mxu0 0
  %2356 = vmatprep.subr.bf16.mxu0 0
  %2357 = vmatpush2.bf16.msra.mxu0 0
  %2358 = vmatprep.subr.bf16.mxu0 0
  %2359 = vmatpush2.bf16.msra.mxu0 0
  %2360 = vmatprep.subr.bf16.mxu0 0
  %2361 = vmatpush2.bf16.msra.mxu0 0
  %2362 = vmatprep.mubr.bf16.mxu0 0
  %2363 = vmatmul.mubr.bf16.gmra.mxu0 %v2307
  %v2364 = vpop.f32.mrf.mxu0
  %v2365 = vadd.f32 %v2328, %v2364
  %v2366 = vpop.f32.mrf.mxu0
  %v2367 = vpop.f32.mrf.mxu0
  %v2368 = vadd.f32 %v2328, %v2367
  %v2369 = vpop.f32.mrf.mxu0
  %2370 = vmatprep.mubr.bf16.mxu0 0
  %2371 = vmatmul.mubr.bf16.gmra.mxu0 %v2308
  %v2372 = vpop.f32.mrf.mxu0
  %v2373 = vadd.f32 %v2328, %v2372
  %v2374 = vpop.f32.mrf.mxu0
  %v2375 = vpop.f32.mrf.mxu0
  %v2376 = vadd.f32 %v2328, %v2375
  %v2377 = vpop.f32.mrf.mxu0
  %2378 = vmatprep.mubr.bf16.mxu0 0
  %2379 = vmatmul.mubr.bf16.gmra.mxu0 %v2309
  %v2380 = vpop.f32.mrf.mxu0
  %v2381 = vadd.f32 %v2328, %v2380
  %v2382 = vpop.f32.mrf.mxu0
  %v2383 = vpop.f32.mrf.mxu0
  %v2384 = vadd.f32 %v2328, %v2383
  %v2385 = vpop.f32.mrf.mxu0
  %2386 = vmatprep.mubr.bf16.mxu0 0
  %2387 = vmatmul.mubr.bf16.gmra.mxu0 %v2310
  %v2388 = vpop.f32.mrf.mxu0
  %v2389 = vadd.f32 %v2328, %v2388
  %v2390 = vpop.f32.mrf.mxu0
  %v2391 = vpop.f32.mrf.mxu0
  %v2392 = vadd.f32 %v2328, %v2391
  %v2393 = vpop.f32.mrf.mxu0
  %2394 = vmatprep.mubr.bf16.mxu0 0
  %2395 = vmatmul.mubr.bf16.gmra.mxu0 %v2311
  %v2396 = vpop.f32.mrf.mxu0
  %v2397 = vadd.f32 %v2328, %v2396
  %v2398 = vpop.f32.mrf.mxu0
  %v2399 = vpop.f32.mrf.mxu0
  %v2400 = vadd.f32 %v2328, %v2399
  %v2401 = vpop.f32.mrf.mxu0
  %2402 = vmatprep.mubr.bf16.mxu0 0
  %2403 = vmatmul.mubr.bf16.gmra.mxu0 %v2312
  %v2404 = vpop.f32.mrf.mxu0
  %v2405 = vadd.f32 %v2328, %v2404
  %v2406 = vpop.f32.mrf.mxu0
  %v2407 = vpop.f32.mrf.mxu0
  %v2408 = vadd.f32 %v2328, %v2407
  %v2409 = vpop.f32.mrf.mxu0
  %2410 = vmatprep.mubr.bf16.mxu0 0
  %2411 = vmatmul.mubr.bf16.gmra.mxu0 %v2313
  %v2412 = vpop.f32.mrf.mxu0
  %v2413 = vadd.f32 %v2328, %v2412
  %v2414 = vpop.f32.mrf.mxu0
  %v2415 = vpop.f32.mrf.mxu0
  %v2416 = vadd.f32 %v2328, %v2415
  %v2417 = vpop.f32.mrf.mxu0
  %2418 = vmatprep.mubr.bf16.mxu0 0
  %2419 = vmatmul.mubr.bf16.gmra.mxu0 %v2314
  %v2420 = vpop.f32.mrf.mxu0
  %v2421 = vadd.f32 %v2328, %v2420
  %v2422 = vpop.f32.mrf.mxu0
  %v2423 = vpop.f32.mrf.mxu0
  %v2424 = vadd.f32 %v2328, %v2423
  %v2425 = vpop.f32.mrf.mxu0
  %2426 = vdwg.mxu0
  %v2427 = vxor.u32 %v2365, 2147483648
  %v2428 = vxor.u32 %v2368, 2147483648
  %v2429 = vxor.u32 %v2373, 2147483648
  %v2430 = vxor.u32 %v2376, 2147483648
  %v2431 = vxor.u32 %v2381, 2147483648
  %v2432 = vxor.u32 %v2384, 2147483648
  %v2433 = vxor.u32 %v2389, 2147483648
  %v2434 = vxor.u32 %v2392, 2147483648
  %v2435 = vxor.u32 %v2397, 2147483648
  %v2436 = vxor.u32 %v2400, 2147483648
  %v2437 = vxor.u32 %v2405, 2147483648
  %v2438 = vxor.u32 %v2408, 2147483648
  %v2439 = vxor.u32 %v2413, 2147483648
  %v2440 = vxor.u32 %v2416, 2147483648
  %v2441 = vxor.u32 %v2421, 2147483648
  %v2442 = vxor.u32 %v2424, 2147483648
  %v2443 = vmul.f32 %v2427, 1.442695
  %v2444 = vpow.pop %v2443
  %v2445 = vmul.f32 %v2428, 1.442695
  %v2446 = vpow.pop %v2445
  %v2447 = vmul.f32 %v2429, 1.442695
  %v2448 = vpow.pop %v2447
  %v2449 = vmul.f32 %v2430, 1.442695
  %v2450 = vpow.pop %v2449
  %v2451 = vmul.f32 %v2431, 1.442695
  %v2452 = vpow.pop %v2451
  %v2453 = vmul.f32 %v2432, 1.442695
  %v2454 = vpow.pop %v2453
  %v2455 = vmul.f32 %v2433, 1.442695
  %v2456 = vpow.pop %v2455
  %v2457 = vmul.f32 %v2434, 1.442695
  %v2458 = vpow.pop %v2457
  %v2459 = vmul.f32 %v2435, 1.442695
  %v2460 = vpow.pop %v2459
  %v2461 = vmul.f32 %v2436, 1.442695
  %v2462 = vpow.pop %v2461
  %v2463 = vmul.f32 %v2437, 1.442695
  %v2464 = vpow.pop %v2463
  %v2465 = vmul.f32 %v2438, 1.442695
  %v2466 = vpow.pop %v2465
  %v2467 = vmul.f32 %v2439, 1.442695
  %v2468 = vpow.pop %v2467
  %v2469 = vmul.f32 %v2440, 1.442695
  %v2470 = vpow.pop %v2469
  %v2471 = vmul.f32 %v2441, 1.442695
  %v2472 = vpow.pop %v2471
  %v2473 = vmul.f32 %v2442, 1.442695
  %v2474 = vpow.pop %v2473
  %v2475 = vadd.f32 %v2444, 1.0
  %v2476 = vadd.f32 %v2446, 1.0
  %v2477 = vadd.f32 %v2448, 1.0
  %v2478 = vadd.f32 %v2450, 1.0
  %v2479 = vadd.f32 %v2452, 1.0
  %v2480 = vadd.f32 %v2454, 1.0
  %v2481 = vadd.f32 %v2456, 1.0
  %v2482 = vadd.f32 %v2458, 1.0
  %v2483 = vadd.f32 %v2460, 1.0
  %v2484 = vadd.f32 %v2462, 1.0
  %v2485 = vadd.f32 %v2464, 1.0
  %v2486 = vadd.f32 %v2466, 1.0
  %v2487 = vadd.f32 %v2468, 1.0
  %v2488 = vadd.f32 %v2470, 1.0
  %v2489 = vadd.f32 %v2472, 1.0
  %v2490 = vadd.f32 %v2474, 1.0
  %v2491 = vrcp.pop %v2475
  %v2492 = vmul.f32 1.0, %v2491
  %v2493 = vrcp.pop %v2476
  %v2494 = vmul.f32 1.0, %v2493
  %v2495 = vrcp.pop %v2477
  %v2496 = vmul.f32 1.0, %v2495
  %v2497 = vrcp.pop %v2478
  %v2498 = vmul.f32 1.0, %v2497
  %v2499 = vrcp.pop %v2479
  %v2500 = vmul.f32 1.0, %v2499
  %v2501 = vrcp.pop %v2480
  %v2502 = vmul.f32 1.0, %v2501
  %v2503 = vrcp.pop %v2481
  %v2504 = vmul.f32 1.0, %v2503
  %v2505 = vrcp.pop %v2482
  %v2506 = vmul.f32 1.0, %v2505
  %v2507 = vrcp.pop %v2483
  %v2508 = vmul.f32 1.0, %v2507
  %v2509 = vrcp.pop %v2484
  %v2510 = vmul.f32 1.0, %v2509
  %v2511 = vrcp.pop %v2485
  %v2512 = vmul.f32 1.0, %v2511
  %v2513 = vrcp.pop %v2486
  %v2514 = vmul.f32 1.0, %v2513
  %v2515 = vrcp.pop %v2487
  %v2516 = vmul.f32 1.0, %v2515
  %v2517 = vrcp.pop %v2488
  %v2518 = vmul.f32 1.0, %v2517
  %v2519 = vrcp.pop %v2489
  %v2520 = vmul.f32 1.0, %v2519
  %v2521 = vrcp.pop %v2490
  %v2522 = vmul.f32 1.0, %v2521
  %v2523 = vmul.f32 %v2365, %v2492
  %v2524 = vmul.f32 %v2368, %v2494
  %v2525 = vmul.f32 %v2373, %v2496
  %v2526 = vmul.f32 %v2376, %v2498
  %v2527 = vmul.f32 %v2381, %v2500
  %v2528 = vmul.f32 %v2384, %v2502
  %v2529 = vmul.f32 %v2389, %v2504
  %v2530 = vmul.f32 %v2392, %v2506
  %v2531 = vmul.f32 %v2397, %v2508
  %v2532 = vmul.f32 %v2400, %v2510
  %v2533 = vmul.f32 %v2405, %v2512
  %v2534 = vmul.f32 %v2408, %v2514
  %v2535 = vmul.f32 %v2413, %v2516
  %v2536 = vmul.f32 %v2416, %v2518
  %v2537 = vmul.f32 %v2421, %v2520
  %v2538 = vmul.f32 %v2424, %v2522
  %v2539 = vadd.f32 %v1363, %v2523
  %v2540 = vadd.f32 %v1364, %v2524
  %v2541 = vadd.f32 %v1365, %v2525
  %v2542 = vadd.f32 %v1366, %v2526
  %v2543 = vadd.f32 %v1367, %v2527
  %v2544 = vadd.f32 %v1368, %v2528
  %v2545 = vadd.f32 %v1369, %v2529
  %v2546 = vadd.f32 %v1370, %v2530
  %v2547 = vadd.f32 %v1371, %v2531
  %v2548 = vadd.f32 %v1372, %v2532
  %v2549 = vadd.f32 %v1373, %v2533
  %v2550 = vadd.f32 %v1374, %v2534
  %v2551 = vadd.f32 %v1375, %v2535
  %v2552 = vadd.f32 %v1376, %v2536
  %v2553 = vadd.f32 %v1377, %v2537
  %v2554 = vadd.f32 %v1378, %v2538
  %v2555 = vld [vmem:[%s15] sm:$0xff]
  %v2556 = vld [vmem:[%s15 + $0x8] sm:$0xff]
  %v2557 = vld [vmem:[%s15 + $0x10] sm:$0xff]
  %v2558 = vld [vmem:[%s15 + $0x18] sm:$0xff]
  %v2559 = vld [vmem:[%s15 + $0x20] sm:$0xff]
  %v2560 = vld [vmem:[%s15 + $0x28] sm:$0xff]
  %v2561 = vld [vmem:[%s15 + $0x30] sm:$0xff]
  %v2562 = vld [vmem:[%s15 + $0x38] sm:$0xff]
  %v2563 = vpack.c.bf16 %v2540, %v2539
  %v2564 = vpack.c.bf16 %v2542, %v2541
  %v2565 = vpack.c.bf16 %v2544, %v2543
  %v2566 = vpack.c.bf16 %v2546, %v2545
  %v2567 = vpack.c.bf16 %v2548, %v2547
  %v2568 = vpack.c.bf16 %v2550, %v2549
  %v2569 = vpack.c.bf16 %v2552, %v2551
  %v2570 = vpack.c.bf16 %v2554, %v2553
  %v2571 = vpack.c.bf16 %v2556, %v2555
  %v2572 = vpack.c.bf16 %v2558, %v2557
  %v2573 = vpack.c.bf16 %v2560, %v2559
  %v2574 = vpack.c.bf16 %v2562, %v2561
  %v2576 = vsel %vm1399, %v2563, 0
  %v2579 = vsel %vm1399, %v2564, 0
  %v2582 = vsel %vm1399, %v2565, 0
  %v2585 = vsel %vm1399, %v2566, 0
  %v2588 = vsel %vm1399, %v2567, 0
  %v2591 = vsel %vm1399, %v2568, 0
  %v2594 = vsel %vm1399, %v2569, 0
  %v2597 = vsel %vm1399, %v2570, 0
  %2599 = vmatprep.subr.bf16.mxu0 0
  %2600 = vmatpush1.bf16.msra.mxu0 0
  %2601 = vmatprep.subr.bf16.mxu0 0
  %2602 = vmatpush1.bf16.msra.mxu0 0
  %2603 = vmatprep.subr.bf16.mxu0 0
  %2604 = vmatpush1.bf16.msra.mxu0 0
  %2605 = vmatprep.subr.bf16.mxu0 0
  %2606 = vmatpush1.bf16.msra.mxu0 0
  %2607 = vmatprep.subr.bf16.mxu0 0
  %2608 = vmatpush1.bf16.msra.mxu0 %v2574
  %2609 = vmatprep.subr.bf16.mxu0 0
  %2610 = vmatpush1.bf16.msra.mxu0 %v2573
  %2611 = vmatprep.subr.bf16.mxu0 0
  %2612 = vmatpush1.bf16.msra.mxu0 %v2572
  %2613 = vmatprep.subr.bf16.mxu0 0
  %2614 = vmatpush1.bf16.msra.mxu0 %v2571
  %2615 = vmatprep.subr.bf16.mxu0 0
  %2616 = vmatpush2.bf16.msra.mxu0 0
  %2617 = vmatprep.subr.bf16.mxu0 0
  %2618 = vmatpush2.bf16.msra.mxu0 0
  %2619 = vmatprep.subr.bf16.mxu0 0
  %2620 = vmatpush2.bf16.msra.mxu0 0
  %2621 = vmatprep.subr.bf16.mxu0 0
  %2622 = vmatpush2.bf16.msra.mxu0 0
  %2623 = vmatprep.subr.bf16.mxu0 0
  %2624 = vmatpush2.bf16.msra.mxu0 0
  %2625 = vmatprep.subr.bf16.mxu0 0
  %2626 = vmatpush2.bf16.msra.mxu0 0
  %2627 = vmatprep.subr.bf16.mxu0 0
  %2628 = vmatpush2.bf16.msra.mxu0 0
  %2629 = vmatprep.subr.bf16.mxu0 0
  %2630 = vmatpush2.bf16.msra.mxu0 0
  %2631 = vmatprep.mubr.bf16.mxu0 0
  %2632 = vmatmul.mubr.bf16.gmra.mxu0 %v2576
  %v2633 = vpop.f32.mrf.mxu0
  %v2634 = vadd.f32 0.0, %v2633
  %v2635 = vpop.f32.mrf.mxu0
  %v2636 = vpop.f32.mrf.mxu0
  %v2637 = vadd.f32 0.0, %v2636
  %v2638 = vpop.f32.mrf.mxu0
  %2639 = vmatprep.mubr.bf16.mxu0 0
  %2640 = vmatmul.mubr.bf16.gmra.mxu0 %v2579
  %v2641 = vpop.f32.mrf.mxu0
  %v2642 = vadd.f32 0.0, %v2641
  %v2643 = vpop.f32.mrf.mxu0
  %v2644 = vpop.f32.mrf.mxu0
  %v2645 = vadd.f32 0.0, %v2644
  %v2646 = vpop.f32.mrf.mxu0
  %2647 = vmatprep.mubr.bf16.mxu0 0
  %2648 = vmatmul.mubr.bf16.gmra.mxu0 %v2582
  %v2649 = vpop.f32.mrf.mxu0
  %v2650 = vadd.f32 0.0, %v2649
  %v2651 = vpop.f32.mrf.mxu0
  %v2652 = vpop.f32.mrf.mxu0
  %v2653 = vadd.f32 0.0, %v2652
  %v2654 = vpop.f32.mrf.mxu0
  %2655 = vmatprep.mubr.bf16.mxu0 0
  %2656 = vmatmul.mubr.bf16.gmra.mxu0 %v2585
  %v2657 = vpop.f32.mrf.mxu0
  %v2658 = vadd.f32 0.0, %v2657
  %v2659 = vpop.f32.mrf.mxu0
  %v2660 = vpop.f32.mrf.mxu0
  %v2661 = vadd.f32 0.0, %v2660
  %v2662 = vpop.f32.mrf.mxu0
  %2663 = vmatprep.mubr.bf16.mxu0 0
  %2664 = vmatmul.mubr.bf16.gmra.mxu0 %v2588
  %v2665 = vpop.f32.mrf.mxu0
  %v2666 = vpop.f32.mrf.mxu0
  %v2667 = vpop.f32.mrf.mxu0
  %v2668 = vpop.f32.mrf.mxu0
  %2669 = vmatprep.mubr.bf16.mxu0 0
  %2670 = vmatmul.mubr.bf16.gmra.mxu0 %v2591
  %v2671 = vpop.f32.mrf.mxu0
  %v2672 = vpop.f32.mrf.mxu0
  %v2673 = vpop.f32.mrf.mxu0
  %v2674 = vpop.f32.mrf.mxu0
  %2675 = vmatprep.mubr.bf16.mxu0 0
  %2676 = vmatmul.mubr.bf16.gmra.mxu0 %v2594
  %v2677 = vpop.f32.mrf.mxu0
  %v2678 = vpop.f32.mrf.mxu0
  %v2679 = vpop.f32.mrf.mxu0
  %v2680 = vpop.f32.mrf.mxu0
  %2681 = vmatprep.mubr.bf16.mxu0 0
  %2682 = vmatmul.mubr.bf16.gmra.mxu0 %v2597
  %v2683 = vpop.f32.mrf.mxu0
  %v2684 = vpop.f32.mrf.mxu0
  %v2685 = vpop.f32.mrf.mxu0
  %v2686 = vpop.f32.mrf.mxu0
  %2687 = vdwg.mxu0
  %v2688 = vxor.u32 %v2634, 2147483648
  %v2689 = vxor.u32 %v2637, 2147483648
  %v2690 = vxor.u32 %v2642, 2147483648
  %v2691 = vxor.u32 %v2645, 2147483648
  %v2692 = vxor.u32 %v2650, 2147483648
  %v2693 = vxor.u32 %v2653, 2147483648
  %v2694 = vxor.u32 %v2658, 2147483648
  %v2695 = vxor.u32 %v2661, 2147483648
  %v2696 = vmul.f32 %v2688, 1.442695
  %v2697 = vpow.pop %v2696
  %v2698 = vmul.f32 %v2689, 1.442695
  %v2699 = vpow.pop %v2698
  %v2700 = vmul.f32 %v2690, 1.442695
  %v2701 = vpow.pop %v2700
  %v2702 = vmul.f32 %v2691, 1.442695
  %v2703 = vpow.pop %v2702
  %v2704 = vmul.f32 %v2692, 1.442695
  %v2705 = vpow.pop %v2704
  %v2706 = vmul.f32 %v2693, 1.442695
  %v2707 = vpow.pop %v2706
  %v2708 = vmul.f32 %v2694, 1.442695
  %v2709 = vpow.pop %v2708
  %v2710 = vmul.f32 %v2695, 1.442695
  %v2711 = vpow.pop %v2710
  %v2712 = vadd.f32 %v2697, 1.0
  %v2713 = vadd.f32 %v2699, 1.0
  %v2714 = vadd.f32 %v2701, 1.0
  %v2715 = vadd.f32 %v2703, 1.0
  %v2716 = vadd.f32 %v2705, 1.0
  %v2717 = vadd.f32 %v2707, 1.0
  %v2718 = vadd.f32 %v2709, 1.0
  %v2719 = vadd.f32 %v2711, 1.0
  %v2720 = vrcp.pop %v2712
  %v2721 = vmul.f32 1.0, %v2720
  %v2722 = vrcp.pop %v2713
  %v2723 = vmul.f32 1.0, %v2722
  %v2724 = vrcp.pop %v2714
  %v2725 = vmul.f32 1.0, %v2724
  %v2726 = vrcp.pop %v2715
  %v2727 = vmul.f32 1.0, %v2726
  %v2728 = vrcp.pop %v2716
  %v2729 = vmul.f32 1.0, %v2728
  %v2730 = vrcp.pop %v2717
  %v2731 = vmul.f32 1.0, %v2730
  %v2732 = vrcp.pop %v2718
  %v2733 = vmul.f32 1.0, %v2732
  %v2734 = vrcp.pop %v2719
  %v2735 = vmul.f32 1.0, %v2734
  %v2736 = vadd.f32 %v2075, 0.0
  %v2737 = vadd.f32 %v2076, 0.0
  %v2738 = vadd.f32 %v2077, 0.0
  %v2739 = vadd.f32 %v2078, 0.0
  %v2740 = vadd.f32 %v2079, 0.0
  %v2741 = vadd.f32 %v2080, 0.0
  %v2742 = vadd.f32 %v2081, 0.0
  %v2743 = vadd.f32 %v2082, 0.0
  %v2744 = vmul.f32 %v2736, %v2721
  %v2745 = vmul.f32 %v2737, %v2723
  %v2746 = vmul.f32 %v2738, %v2725
  %v2747 = vmul.f32 %v2739, %v2727
  %v2748 = vmul.f32 %v2740, %v2729
  %v2749 = vmul.f32 %v2741, %v2731
  %v2750 = vmul.f32 %v2742, %v2733
  %v2751 = vmul.f32 %v2743, %v2735
  %v2752 = vadd.f32 %v2131, 0.0
  %v2753 = vadd.f32 %v2132, 0.0
  %v2754 = vadd.f32 %v2133, 0.0
  %v2755 = vadd.f32 %v2134, 0.0
  %v2756 = vadd.f32 %v2135, 0.0
  %v2757 = vadd.f32 %v2136, 0.0
  %v2758 = vadd.f32 %v2137, 0.0
  %v2759 = vadd.f32 %v2138, 0.0
  %2768 = vrot.lane.b32.xlu0 %v2721, 32
  %v2769 = vpop.permute.xlu0 %2768
  %2770 = vrot.lane.b32.xlu0 %v2723, 32
  %v2771 = vpop.permute.xlu0 %2770
  %2772 = vrot.lane.b32.xlu0 %v2725, 32
  %v2773 = vpop.permute.xlu0 %2772
  %2774 = vrot.lane.b32.xlu0 %v2727, 32
  %v2775 = vpop.permute.xlu0 %2774
  %2776 = vrot.lane.b32.xlu0 %v2729, 32
  %v2777 = vpop.permute.xlu0 %2776
  %2778 = vrot.lane.b32.xlu0 %v2731, 32
  %v2779 = vpop.permute.xlu0 %2778
  %2780 = vrot.lane.b32.xlu0 %v2733, 32
  %v2781 = vpop.permute.xlu0 %2780
  %2782 = vrot.lane.b32.xlu0 %v2735, 32
  %v2783 = vpop.permute.xlu0 %2782
  %v2792 = vmul.f32 %v2752, %v2769
  %v2793 = vmul.f32 %v2753, %v2771
  %v2794 = vmul.f32 %v2754, %v2773
  %v2795 = vmul.f32 %v2755, %v2775
  %v2796 = vmul.f32 %v2756, %v2777
  %v2797 = vmul.f32 %v2757, %v2779
  %v2798 = vmul.f32 %v2758, %v2781
  %v2799 = vmul.f32 %v2759, %v2783
  %v2800 = vadd.f32 %v2187, 0.0
  %v2801 = vadd.f32 %v2188, 0.0
  %v2802 = vadd.f32 %v2189, 0.0
  %v2803 = vadd.f32 %v2190, 0.0
  %v2804 = vadd.f32 %v2191, 0.0
  %v2805 = vadd.f32 %v2192, 0.0
  %v2806 = vadd.f32 %v2193, 0.0
  %v2807 = vadd.f32 %v2194, 0.0
  %2808 = vrot.lane.b32.xlu0 %v2721, 64
  %v2809 = vpop.permute.xlu0 %2808
  %2810 = vrot.lane.b32.xlu0 %v2723, 64
  %v2811 = vpop.permute.xlu0 %2810
  %2812 = vrot.lane.b32.xlu0 %v2725, 64
  %v2813 = vpop.permute.xlu0 %2812
  %2814 = vrot.lane.b32.xlu0 %v2727, 64
  %v2815 = vpop.permute.xlu0 %2814
  %2816 = vrot.lane.b32.xlu0 %v2729, 64
  %v2817 = vpop.permute.xlu0 %2816
  %2818 = vrot.lane.b32.xlu0 %v2731, 64
  %v2819 = vpop.permute.xlu0 %2818
  %2820 = vrot.lane.b32.xlu0 %v2733, 64
  %v2821 = vpop.permute.xlu0 %2820
  %2822 = vrot.lane.b32.xlu0 %v2735, 64
  %v2823 = vpop.permute.xlu0 %2822
  %v2832 = vmul.f32 %v2800, %v2809
  %v2833 = vmul.f32 %v2801, %v2811
  %v2834 = vmul.f32 %v2802, %v2813
  %v2835 = vmul.f32 %v2803, %v2815
  %v2836 = vmul.f32 %v2804, %v2817
  %v2837 = vmul.f32 %v2805, %v2819
  %v2838 = vmul.f32 %v2806, %v2821
  %v2839 = vmul.f32 %v2807, %v2823
  %s2840 = scalar_lea.vmem %s14, 64
  %v2841 = vld [vmem:[%s2840] sm:$0xff]
  %v2842 = vld [vmem:[%s2840 + $0x8] sm:$0xff]
  %v2843 = vld [vmem:[%s2840 + $0x10] sm:$0xff]
  %v2844 = vld [vmem:[%s2840 + $0x18] sm:$0xff]
  %v2845 = vld [vmem:[%s2840 + $0x20] sm:$0xff]
  %v2846 = vld [vmem:[%s2840 + $0x28] sm:$0xff]
  %v2847 = vld [vmem:[%s2840 + $0x30] sm:$0xff]
  %v2848 = vld [vmem:[%s2840 + $0x38] sm:$0xff]
  %v2849 = vpack.c.bf16 %v2842, %v2841
  %v2850 = vpack.c.bf16 %v2844, %v2843
  %v2851 = vpack.c.bf16 %v2846, %v2845
  %v2852 = vpack.c.bf16 %v2848, %v2847
  %2853 = vmatprep.subr.bf16.mxu0 0
  %2854 = vmatpush1.bf16.msra.mxu0 0
  %2855 = vmatprep.subr.bf16.mxu0 0
  %2856 = vmatpush1.bf16.msra.mxu0 0
  %2857 = vmatprep.subr.bf16.mxu0 0
  %2858 = vmatpush1.bf16.msra.mxu0 0
  %2859 = vmatprep.subr.bf16.mxu0 0
  %2860 = vmatpush1.bf16.msra.mxu0 0
  %2861 = vmatprep.subr.bf16.mxu0 0
  %2862 = vmatpush1.bf16.msra.mxu0 %v2852
  %2863 = vmatprep.subr.bf16.mxu0 0
  %2864 = vmatpush1.bf16.msra.mxu0 %v2851
  %2865 = vmatprep.subr.bf16.mxu0 0
  %2866 = vmatpush1.bf16.msra.mxu0 %v2850
  %2867 = vmatprep.subr.bf16.mxu0 0
  %2868 = vmatpush1.bf16.msra.mxu0 %v2849
  %2869 = vmatprep.subr.bf16.mxu0 0
  %2870 = vmatpush2.bf16.msra.mxu0 0
  %2871 = vmatprep.subr.bf16.mxu0 0
  %2872 = vmatpush2.bf16.msra.mxu0 0
  %2873 = vmatprep.subr.bf16.mxu0 0
  %2874 = vmatpush2.bf16.msra.mxu0 0
  %2875 = vmatprep.subr.bf16.mxu0 0
  %2876 = vmatpush2.bf16.msra.mxu0 0
  %2877 = vmatprep.subr.bf16.mxu0 0
  %2878 = vmatpush2.bf16.msra.mxu0 0
  %2879 = vmatprep.subr.bf16.mxu0 0
  %2880 = vmatpush2.bf16.msra.mxu0 0
  %2881 = vmatprep.subr.bf16.mxu0 0
  %2882 = vmatpush2.bf16.msra.mxu0 0
  %2883 = vmatprep.subr.bf16.mxu0 0
  %2884 = vmatpush2.bf16.msra.mxu0 0
  %2885 = vmatprep.mubr.bf16.mxu0 0
  %2886 = vmatmul.mubr.bf16.gmra.mxu0 %v2576
  %v2887 = vpop.f32.mrf.mxu0
  %v2888 = vadd.f32 0.0, %v2887
  %v2889 = vpop.f32.mrf.mxu0
  %v2890 = vpop.f32.mrf.mxu0
  %v2891 = vadd.f32 0.0, %v2890
  %v2892 = vpop.f32.mrf.mxu0
  %2893 = vmatprep.mubr.bf16.mxu0 0
  %2894 = vmatmul.mubr.bf16.gmra.mxu0 %v2579
  %v2895 = vpop.f32.mrf.mxu0
  %v2896 = vadd.f32 0.0, %v2895
  %v2897 = vpop.f32.mrf.mxu0
  %v2898 = vpop.f32.mrf.mxu0
  %v2899 = vadd.f32 0.0, %v2898
  %v2900 = vpop.f32.mrf.mxu0
  %2901 = vmatprep.mubr.bf16.mxu0 0
  %2902 = vmatmul.mubr.bf16.gmra.mxu0 %v2582
  %v2903 = vpop.f32.mrf.mxu0
  %v2904 = vadd.f32 0.0, %v2903
  %v2905 = vpop.f32.mrf.mxu0
  %v2906 = vpop.f32.mrf.mxu0
  %v2907 = vadd.f32 0.0, %v2906
  %v2908 = vpop.f32.mrf.mxu0
  %2909 = vmatprep.mubr.bf16.mxu0 0
  %2910 = vmatmul.mubr.bf16.gmra.mxu0 %v2585
  %v2911 = vpop.f32.mrf.mxu0
  %v2912 = vadd.f32 0.0, %v2911
  %v2913 = vpop.f32.mrf.mxu0
  %v2914 = vpop.f32.mrf.mxu0
  %v2915 = vadd.f32 0.0, %v2914
  %v2916 = vpop.f32.mrf.mxu0
  %2917 = vmatprep.mubr.bf16.mxu0 0
  %2918 = vmatmul.mubr.bf16.gmra.mxu0 %v2588
  %v2919 = vpop.f32.mrf.mxu0
  %v2920 = vadd.f32 0.0, %v2919
  %v2921 = vpop.f32.mrf.mxu0
  %v2922 = vpop.f32.mrf.mxu0
  %v2923 = vadd.f32 0.0, %v2922
  %v2924 = vpop.f32.mrf.mxu0
  %2925 = vmatprep.mubr.bf16.mxu0 0
  %2926 = vmatmul.mubr.bf16.gmra.mxu0 %v2591
  %v2927 = vpop.f32.mrf.mxu0
  %v2928 = vadd.f32 0.0, %v2927
  %v2929 = vpop.f32.mrf.mxu0
  %v2930 = vpop.f32.mrf.mxu0
  %v2931 = vadd.f32 0.0, %v2930
  %v2932 = vpop.f32.mrf.mxu0
  %2933 = vmatprep.mubr.bf16.mxu0 0
  %2934 = vmatmul.mubr.bf16.gmra.mxu0 %v2594
  %v2935 = vpop.f32.mrf.mxu0
  %v2936 = vadd.f32 0.0, %v2935
  %v2937 = vpop.f32.mrf.mxu0
  %v2938 = vpop.f32.mrf.mxu0
  %v2939 = vadd.f32 0.0, %v2938
  %v2940 = vpop.f32.mrf.mxu0
  %2941 = vmatprep.mubr.bf16.mxu0 0
  %2942 = vmatmul.mubr.bf16.gmra.mxu0 %v2597
  %v2943 = vpop.f32.mrf.mxu0
  %v2944 = vadd.f32 0.0, %v2943
  %v2945 = vpop.f32.mrf.mxu0
  %v2946 = vpop.f32.mrf.mxu0
  %v2947 = vadd.f32 0.0, %v2946
  %v2948 = vpop.f32.mrf.mxu0
  %2949 = vdwg.mxu0
  %v2950 = vxor.u32 %v2888, 2147483648
  %v2951 = vxor.u32 %v2891, 2147483648
  %v2952 = vxor.u32 %v2896, 2147483648
  %v2953 = vxor.u32 %v2899, 2147483648
  %v2954 = vxor.u32 %v2904, 2147483648
  %v2955 = vxor.u32 %v2907, 2147483648
  %v2956 = vxor.u32 %v2912, 2147483648
  %v2957 = vxor.u32 %v2915, 2147483648
  %v2958 = vxor.u32 %v2920, 2147483648
  %v2959 = vxor.u32 %v2923, 2147483648
  %v2960 = vxor.u32 %v2928, 2147483648
  %v2961 = vxor.u32 %v2931, 2147483648
  %v2962 = vxor.u32 %v2936, 2147483648
  %v2963 = vxor.u32 %v2939, 2147483648
  %v2964 = vxor.u32 %v2944, 2147483648
  %v2965 = vxor.u32 %v2947, 2147483648
  %v2966 = vmul.f32 %v2950, 1.442695
  %v2967 = vpow.pop %v2966
  %v2968 = vmul.f32 %v2951, 1.442695
  %v2969 = vpow.pop %v2968
  %v2970 = vmul.f32 %v2952, 1.442695
  %v2971 = vpow.pop %v2970
  %v2972 = vmul.f32 %v2953, 1.442695
  %v2973 = vpow.pop %v2972
  %v2974 = vmul.f32 %v2954, 1.442695
  %v2975 = vpow.pop %v2974
  %v2976 = vmul.f32 %v2955, 1.442695
  %v2977 = vpow.pop %v2976
  %v2978 = vmul.f32 %v2956, 1.442695
  %v2979 = vpow.pop %v2978
  %v2980 = vmul.f32 %v2957, 1.442695
  %v2981 = vpow.pop %v2980
  %v2982 = vmul.f32 %v2958, 1.442695
  %v2983 = vpow.pop %v2982
  %v2984 = vmul.f32 %v2959, 1.442695
  %v2985 = vpow.pop %v2984
  %v2986 = vmul.f32 %v2960, 1.442695
  %v2987 = vpow.pop %v2986
  %v2988 = vmul.f32 %v2961, 1.442695
  %v2989 = vpow.pop %v2988
  %v2990 = vmul.f32 %v2962, 1.442695
  %v2991 = vpow.pop %v2990
  %v2992 = vmul.f32 %v2963, 1.442695
  %v2993 = vpow.pop %v2992
  %v2994 = vmul.f32 %v2964, 1.442695
  %v2995 = vpow.pop %v2994
  %v2996 = vmul.f32 %v2965, 1.442695
  %v2997 = vpow.pop %v2996
  %v2998 = vadd.f32 %v2967, 1.0
  %v2999 = vadd.f32 %v2969, 1.0
  %v3000 = vadd.f32 %v2971, 1.0
  %v3001 = vadd.f32 %v2973, 1.0
  %v3002 = vadd.f32 %v2975, 1.0
  %v3003 = vadd.f32 %v2977, 1.0
  %v3004 = vadd.f32 %v2979, 1.0
  %v3005 = vadd.f32 %v2981, 1.0
  %v3006 = vadd.f32 %v2983, 1.0
  %v3007 = vadd.f32 %v2985, 1.0
  %v3008 = vadd.f32 %v2987, 1.0
  %v3009 = vadd.f32 %v2989, 1.0
  %v3010 = vadd.f32 %v2991, 1.0
  %v3011 = vadd.f32 %v2993, 1.0
  %v3012 = vadd.f32 %v2995, 1.0
  %v3013 = vadd.f32 %v2997, 1.0
  %v3014 = vrcp.pop %v2998
  %v3015 = vmul.f32 1.0, %v3014
  %v3016 = vrcp.pop %v2999
  %v3017 = vmul.f32 1.0, %v3016
  %v3018 = vrcp.pop %v3000
  %v3019 = vmul.f32 1.0, %v3018
  %v3020 = vrcp.pop %v3001
  %v3021 = vmul.f32 1.0, %v3020
  %v3022 = vrcp.pop %v3002
  %v3023 = vmul.f32 1.0, %v3022
  %v3024 = vrcp.pop %v3003
  %v3025 = vmul.f32 1.0, %v3024
  %v3026 = vrcp.pop %v3004
  %v3027 = vmul.f32 1.0, %v3026
  %v3028 = vrcp.pop %v3005
  %v3029 = vmul.f32 1.0, %v3028
  %v3030 = vrcp.pop %v3006
  %v3031 = vmul.f32 1.0, %v3030
  %v3032 = vrcp.pop %v3007
  %v3033 = vmul.f32 1.0, %v3032
  %v3034 = vrcp.pop %v3008
  %v3035 = vmul.f32 1.0, %v3034
  %v3036 = vrcp.pop %v3009
  %v3037 = vmul.f32 1.0, %v3036
  %v3038 = vrcp.pop %v3010
  %v3039 = vmul.f32 1.0, %v3038
  %v3040 = vrcp.pop %v3011
  %v3041 = vmul.f32 1.0, %v3040
  %v3042 = vrcp.pop %v3012
  %v3043 = vmul.f32 1.0, %v3042
  %v3044 = vrcp.pop %v3013
  %v3045 = vmul.f32 1.0, %v3044
  %v3046 = vmul.f32 %v3015, %v430
  %v3047 = vmul.f32 %v3017, %v435
  %v3048 = vmul.f32 %v3019, %v440
  %v3049 = vmul.f32 %v3021, %v445
  %v3050 = vmul.f32 %v3023, %v450
  %v3051 = vmul.f32 %v3025, %v455
  %v3052 = vmul.f32 %v3027, %v460
  %v3053 = vmul.f32 %v3029, %v465
  %v3054 = vmul.f32 %v3031, %v470
  %v3055 = vmul.f32 %v3033, %v475
  %v3056 = vmul.f32 %v3035, %v480
  %v3057 = vmul.f32 %v3037, %v485
  %v3058 = vmul.f32 %v3039, %v490
  %v3059 = vmul.f32 %v3041, %v495
  %v3060 = vmul.f32 %v3043, %v500
  %v3061 = vmul.f32 %v3045, %v505
  %v3062 = vmul.f32 %v3015, %v609
  %v3063 = vmul.f32 %v3017, %v613
  %v3064 = vmul.f32 %v3019, %v617
  %v3065 = vmul.f32 %v3021, %v621
  %v3066 = vmul.f32 %v3023, %v625
  %v3067 = vmul.f32 %v3025, %v629
  %v3068 = vmul.f32 %v3027, %v633
  %v3069 = vmul.f32 %v3029, %v637
  %v3070 = vmul.f32 %v3031, %v641
  %v3071 = vmul.f32 %v3033, %v645
  %v3072 = vmul.f32 %v3035, %v649
  %v3073 = vmul.f32 %v3037, %v653
  %v3074 = vmul.f32 %v3039, %v657
  %v3075 = vmul.f32 %v3041, %v661
  %v3076 = vmul.f32 %v3043, %v665
  %v3077 = vmul.f32 %v3045, %v669
  %v3078 = vmul.f32 %v3015, %v773
  %v3079 = vmul.f32 %v3017, %v777
  %v3080 = vmul.f32 %v3019, %v781
  %v3081 = vmul.f32 %v3021, %v785
  %v3082 = vmul.f32 %v3023, %v789
  %v3083 = vmul.f32 %v3025, %v793
  %v3084 = vmul.f32 %v3027, %v797
  %v3085 = vmul.f32 %v3029, %v801
  %v3086 = vmul.f32 %v3031, %v805
  %v3087 = vmul.f32 %v3033, %v809
  %v3088 = vmul.f32 %v3035, %v813
  %v3089 = vmul.f32 %v3037, %v817
  %v3090 = vmul.f32 %v3039, %v821
  %v3091 = vmul.f32 %v3041, %v825
  %v3092 = vmul.f32 %v3043, %v829
  %v3093 = vmul.f32 %v3045, %v833
  %3110 = vrot.lane.b32.xlu0 %v3062, 32
  %v3111 = vpop.permute.xlu0 %3110
  %3112 = vrot.lane.b32.xlu0 %v3063, 32
  %v3113 = vpop.permute.xlu0 %3112
  %3114 = vrot.lane.b32.xlu0 %v3064, 32
  %v3115 = vpop.permute.xlu0 %3114
  %3116 = vrot.lane.b32.xlu0 %v3065, 32
  %v3117 = vpop.permute.xlu0 %3116
  %3118 = vrot.lane.b32.xlu0 %v3066, 32
  %v3119 = vpop.permute.xlu0 %3118
  %3120 = vrot.lane.b32.xlu0 %v3067, 32
  %v3121 = vpop.permute.xlu0 %3120
  %3122 = vrot.lane.b32.xlu0 %v3068, 32
  %v3123 = vpop.permute.xlu0 %3122
  %3124 = vrot.lane.b32.xlu0 %v3069, 32
  %v3125 = vpop.permute.xlu0 %3124
  %3126 = vrot.lane.b32.xlu0 %v3070, 32
  %v3127 = vpop.permute.xlu0 %3126
  %3128 = vrot.lane.b32.xlu0 %v3071, 32
  %v3129 = vpop.permute.xlu0 %3128
  %3130 = vrot.lane.b32.xlu0 %v3072, 32
  %v3131 = vpop.permute.xlu0 %3130
  %3132 = vrot.lane.b32.xlu0 %v3073, 32
  %v3133 = vpop.permute.xlu0 %3132
  %3134 = vrot.lane.b32.xlu0 %v3074, 32
  %v3135 = vpop.permute.xlu0 %3134
  %3136 = vrot.lane.b32.xlu0 %v3075, 32
  %v3137 = vpop.permute.xlu0 %3136
  %3138 = vrot.lane.b32.xlu0 %v3076, 32
  %v3139 = vpop.permute.xlu0 %3138
  %3140 = vrot.lane.b32.xlu0 %v3077, 32
  %v3141 = vpop.permute.xlu0 %3140
  %3174 = vrot.lane.b32.xlu0 %v3078, 64
  %v3175 = vpop.permute.xlu0 %3174
  %3176 = vrot.lane.b32.xlu0 %v3079, 64
  %v3177 = vpop.permute.xlu0 %3176
  %3178 = vrot.lane.b32.xlu0 %v3080, 64
  %v3179 = vpop.permute.xlu0 %3178
  %3180 = vrot.lane.b32.xlu0 %v3081, 64
  %v3181 = vpop.permute.xlu0 %3180
  %3182 = vrot.lane.b32.xlu0 %v3082, 64
  %v3183 = vpop.permute.xlu0 %3182
  %3184 = vrot.lane.b32.xlu0 %v3083, 64
  %v3185 = vpop.permute.xlu0 %3184
  %3186 = vrot.lane.b32.xlu0 %v3084, 64
  %v3187 = vpop.permute.xlu0 %3186
  %3188 = vrot.lane.b32.xlu0 %v3085, 64
  %v3189 = vpop.permute.xlu0 %3188
  %3190 = vrot.lane.b32.xlu0 %v3086, 64
  %v3191 = vpop.permute.xlu0 %3190
  %3192 = vrot.lane.b32.xlu0 %v3087, 64
  %v3193 = vpop.permute.xlu0 %3192
  %3194 = vrot.lane.b32.xlu0 %v3088, 64
  %v3195 = vpop.permute.xlu0 %3194
  %3196 = vrot.lane.b32.xlu0 %v3089, 64
  %v3197 = vpop.permute.xlu0 %3196
  %3198 = vrot.lane.b32.xlu0 %v3090, 64
  %v3199 = vpop.permute.xlu0 %3198
  %3200 = vrot.lane.b32.xlu0 %v3091, 64
  %v3201 = vpop.permute.xlu0 %3200
  %3202 = vrot.lane.b32.xlu0 %v3092, 64
  %v3203 = vpop.permute.xlu0 %3202
  %3204 = vrot.lane.b32.xlu0 %v3093, 64
  %v3205 = vpop.permute.xlu0 %3204
  %3238 = vrot.lane.b32.xlu0 %v3015, 96
  %v3239 = vpop.permute.xlu0 %3238
  %3240 = vrot.lane.b32.xlu0 %v3017, 96
  %v3241 = vpop.permute.xlu0 %3240
  %3242 = vrot.lane.b32.xlu0 %v3019, 96
  %v3243 = vpop.permute.xlu0 %3242
  %3244 = vrot.lane.b32.xlu0 %v3021, 96
  %v3245 = vpop.permute.xlu0 %3244
  %3246 = vrot.lane.b32.xlu0 %v3023, 96
  %v3247 = vpop.permute.xlu0 %3246
  %3248 = vrot.lane.b32.xlu0 %v3025, 96
  %v3249 = vpop.permute.xlu0 %3248
  %3250 = vrot.lane.b32.xlu0 %v3027, 96
  %v3251 = vpop.permute.xlu0 %3250
  %3252 = vrot.lane.b32.xlu0 %v3029, 96
  %v3253 = vpop.permute.xlu0 %3252
  %3254 = vrot.lane.b32.xlu0 %v3031, 96
  %v3255 = vpop.permute.xlu0 %3254
  %3256 = vrot.lane.b32.xlu0 %v3033, 96
  %v3257 = vpop.permute.xlu0 %3256
  %3258 = vrot.lane.b32.xlu0 %v3035, 96
  %v3259 = vpop.permute.xlu0 %3258
  %3260 = vrot.lane.b32.xlu0 %v3037, 96
  %v3261 = vpop.permute.xlu0 %3260
  %3262 = vrot.lane.b32.xlu0 %v3039, 96
  %v3263 = vpop.permute.xlu0 %3262
  %3264 = vrot.lane.b32.xlu0 %v3041, 96
  %v3265 = vpop.permute.xlu0 %3264
  %3266 = vrot.lane.b32.xlu0 %v3043, 96
  %v3267 = vpop.permute.xlu0 %3266
  %3268 = vrot.lane.b32.xlu0 %v3045, 96
  %v3269 = vpop.permute.xlu0 %3268
  %v3286 = vsel %vm322, %v3046, %v3111
  %v3287 = vsel %vm322, %v3047, %v3113
  %v3288 = vsel %vm322, %v3048, %v3115
  %v3289 = vsel %vm322, %v3049, %v3117
  %v3290 = vsel %vm322, %v3050, %v3119
  %v3291 = vsel %vm322, %v3051, %v3121
  %v3292 = vsel %vm322, %v3052, %v3123
  %v3293 = vsel %vm322, %v3053, %v3125
  %v3294 = vsel %vm322, %v3054, %v3127
  %v3295 = vsel %vm322, %v3055, %v3129
  %v3296 = vsel %vm322, %v3056, %v3131
  %v3297 = vsel %vm322, %v3057, %v3133
  %v3298 = vsel %vm322, %v3058, %v3135
  %v3299 = vsel %vm322, %v3059, %v3137
  %v3300 = vsel %vm322, %v3060, %v3139
  %v3301 = vsel %vm322, %v3061, %v3141
  %v3302 = vsel %vm1399, %v3286, %v3175
  %v3303 = vsel %vm1399, %v3287, %v3177
  %v3304 = vsel %vm1399, %v3288, %v3179
  %v3305 = vsel %vm1399, %v3289, %v3181
  %v3306 = vsel %vm1399, %v3290, %v3183
  %v3307 = vsel %vm1399, %v3291, %v3185
  %v3308 = vsel %vm1399, %v3292, %v3187
  %v3309 = vsel %vm1399, %v3293, %v3189
  %v3310 = vsel %vm1399, %v3294, %v3191
  %v3311 = vsel %vm1399, %v3295, %v3193
  %v3312 = vsel %vm1399, %v3296, %v3195
  %v3313 = vsel %vm1399, %v3297, %v3197
  %v3314 = vsel %vm1399, %v3298, %v3199
  %v3315 = vsel %vm1399, %v3299, %v3201
  %v3316 = vsel %vm1399, %v3300, %v3203
  %v3317 = vsel %vm1399, %v3301, %v3205
  %v3318 = vsel %vm1889, %v3302, %v3239
  %v3319 = vsel %vm1889, %v3303, %v3241
  %v3320 = vsel %vm1889, %v3304, %v3243
  %v3321 = vsel %vm1889, %v3305, %v3245
  %v3322 = vsel %vm1889, %v3306, %v3247
  %v3323 = vsel %vm1889, %v3307, %v3249
  %v3324 = vsel %vm1889, %v3308, %v3251
  %v3325 = vsel %vm1889, %v3309, %v3253
  %v3326 = vsel %vm1889, %v3310, %v3255
  %v3327 = vsel %vm1889, %v3311, %v3257
  %v3328 = vsel %vm1889, %v3312, %v3259
  %v3329 = vsel %vm1889, %v3313, %v3261
  %v3330 = vsel %vm1889, %v3314, %v3263
  %v3331 = vsel %vm1889, %v3315, %v3265
  %v3332 = vsel %vm1889, %v3316, %v3267
  %v3333 = vsel %vm1889, %v3317, %v3269
  %v3334 = vpack.c.bf16 %v3319, %v3318
  %v3335 = vpack.c.bf16 %v3321, %v3320
  %v3336 = vpack.c.bf16 %v3323, %v3322
  %v3337 = vpack.c.bf16 %v3325, %v3324
  %v3338 = vpack.c.bf16 %v3327, %v3326
  %v3339 = vpack.c.bf16 %v3329, %v3328
  %v3340 = vpack.c.bf16 %v3331, %v3330
  %v3341 = vpack.c.bf16 %v3333, %v3332
  %3342 = vmatprep.subr.bf16.mxu0 %v2570
  %3343 = vmatpush1.bf16.msra.mxu0 %v3341
  %3344 = vmatprep.subr.bf16.mxu0 %v2569
  %3345 = vmatpush1.bf16.msra.mxu0 %v3340
  %3346 = vmatprep.subr.bf16.mxu0 %v2568
  %3347 = vmatpush1.bf16.msra.mxu0 %v3339
  %3348 = vmatprep.subr.bf16.mxu0 %v2567
  %3349 = vmatpush1.bf16.msra.mxu0 %v3338
  %3350 = vmatprep.subr.bf16.mxu0 %v2566
  %3351 = vmatpush1.bf16.msra.mxu0 %v3337
  %3352 = vmatprep.subr.bf16.mxu0 %v2565
  %3353 = vmatpush1.bf16.msra.mxu0 %v3336
  %3354 = vmatprep.subr.bf16.mxu0 %v2564
  %3355 = vmatpush1.bf16.msra.mxu0 %v3335
  %3356 = vmatprep.subr.bf16.mxu0 %v2563
  %3357 = vmatpush1.bf16.msra.mxu0 %v3334
  %3358 = vmatprep.subr.bf16.mxu0 0
  %3359 = vmatpush2.bf16.msra.mxu0 0
  %3360 = vmatprep.subr.bf16.mxu0 0
  %3361 = vmatpush2.bf16.msra.mxu0 0
  %3362 = vmatprep.subr.bf16.mxu0 0
  %3363 = vmatpush2.bf16.msra.mxu0 0
  %3364 = vmatprep.subr.bf16.mxu0 0
  %3365 = vmatpush2.bf16.msra.mxu0 0
  %3366 = vmatprep.subr.bf16.mxu0 0
  %3367 = vmatpush2.bf16.msra.mxu0 0
  %3368 = vmatprep.subr.bf16.mxu0 0
  %3369 = vmatpush2.bf16.msra.mxu0 0
  %3370 = vmatprep.subr.bf16.mxu0 0
  %3371 = vmatpush2.bf16.msra.mxu0 0
  %3372 = vmatprep.subr.bf16.mxu0 0
  %3373 = vmatpush2.bf16.msra.mxu0 0
  %3374 = vmatprep.mubr.bf16.mxu0 0
  %3375 = vmatmul.mubr.bf16.gmra.mxu0 %v1906
  %v3376 = vpop.f32.mrf.mxu0
  %v3377 = vadd.f32 0.0, %v3376
  %v3378 = vpop.f32.mrf.mxu0
  %v3379 = vadd.f32 0.0, %v3378
  %v3380 = vpop.f32.mrf.mxu0
  %v3381 = vadd.f32 0.0, %v3380
  %v3382 = vpop.f32.mrf.mxu0
  %v3383 = vadd.f32 0.0, %v3382
  %3384 = vmatprep.mubr.bf16.mxu0 0
  %3385 = vmatmul.mubr.bf16.gmra.mxu0 %v1907
  %v3386 = vpop.f32.mrf.mxu0
  %v3387 = vadd.f32 0.0, %v3386
  %v3388 = vpop.f32.mrf.mxu0
  %v3389 = vadd.f32 0.0, %v3388
  %v3390 = vpop.f32.mrf.mxu0
  %v3391 = vadd.f32 0.0, %v3390
  %v3392 = vpop.f32.mrf.mxu0
  %v3393 = vadd.f32 0.0, %v3392
  %3394 = vmatprep.mubr.bf16.mxu0 0
  %3395 = vmatmul.mubr.bf16.gmra.mxu0 %v1908
  %v3396 = vpop.f32.mrf.mxu0
  %v3397 = vadd.f32 0.0, %v3396
  %v3398 = vpop.f32.mrf.mxu0
  %v3399 = vadd.f32 0.0, %v3398
  %v3400 = vpop.f32.mrf.mxu0
  %v3401 = vadd.f32 0.0, %v3400
  %v3402 = vpop.f32.mrf.mxu0
  %v3403 = vadd.f32 0.0, %v3402
  %3404 = vmatprep.mubr.bf16.mxu0 0
  %3405 = vmatmul.mubr.bf16.gmra.mxu0 %v1909
  %v3406 = vpop.f32.mrf.mxu0
  %v3407 = vadd.f32 0.0, %v3406
  %v3408 = vpop.f32.mrf.mxu0
  %v3409 = vadd.f32 0.0, %v3408
  %v3410 = vpop.f32.mrf.mxu0
  %v3411 = vadd.f32 0.0, %v3410
  %v3412 = vpop.f32.mrf.mxu0
  %v3413 = vadd.f32 0.0, %v3412
  %3414 = vmatprep.mubr.bf16.mxu0 0
  %3415 = vmatmul.mubr.bf16.gmra.mxu0 %v1910
  %v3416 = vpop.f32.mrf.mxu0
  %v3417 = vpop.f32.mrf.mxu0
  %v3418 = vadd.f32 0.0, %v3417
  %v3419 = vpop.f32.mrf.mxu0
  %v3420 = vpop.f32.mrf.mxu0
  %v3421 = vadd.f32 0.0, %v3420
  %3422 = vmatprep.mubr.bf16.mxu0 0
  %3423 = vmatmul.mubr.bf16.gmra.mxu0 %v1911
  %v3424 = vpop.f32.mrf.mxu0
  %v3425 = vpop.f32.mrf.mxu0
  %v3426 = vadd.f32 0.0, %v3425
  %v3427 = vpop.f32.mrf.mxu0
  %v3428 = vpop.f32.mrf.mxu0
  %v3429 = vadd.f32 0.0, %v3428
  %3430 = vmatprep.mubr.bf16.mxu0 0
  %3431 = vmatmul.mubr.bf16.gmra.mxu0 %v1912
  %v3432 = vpop.f32.mrf.mxu0
  %v3433 = vpop.f32.mrf.mxu0
  %v3434 = vadd.f32 0.0, %v3433
  %v3435 = vpop.f32.mrf.mxu0
  %v3436 = vpop.f32.mrf.mxu0
  %v3437 = vadd.f32 0.0, %v3436
  %3438 = vmatprep.mubr.bf16.mxu0 0
  %3439 = vmatmul.mubr.bf16.gmra.mxu0 %v1913
  %v3440 = vpop.f32.mrf.mxu0
  %v3441 = vpop.f32.mrf.mxu0
  %v3442 = vadd.f32 0.0, %v3441
  %v3443 = vpop.f32.mrf.mxu0
  %v3444 = vpop.f32.mrf.mxu0
  %v3445 = vadd.f32 0.0, %v3444
  %3446 = vdwg.mxu0
  %v3447 = vmul.f32 %v430, %v3377
  %v3448 = vmul.f32 %v435, %v3381
  %v3449 = vmul.f32 %v440, %v3387
  %v3450 = vmul.f32 %v445, %v3391
  %v3451 = vmul.f32 %v450, %v3397
  %v3452 = vmul.f32 %v455, %v3401
  %v3453 = vmul.f32 %v460, %v3407
  %v3454 = vmul.f32 %v465, %v3411
  %3463 = vrot.lane.b32.xlu0 %v3447, 32
  %v3464 = vpop.permute.xlu0 %3463
  %3465 = vrot.lane.b32.xlu0 %v3448, 32
  %v3466 = vpop.permute.xlu0 %3465
  %3467 = vrot.lane.b32.xlu0 %v3449, 32
  %v3468 = vpop.permute.xlu0 %3467
  %3469 = vrot.lane.b32.xlu0 %v3450, 32
  %v3470 = vpop.permute.xlu0 %3469
  %3471 = vrot.lane.b32.xlu0 %v3451, 32
  %v3472 = vpop.permute.xlu0 %3471
  %3473 = vrot.lane.b32.xlu0 %v3452, 32
  %v3474 = vpop.permute.xlu0 %3473
  %3475 = vrot.lane.b32.xlu0 %v3453, 32
  %v3476 = vpop.permute.xlu0 %3475
  %3477 = vrot.lane.b32.xlu0 %v3454, 32
  %v3478 = vpop.permute.xlu0 %3477
  %v3487 = vsub.f32 %v3377, %v3464
  %v3488 = vsub.f32 %v3381, %v3466
  %v3489 = vsub.f32 %v3387, %v3468
  %v3490 = vsub.f32 %v3391, %v3470
  %v3491 = vsub.f32 %v3397, %v3472
  %v3492 = vsub.f32 %v3401, %v3474
  %v3493 = vsub.f32 %v3407, %v3476
  %v3494 = vsub.f32 %v3411, %v3478
  %v3495 = vmul.f32 %v3487, 0.01
  %v3496 = vmul.f32 %v3488, 0.01
  %v3497 = vmul.f32 %v3489, 0.01
  %v3498 = vmul.f32 %v3490, 0.01
  %v3499 = vmul.f32 %v3491, 0.01
  %v3500 = vmul.f32 %v3492, 0.01
  %v3501 = vmul.f32 %v3493, 0.01
  %v3502 = vmul.f32 %v3494, 0.01
  %v3503 = vmul.f32 %v609, %v3377
  %v3504 = vmul.f32 %v613, %v3381
  %v3505 = vmul.f32 %v617, %v3387
  %v3506 = vmul.f32 %v621, %v3391
  %v3507 = vmul.f32 %v625, %v3397
  %v3508 = vmul.f32 %v629, %v3401
  %v3509 = vmul.f32 %v633, %v3407
  %v3510 = vmul.f32 %v637, %v3411
  %3519 = vrot.lane.b32.xlu0 %v3503, 64
  %v3520 = vpop.permute.xlu0 %3519
  %3521 = vrot.lane.b32.xlu0 %v3504, 64
  %v3522 = vpop.permute.xlu0 %3521
  %3523 = vrot.lane.b32.xlu0 %v3505, 64
  %v3524 = vpop.permute.xlu0 %3523
  %3525 = vrot.lane.b32.xlu0 %v3506, 64
  %v3526 = vpop.permute.xlu0 %3525
  %3527 = vrot.lane.b32.xlu0 %v3507, 64
  %v3528 = vpop.permute.xlu0 %3527
  %3529 = vrot.lane.b32.xlu0 %v3508, 64
  %v3530 = vpop.permute.xlu0 %3529
  %3531 = vrot.lane.b32.xlu0 %v3509, 64
  %v3532 = vpop.permute.xlu0 %3531
  %3533 = vrot.lane.b32.xlu0 %v3510, 64
  %v3534 = vpop.permute.xlu0 %3533
  %v3543 = vsub.f32 %v3377, %v3520
  %v3544 = vsub.f32 %v3381, %v3522
  %v3545 = vsub.f32 %v3387, %v3524
  %v3546 = vsub.f32 %v3391, %v3526
  %v3547 = vsub.f32 %v3397, %v3528
  %v3548 = vsub.f32 %v3401, %v3530
  %v3549 = vsub.f32 %v3407, %v3532
  %v3550 = vsub.f32 %v3411, %v3534
  %v3551 = vmul.f32 %v3543, 0.01
  %v3552 = vmul.f32 %v3544, 0.01
  %v3553 = vmul.f32 %v3545, 0.01
  %v3554 = vmul.f32 %v3546, 0.01
  %v3555 = vmul.f32 %v3547, 0.01
  %v3556 = vmul.f32 %v3548, 0.01
  %v3557 = vmul.f32 %v3549, 0.01
  %v3558 = vmul.f32 %v3550, 0.01
  %v3559 = vmul.f32 %v773, %v3377
  %v3560 = vmul.f32 %v777, %v3381
  %v3561 = vmul.f32 %v781, %v3387
  %v3562 = vmul.f32 %v785, %v3391
  %v3563 = vmul.f32 %v789, %v3397
  %v3564 = vmul.f32 %v793, %v3401
  %v3565 = vmul.f32 %v797, %v3407
  %v3566 = vmul.f32 %v801, %v3411
  %3575 = vrot.lane.b32.xlu0 %v3559, 96
  %v3576 = vpop.permute.xlu0 %3575
  %3577 = vrot.lane.b32.xlu0 %v3560, 96
  %v3578 = vpop.permute.xlu0 %3577
  %3579 = vrot.lane.b32.xlu0 %v3561, 96
  %v3580 = vpop.permute.xlu0 %3579
  %3581 = vrot.lane.b32.xlu0 %v3562, 96
  %v3582 = vpop.permute.xlu0 %3581
  %3583 = vrot.lane.b32.xlu0 %v3563, 96
  %v3584 = vpop.permute.xlu0 %3583
  %3585 = vrot.lane.b32.xlu0 %v3564, 96
  %v3586 = vpop.permute.xlu0 %3585
  %3587 = vrot.lane.b32.xlu0 %v3565, 96
  %v3588 = vpop.permute.xlu0 %3587
  %3589 = vrot.lane.b32.xlu0 %v3566, 96
  %v3590 = vpop.permute.xlu0 %3589
  %v3599 = vsub.f32 %v3377, %v3576
  %v3600 = vsub.f32 %v3381, %v3578
  %v3601 = vsub.f32 %v3387, %v3580
  %v3602 = vsub.f32 %v3391, %v3582
  %v3603 = vsub.f32 %v3397, %v3584
  %v3604 = vsub.f32 %v3401, %v3586
  %v3605 = vsub.f32 %v3407, %v3588
  %v3606 = vsub.f32 %v3411, %v3590
  %v3607 = vmul.f32 %v3599, 0.01
  %v3608 = vmul.f32 %v3600, 0.01
  %v3609 = vmul.f32 %v3601, 0.01
  %v3610 = vmul.f32 %v3602, 0.01
  %v3611 = vmul.f32 %v3603, 0.01
  %v3612 = vmul.f32 %v3604, 0.01
  %v3613 = vmul.f32 %v3605, 0.01
  %v3614 = vmul.f32 %v3606, 0.01
  %v3615 = vmul.f32 %v3379, 0.01
  %v3616 = vmul.f32 %v3383, 0.01
  %v3617 = vmul.f32 %v3389, 0.01
  %v3618 = vmul.f32 %v3393, 0.01
  %v3619 = vmul.f32 %v3399, 0.01
  %v3620 = vmul.f32 %v3403, 0.01
  %v3621 = vmul.f32 %v3409, 0.01
  %v3622 = vmul.f32 %v3413, 0.01
  %v3623 = vmul.f32 %v3418, 0.01
  %v3624 = vmul.f32 %v3421, 0.01
  %v3625 = vmul.f32 %v3426, 0.01
  %v3626 = vmul.f32 %v3429, 0.01
  %v3627 = vmul.f32 %v3434, 0.01
  %v3628 = vmul.f32 %v3437, 0.01
  %v3629 = vmul.f32 %v3442, 0.01
  %v3630 = vmul.f32 %v3445, 0.01
  %3647 = vrot.lane.b32.xlu0 %v2539, 64
  %v3648 = vpop.permute.xlu0 %3647
  %3649 = vrot.lane.b32.xlu0 %v2540, 64
  %v3650 = vpop.permute.xlu0 %3649
  %3651 = vrot.lane.b32.xlu0 %v2541, 64
  %v3652 = vpop.permute.xlu0 %3651
  %3653 = vrot.lane.b32.xlu0 %v2542, 64
  %v3654 = vpop.permute.xlu0 %3653
  %3655 = vrot.lane.b32.xlu0 %v2543, 64
  %v3656 = vpop.permute.xlu0 %3655
  %3657 = vrot.lane.b32.xlu0 %v2544, 64
  %v3658 = vpop.permute.xlu0 %3657
  %3659 = vrot.lane.b32.xlu0 %v2545, 64
  %v3660 = vpop.permute.xlu0 %3659
  %3661 = vrot.lane.b32.xlu0 %v2546, 64
  %v3662 = vpop.permute.xlu0 %3661
  %3663 = vrot.lane.b32.xlu0 %v2547, 64
  %v3664 = vpop.permute.xlu0 %3663
  %3665 = vrot.lane.b32.xlu0 %v2548, 64
  %v3666 = vpop.permute.xlu0 %3665
  %3667 = vrot.lane.b32.xlu0 %v2549, 64
  %v3668 = vpop.permute.xlu0 %3667
  %3669 = vrot.lane.b32.xlu0 %v2550, 64
  %v3670 = vpop.permute.xlu0 %3669
  %3671 = vrot.lane.b32.xlu0 %v2551, 64
  %v3672 = vpop.permute.xlu0 %3671
  %3673 = vrot.lane.b32.xlu0 %v2552, 64
  %v3674 = vpop.permute.xlu0 %3673
  %3675 = vrot.lane.b32.xlu0 %v2553, 64
  %v3676 = vpop.permute.xlu0 %3675
  %3677 = vrot.lane.b32.xlu0 %v2554, 64
  %v3678 = vpop.permute.xlu0 %3677
  %v3695 = vsel %vm1399, %v3615, %v3648
  %v3696 = vsel %vm1399, %v3616, %v3650
  %v3697 = vsel %vm1399, %v3617, %v3652
  %v3698 = vsel %vm1399, %v3618, %v3654
  %v3699 = vsel %vm1399, %v3619, %v3656
  %v3700 = vsel %vm1399, %v3620, %v3658
  %v3701 = vsel %vm1399, %v3621, %v3660
  %v3702 = vsel %vm1399, %v3622, %v3662
  %v3703 = vsel %vm1399, %v3623, %v3664
  %v3704 = vsel %vm1399, %v3624, %v3666
  %v3705 = vsel %vm1399, %v3625, %v3668
  %v3706 = vsel %vm1399, %v3626, %v3670
  %v3707 = vsel %vm1399, %v3627, %v3672
  %v3708 = vsel %vm1399, %v3628, %v3674
  %v3709 = vsel %vm1399, %v3629, %v3676
  %v3710 = vsel %vm1399, %v3630, %v3678
  %s3711 = scalar_lea.vmem %s16, 128
  %v3712 = vld [vmem:[%s3711] sm:$0xff]
  %v3713 = vld [vmem:[%s3711 + $0x8] sm:$0xff]
  %v3714 = vld [vmem:[%s3711 + $0x10] sm:$0xff]
  %v3715 = vld [vmem:[%s3711 + $0x18] sm:$0xff]
  %v3716 = vld [vmem:[%s3711 + $0x20] sm:$0xff]
  %v3717 = vld [vmem:[%s3711 + $0x28] sm:$0xff]
  %v3718 = vld [vmem:[%s3711 + $0x30] sm:$0xff]
  %v3719 = vld [vmem:[%s3711 + $0x38] sm:$0xff]
  %v3720 = vld [vmem:[%s3711 + $0x40] sm:$0xff]
  %v3721 = vld [vmem:[%s3711 + $0x48] sm:$0xff]
  %v3722 = vld [vmem:[%s3711 + $0x50] sm:$0xff]
  %v3723 = vld [vmem:[%s3711 + $0x58] sm:$0xff]
  %v3724 = vld [vmem:[%s3711 + $0x60] sm:$0xff]
  %v3725 = vld [vmem:[%s3711 + $0x68] sm:$0xff]
  %v3726 = vld [vmem:[%s3711 + $0x70] sm:$0xff]
  %v3727 = vld [vmem:[%s3711 + $0x78] sm:$0xff]
  %v3728 = vpack.c.bf16 %v3696, %v3695
  %v3729 = vpack.c.bf16 %v3698, %v3697
  %v3730 = vpack.c.bf16 %v3700, %v3699
  %v3731 = vpack.c.bf16 %v3702, %v3701
  %v3732 = vpack.c.bf16 %v3704, %v3703
  %v3733 = vpack.c.bf16 %v3706, %v3705
  %v3734 = vpack.c.bf16 %v3708, %v3707
  %v3735 = vpack.c.bf16 %v3710, %v3709
  %v3736 = vpack.c.bf16 %v3713, %v3712
  %v3737 = vpack.c.bf16 %v3715, %v3714
  %v3738 = vpack.c.bf16 %v3717, %v3716
  %v3739 = vpack.c.bf16 %v3719, %v3718
  %v3740 = vpack.c.bf16 %v3721, %v3720
  %v3741 = vpack.c.bf16 %v3723, %v3722
  %v3742 = vpack.c.bf16 %v3725, %v3724
  %v3743 = vpack.c.bf16 %v3727, %v3726
  %s3744 = scalar_lea.vmem %s17, 1
  %v3745 = vld [vmem:[%s3744] sm:$0x1]
  %v3747 = vlaneseq
  %v3748 = vshrl.u32 %v3747, 7
  %v3749 = vsub.s32 0, %v3748
  %v3750 = vrot.slane %v3745, %v3749
  %3752 = vmatprep.subr.bf16.mxu0 0
  %3753 = vmatpush1.bf16.msra.mxu0 %v3743
  %3754 = vmatprep.subr.bf16.mxu0 0
  %3755 = vmatpush1.bf16.msra.mxu0 %v3742
  %3756 = vmatprep.subr.bf16.mxu0 0
  %3757 = vmatpush1.bf16.msra.mxu0 %v3741
  %3758 = vmatprep.subr.bf16.mxu0 0
  %3759 = vmatpush1.bf16.msra.mxu0 %v3740
  %3760 = vmatprep.subr.bf16.mxu0 0
  %3761 = vmatpush1.bf16.msra.mxu0 %v3739
  %3762 = vmatprep.subr.bf16.mxu0 0
  %3763 = vmatpush1.bf16.msra.mxu0 %v3738
  %3764 = vmatprep.subr.bf16.mxu0 0
  %3765 = vmatpush1.bf16.msra.mxu0 %v3737
  %3766 = vmatprep.subr.bf16.mxu0 0
  %3767 = vmatpush1.bf16.msra.mxu0 %v3736
  %3768 = vmatprep.subr.bf16.mxu0 0
  %3769 = vmatpush2.bf16.msra.mxu0 0
  %3770 = vmatprep.subr.bf16.mxu0 0
  %3771 = vmatpush2.bf16.msra.mxu0 0
  %3772 = vmatprep.subr.bf16.mxu0 0
  %3773 = vmatpush2.bf16.msra.mxu0 0
  %3774 = vmatprep.subr.bf16.mxu0 0
  %3775 = vmatpush2.bf16.msra.mxu0 0
  %3776 = vmatprep.subr.bf16.mxu0 0
  %3777 = vmatpush2.bf16.msra.mxu0 0
  %3778 = vmatprep.subr.bf16.mxu0 0
  %3779 = vmatpush2.bf16.msra.mxu0 0
  %3780 = vmatprep.subr.bf16.mxu0 0
  %3781 = vmatpush2.bf16.msra.mxu0 0
  %3782 = vmatprep.subr.bf16.mxu0 0
  %3783 = vmatpush2.bf16.msra.mxu0 0
  %3784 = vmatprep.mubr.bf16.mxu0 0
  %3785 = vmatmul.mubr.bf16.gmra.mxu0 %v3728
  %v3786 = vpop.f32.mrf.mxu0
  %v3787 = vadd.f32 %v3750, %v3786
  %v3788 = vpop.f32.mrf.mxu0
  %v3789 = vpop.f32.mrf.mxu0
  %v3790 = vadd.f32 %v3750, %v3789
  %v3791 = vpop.f32.mrf.mxu0
  %3792 = vmatprep.mubr.bf16.mxu0 0
  %3793 = vmatmul.mubr.bf16.gmra.mxu0 %v3729
  %v3794 = vpop.f32.mrf.mxu0
  %v3795 = vadd.f32 %v3750, %v3794
  %v3796 = vpop.f32.mrf.mxu0
  %v3797 = vpop.f32.mrf.mxu0
  %v3798 = vadd.f32 %v3750, %v3797
  %v3799 = vpop.f32.mrf.mxu0
  %3800 = vmatprep.mubr.bf16.mxu0 0
  %3801 = vmatmul.mubr.bf16.gmra.mxu0 %v3730
  %v3802 = vpop.f32.mrf.mxu0
  %v3803 = vadd.f32 %v3750, %v3802
  %v3804 = vpop.f32.mrf.mxu0
  %v3805 = vpop.f32.mrf.mxu0
  %v3806 = vadd.f32 %v3750, %v3805
  %v3807 = vpop.f32.mrf.mxu0
  %3808 = vmatprep.mubr.bf16.mxu0 0
  %3809 = vmatmul.mubr.bf16.gmra.mxu0 %v3731
  %v3810 = vpop.f32.mrf.mxu0
  %v3811 = vadd.f32 %v3750, %v3810
  %v3812 = vpop.f32.mrf.mxu0
  %v3813 = vpop.f32.mrf.mxu0
  %v3814 = vadd.f32 %v3750, %v3813
  %v3815 = vpop.f32.mrf.mxu0
  %3816 = vmatprep.mubr.bf16.mxu0 0
  %3817 = vmatmul.mubr.bf16.gmra.mxu0 %v3732
  %v3818 = vpop.f32.mrf.mxu0
  %v3819 = vadd.f32 %v3750, %v3818
  %v3820 = vpop.f32.mrf.mxu0
  %v3821 = vpop.f32.mrf.mxu0
  %v3822 = vadd.f32 %v3750, %v3821
  %v3823 = vpop.f32.mrf.mxu0
  %3824 = vmatprep.mubr.bf16.mxu0 0
  %3825 = vmatmul.mubr.bf16.gmra.mxu0 %v3733
  %v3826 = vpop.f32.mrf.mxu0
  %v3827 = vadd.f32 %v3750, %v3826
  %v3828 = vpop.f32.mrf.mxu0
  %v3829 = vpop.f32.mrf.mxu0
  %v3830 = vadd.f32 %v3750, %v3829
  %v3831 = vpop.f32.mrf.mxu0
  %3832 = vmatprep.mubr.bf16.mxu0 0
  %3833 = vmatmul.mubr.bf16.gmra.mxu0 %v3734
  %v3834 = vpop.f32.mrf.mxu0
  %v3835 = vadd.f32 %v3750, %v3834
  %v3836 = vpop.f32.mrf.mxu0
  %v3837 = vpop.f32.mrf.mxu0
  %v3838 = vadd.f32 %v3750, %v3837
  %v3839 = vpop.f32.mrf.mxu0
  %3840 = vmatprep.mubr.bf16.mxu0 0
  %3841 = vmatmul.mubr.bf16.gmra.mxu0 %v3735
  %v3842 = vpop.f32.mrf.mxu0
  %v3843 = vadd.f32 %v3750, %v3842
  %v3844 = vpop.f32.mrf.mxu0
  %v3845 = vpop.f32.mrf.mxu0
  %v3846 = vadd.f32 %v3750, %v3845
  %v3847 = vpop.f32.mrf.mxu0
  %3848 = vdwg.mxu0
  %v3849 = vxor.u32 %v3787, 2147483648
  %v3850 = vxor.u32 %v3790, 2147483648
  %v3851 = vxor.u32 %v3795, 2147483648
  %v3852 = vxor.u32 %v3798, 2147483648
  %v3853 = vxor.u32 %v3803, 2147483648
  %v3854 = vxor.u32 %v3806, 2147483648
  %v3855 = vxor.u32 %v3811, 2147483648
  %v3856 = vxor.u32 %v3814, 2147483648
  %v3857 = vxor.u32 %v3819, 2147483648
  %v3858 = vxor.u32 %v3822, 2147483648
  %v3859 = vxor.u32 %v3827, 2147483648
  %v3860 = vxor.u32 %v3830, 2147483648
  %v3861 = vxor.u32 %v3835, 2147483648
  %v3862 = vxor.u32 %v3838, 2147483648
  %v3863 = vxor.u32 %v3843, 2147483648
  %v3864 = vxor.u32 %v3846, 2147483648
  %v3865 = vmul.f32 %v3849, 1.442695
  %v3866 = vpow.pop %v3865
  %v3867 = vmul.f32 %v3850, 1.442695
  %v3868 = vpow.pop %v3867
  %v3869 = vmul.f32 %v3851, 1.442695
  %v3870 = vpow.pop %v3869
  %v3871 = vmul.f32 %v3852, 1.442695
  %v3872 = vpow.pop %v3871
  %v3873 = vmul.f32 %v3853, 1.442695
  %v3874 = vpow.pop %v3873
  %v3875 = vmul.f32 %v3854, 1.442695
  %v3876 = vpow.pop %v3875
  %v3877 = vmul.f32 %v3855, 1.442695
  %v3878 = vpow.pop %v3877
  %v3879 = vmul.f32 %v3856, 1.442695
  %v3880 = vpow.pop %v3879
  %v3881 = vmul.f32 %v3857, 1.442695
  %v3882 = vpow.pop %v3881
  %v3883 = vmul.f32 %v3858, 1.442695
  %v3884 = vpow.pop %v3883
  %v3885 = vmul.f32 %v3859, 1.442695
  %v3886 = vpow.pop %v3885
  %v3887 = vmul.f32 %v3860, 1.442695
  %v3888 = vpow.pop %v3887
  %v3889 = vmul.f32 %v3861, 1.442695
  %v3890 = vpow.pop %v3889
  %v3891 = vmul.f32 %v3862, 1.442695
  %v3892 = vpow.pop %v3891
  %v3893 = vmul.f32 %v3863, 1.442695
  %v3894 = vpow.pop %v3893
  %v3895 = vmul.f32 %v3864, 1.442695
  %v3896 = vpow.pop %v3895
  %v3897 = vadd.f32 %v3866, 1.0
  %v3898 = vadd.f32 %v3868, 1.0
  %v3899 = vadd.f32 %v3870, 1.0
  %v3900 = vadd.f32 %v3872, 1.0
  %v3901 = vadd.f32 %v3874, 1.0
  %v3902 = vadd.f32 %v3876, 1.0
  %v3903 = vadd.f32 %v3878, 1.0
  %v3904 = vadd.f32 %v3880, 1.0
  %v3905 = vadd.f32 %v3882, 1.0
  %v3906 = vadd.f32 %v3884, 1.0
  %v3907 = vadd.f32 %v3886, 1.0
  %v3908 = vadd.f32 %v3888, 1.0
  %v3909 = vadd.f32 %v3890, 1.0
  %v3910 = vadd.f32 %v3892, 1.0
  %v3911 = vadd.f32 %v3894, 1.0
  %v3912 = vadd.f32 %v3896, 1.0
  %v3913 = vrcp.pop %v3897
  %v3914 = vmul.f32 1.0, %v3913
  %v3915 = vrcp.pop %v3898
  %v3916 = vmul.f32 1.0, %v3915
  %v3917 = vrcp.pop %v3899
  %v3918 = vmul.f32 1.0, %v3917
  %v3919 = vrcp.pop %v3900
  %v3920 = vmul.f32 1.0, %v3919
  %v3921 = vrcp.pop %v3901
  %v3922 = vmul.f32 1.0, %v3921
  %v3923 = vrcp.pop %v3902
  %v3924 = vmul.f32 1.0, %v3923
  %v3925 = vrcp.pop %v3903
  %v3926 = vmul.f32 1.0, %v3925
  %v3927 = vrcp.pop %v3904
  %v3928 = vmul.f32 1.0, %v3927
  %v3929 = vrcp.pop %v3905
  %v3930 = vmul.f32 1.0, %v3929
  %v3931 = vrcp.pop %v3906
  %v3932 = vmul.f32 1.0, %v3931
  %v3933 = vrcp.pop %v3907
  %v3934 = vmul.f32 1.0, %v3933
  %v3935 = vrcp.pop %v3908
  %v3936 = vmul.f32 1.0, %v3935
  %v3937 = vrcp.pop %v3909
  %v3938 = vmul.f32 1.0, %v3937
  %v3939 = vrcp.pop %v3910
  %v3940 = vmul.f32 1.0, %v3939
  %v3941 = vrcp.pop %v3911
  %v3942 = vmul.f32 1.0, %v3941
  %v3943 = vrcp.pop %v3912
  %v3944 = vmul.f32 1.0, %v3943
  %v3945 = vmul.f32 %v3787, %v3914
  %v3946 = vmul.f32 %v3790, %v3916
  %v3947 = vmul.f32 %v3795, %v3918
  %v3948 = vmul.f32 %v3798, %v3920
  %v3949 = vmul.f32 %v3803, %v3922
  %v3950 = vmul.f32 %v3806, %v3924
  %v3951 = vmul.f32 %v3811, %v3926
  %v3952 = vmul.f32 %v3814, %v3928
  %v3953 = vmul.f32 %v3819, %v3930
  %v3954 = vmul.f32 %v3822, %v3932
  %v3955 = vmul.f32 %v3827, %v3934
  %v3956 = vmul.f32 %v3830, %v3936
  %v3957 = vmul.f32 %v3835, %v3938
  %v3958 = vmul.f32 %v3838, %v3940
  %v3959 = vmul.f32 %v3843, %v3942
  %v3960 = vmul.f32 %v3846, %v3944
  %v3961 = vadd.f32 %v2539, %v3945
  %v3962 = vadd.f32 %v2540, %v3946
  %v3963 = vadd.f32 %v2541, %v3947
  %v3964 = vadd.f32 %v2542, %v3948
  %v3965 = vadd.f32 %v2543, %v3949
  %v3966 = vadd.f32 %v2544, %v3950
  %v3967 = vadd.f32 %v2545, %v3951
  %v3968 = vadd.f32 %v2546, %v3952
  %v3969 = vadd.f32 %v2547, %v3953
  %v3970 = vadd.f32 %v2548, %v3954
  %v3971 = vadd.f32 %v2549, %v3955
  %v3972 = vadd.f32 %v2550, %v3956
  %v3973 = vadd.f32 %v2551, %v3957
  %v3974 = vadd.f32 %v2552, %v3958
  %v3975 = vadd.f32 %v2553, %v3959
  %v3976 = vadd.f32 %v2554, %v3960
  %s3977 = scalar_lea.vmem %s15, 64
  %v3978 = vld [vmem:[%s3977] sm:$0xff]
  %v3979 = vld [vmem:[%s3977 + $0x8] sm:$0xff]
  %v3980 = vld [vmem:[%s3977 + $0x10] sm:$0xff]
  %v3981 = vld [vmem:[%s3977 + $0x18] sm:$0xff]
  %v3982 = vld [vmem:[%s3977 + $0x20] sm:$0xff]
  %v3983 = vld [vmem:[%s3977 + $0x28] sm:$0xff]
  %v3984 = vld [vmem:[%s3977 + $0x30] sm:$0xff]
  %v3985 = vld [vmem:[%s3977 + $0x38] sm:$0xff]
  %v3986 = vpack.c.bf16 %v3962, %v3961
  %v3987 = vpack.c.bf16 %v3964, %v3963
  %v3988 = vpack.c.bf16 %v3966, %v3965
  %v3989 = vpack.c.bf16 %v3968, %v3967
  %v3990 = vpack.c.bf16 %v3970, %v3969
  %v3991 = vpack.c.bf16 %v3972, %v3971
  %v3992 = vpack.c.bf16 %v3974, %v3973
  %v3993 = vpack.c.bf16 %v3976, %v3975
  %v3994 = vpack.c.bf16 %v3979, %v3978
  %v3995 = vpack.c.bf16 %v3981, %v3980
  %v3996 = vpack.c.bf16 %v3983, %v3982
  %v3997 = vpack.c.bf16 %v3985, %v3984
  %v3999 = vsel %vm1399, %v3986, 0
  %v4002 = vsel %vm1399, %v3987, 0
  %v4005 = vsel %vm1399, %v3988, 0
  %v4008 = vsel %vm1399, %v3989, 0
  %v4011 = vsel %vm1399, %v3990, 0
  %v4014 = vsel %vm1399, %v3991, 0
  %v4017 = vsel %vm1399, %v3992, 0
  %v4020 = vsel %vm1399, %v3993, 0
  %4022 = vmatprep.subr.bf16.mxu0 0
  %4023 = vmatpush1.bf16.msra.mxu0 0
  %4024 = vmatprep.subr.bf16.mxu0 0
  %4025 = vmatpush1.bf16.msra.mxu0 0
  %4026 = vmatprep.subr.bf16.mxu0 0
  %4027 = vmatpush1.bf16.msra.mxu0 0
  %4028 = vmatprep.subr.bf16.mxu0 0
  %4029 = vmatpush1.bf16.msra.mxu0 0
  %4030 = vmatprep.subr.bf16.mxu0 0
  %4031 = vmatpush1.bf16.msra.mxu0 %v3997
  %4032 = vmatprep.subr.bf16.mxu0 0
  %4033 = vmatpush1.bf16.msra.mxu0 %v3996
  %4034 = vmatprep.subr.bf16.mxu0 0
  %4035 = vmatpush1.bf16.msra.mxu0 %v3995
  %4036 = vmatprep.subr.bf16.mxu0 0
  %4037 = vmatpush1.bf16.msra.mxu0 %v3994
  %4038 = vmatprep.subr.bf16.mxu0 0
  %4039 = vmatpush2.bf16.msra.mxu0 0
  %4040 = vmatprep.subr.bf16.mxu0 0
  %4041 = vmatpush2.bf16.msra.mxu0 0
  %4042 = vmatprep.subr.bf16.mxu0 0
  %4043 = vmatpush2.bf16.msra.mxu0 0
  %4044 = vmatprep.subr.bf16.mxu0 0
  %4045 = vmatpush2.bf16.msra.mxu0 0
  %4046 = vmatprep.subr.bf16.mxu0 0
  %4047 = vmatpush2.bf16.msra.mxu0 0
  %4048 = vmatprep.subr.bf16.mxu0 0
  %4049 = vmatpush2.bf16.msra.mxu0 0
  %4050 = vmatprep.subr.bf16.mxu0 0
  %4051 = vmatpush2.bf16.msra.mxu0 0
  %4052 = vmatprep.subr.bf16.mxu0 0
  %4053 = vmatpush2.bf16.msra.mxu0 0
  %4054 = vmatprep.mubr.bf16.mxu0 0
  %4055 = vmatmul.mubr.bf16.gmra.mxu0 %v3999
  %v4056 = vpop.f32.mrf.mxu0
  %v4057 = vadd.f32 0.0, %v4056
  %v4058 = vpop.f32.mrf.mxu0
  %v4059 = vpop.f32.mrf.mxu0
  %v4060 = vadd.f32 0.0, %v4059
  %v4061 = vpop.f32.mrf.mxu0
  %4062 = vmatprep.mubr.bf16.mxu0 0
  %4063 = vmatmul.mubr.bf16.gmra.mxu0 %v4002
  %v4064 = vpop.f32.mrf.mxu0
  %v4065 = vadd.f32 0.0, %v4064
  %v4066 = vpop.f32.mrf.mxu0
  %v4067 = vpop.f32.mrf.mxu0
  %v4068 = vadd.f32 0.0, %v4067
  %v4069 = vpop.f32.mrf.mxu0
  %4070 = vmatprep.mubr.bf16.mxu0 0
  %4071 = vmatmul.mubr.bf16.gmra.mxu0 %v4005
  %v4072 = vpop.f32.mrf.mxu0
  %v4073 = vadd.f32 0.0, %v4072
  %v4074 = vpop.f32.mrf.mxu0
  %v4075 = vpop.f32.mrf.mxu0
  %v4076 = vadd.f32 0.0, %v4075
  %v4077 = vpop.f32.mrf.mxu0
  %4078 = vmatprep.mubr.bf16.mxu0 0
  %4079 = vmatmul.mubr.bf16.gmra.mxu0 %v4008
  %v4080 = vpop.f32.mrf.mxu0
  %v4081 = vadd.f32 0.0, %v4080
  %v4082 = vpop.f32.mrf.mxu0
  %v4083 = vpop.f32.mrf.mxu0
  %v4084 = vadd.f32 0.0, %v4083
  %v4085 = vpop.f32.mrf.mxu0
  %4086 = vmatprep.mubr.bf16.mxu0 0
  %4087 = vmatmul.mubr.bf16.gmra.mxu0 %v4011
  %v4088 = vpop.f32.mrf.mxu0
  %v4089 = vpop.f32.mrf.mxu0
  %v4090 = vpop.f32.mrf.mxu0
  %v4091 = vpop.f32.mrf.mxu0
  %4092 = vmatprep.mubr.bf16.mxu0 0
  %4093 = vmatmul.mubr.bf16.gmra.mxu0 %v4014
  %v4094 = vpop.f32.mrf.mxu0
  %v4095 = vpop.f32.mrf.mxu0
  %v4096 = vpop.f32.mrf.mxu0
  %v4097 = vpop.f32.mrf.mxu0
  %4098 = vmatprep.mubr.bf16.mxu0 0
  %4099 = vmatmul.mubr.bf16.gmra.mxu0 %v4017
  %v4100 = vpop.f32.mrf.mxu0
  %v4101 = vpop.f32.mrf.mxu0
  %v4102 = vpop.f32.mrf.mxu0
  %v4103 = vpop.f32.mrf.mxu0
  %4104 = vmatprep.mubr.bf16.mxu0 0
  %4105 = vmatmul.mubr.bf16.gmra.mxu0 %v4020
  %v4106 = vpop.f32.mrf.mxu0
  %v4107 = vpop.f32.mrf.mxu0
  %v4108 = vpop.f32.mrf.mxu0
  %v4109 = vpop.f32.mrf.mxu0
  %4110 = vdwg.mxu0
  %v4111 = vxor.u32 %v4057, 2147483648
  %v4112 = vxor.u32 %v4060, 2147483648
  %v4113 = vxor.u32 %v4065, 2147483648
  %v4114 = vxor.u32 %v4068, 2147483648
  %v4115 = vxor.u32 %v4073, 2147483648
  %v4116 = vxor.u32 %v4076, 2147483648
  %v4117 = vxor.u32 %v4081, 2147483648
  %v4118 = vxor.u32 %v4084, 2147483648
  %v4119 = vmul.f32 %v4111, 1.442695
  %v4120 = vpow.pop %v4119
  %v4121 = vmul.f32 %v4112, 1.442695
  %v4122 = vpow.pop %v4121
  %v4123 = vmul.f32 %v4113, 1.442695
  %v4124 = vpow.pop %v4123
  %v4125 = vmul.f32 %v4114, 1.442695
  %v4126 = vpow.pop %v4125
  %v4127 = vmul.f32 %v4115, 1.442695
  %v4128 = vpow.pop %v4127
  %v4129 = vmul.f32 %v4116, 1.442695
  %v4130 = vpow.pop %v4129
  %v4131 = vmul.f32 %v4117, 1.442695
  %v4132 = vpow.pop %v4131
  %v4133 = vmul.f32 %v4118, 1.442695
  %v4134 = vpow.pop %v4133
  %v4135 = vadd.f32 %v4120, 1.0
  %v4136 = vadd.f32 %v4122, 1.0
  %v4137 = vadd.f32 %v4124, 1.0
  %v4138 = vadd.f32 %v4126, 1.0
  %v4139 = vadd.f32 %v4128, 1.0
  %v4140 = vadd.f32 %v4130, 1.0
  %v4141 = vadd.f32 %v4132, 1.0
  %v4142 = vadd.f32 %v4134, 1.0
  %v4143 = vrcp.pop %v4135
  %v4144 = vmul.f32 1.0, %v4143
  %v4145 = vrcp.pop %v4136
  %v4146 = vmul.f32 1.0, %v4145
  %v4147 = vrcp.pop %v4137
  %v4148 = vmul.f32 1.0, %v4147
  %v4149 = vrcp.pop %v4138
  %v4150 = vmul.f32 1.0, %v4149
  %v4151 = vrcp.pop %v4139
  %v4152 = vmul.f32 1.0, %v4151
  %v4153 = vrcp.pop %v4140
  %v4154 = vmul.f32 1.0, %v4153
  %v4155 = vrcp.pop %v4141
  %v4156 = vmul.f32 1.0, %v4155
  %v4157 = vrcp.pop %v4142
  %v4158 = vmul.f32 1.0, %v4157
  %v4159 = vadd.f32 %v2744, %v3495
  %v4160 = vadd.f32 %v2745, %v3496
  %v4161 = vadd.f32 %v2746, %v3497
  %v4162 = vadd.f32 %v2747, %v3498
  %v4163 = vadd.f32 %v2748, %v3499
  %v4164 = vadd.f32 %v2749, %v3500
  %v4165 = vadd.f32 %v2750, %v3501
  %v4166 = vadd.f32 %v2751, %v3502
  %v4167 = vmul.f32 %v4159, %v4144
  %v4168 = vmul.f32 %v4160, %v4146
  %v4169 = vmul.f32 %v4161, %v4148
  %v4170 = vmul.f32 %v4162, %v4150
  %v4171 = vmul.f32 %v4163, %v4152
  %v4172 = vmul.f32 %v4164, %v4154
  %v4173 = vmul.f32 %v4165, %v4156
  %v4174 = vmul.f32 %v4166, %v4158
  %v4175 = vadd.f32 %v2792, %v3551
  %v4176 = vadd.f32 %v2793, %v3552
  %v4177 = vadd.f32 %v2794, %v3553
  %v4178 = vadd.f32 %v2795, %v3554
  %v4179 = vadd.f32 %v2796, %v3555
  %v4180 = vadd.f32 %v2797, %v3556
  %v4181 = vadd.f32 %v2798, %v3557
  %v4182 = vadd.f32 %v2799, %v3558
  %4191 = vrot.lane.b32.xlu0 %v4144, 32
  %v4192 = vpop.permute.xlu0 %4191
  %4193 = vrot.lane.b32.xlu0 %v4146, 32
  %v4194 = vpop.permute.xlu0 %4193
  %4195 = vrot.lane.b32.xlu0 %v4148, 32
  %v4196 = vpop.permute.xlu0 %4195
  %4197 = vrot.lane.b32.xlu0 %v4150, 32
  %v4198 = vpop.permute.xlu0 %4197
  %4199 = vrot.lane.b32.xlu0 %v4152, 32
  %v4200 = vpop.permute.xlu0 %4199
  %4201 = vrot.lane.b32.xlu0 %v4154, 32
  %v4202 = vpop.permute.xlu0 %4201
  %4203 = vrot.lane.b32.xlu0 %v4156, 32
  %v4204 = vpop.permute.xlu0 %4203
  %4205 = vrot.lane.b32.xlu0 %v4158, 32
  %v4206 = vpop.permute.xlu0 %4205
  %v4215 = vmul.f32 %v4175, %v4192
  %v4216 = vmul.f32 %v4176, %v4194
  %v4217 = vmul.f32 %v4177, %v4196
  %v4218 = vmul.f32 %v4178, %v4198
  %v4219 = vmul.f32 %v4179, %v4200
  %v4220 = vmul.f32 %v4180, %v4202
  %v4221 = vmul.f32 %v4181, %v4204
  %v4222 = vmul.f32 %v4182, %v4206
  %v4223 = vadd.f32 %v2832, %v3607
  %v4224 = vadd.f32 %v2833, %v3608
  %v4225 = vadd.f32 %v2834, %v3609
  %v4226 = vadd.f32 %v2835, %v3610
  %v4227 = vadd.f32 %v2836, %v3611
  %v4228 = vadd.f32 %v2837, %v3612
  %v4229 = vadd.f32 %v2838, %v3613
  %v4230 = vadd.f32 %v2839, %v3614
  %4231 = vrot.lane.b32.xlu0 %v4144, 64
  %v4232 = vpop.permute.xlu0 %4231
  %4233 = vrot.lane.b32.xlu0 %v4146, 64
  %v4234 = vpop.permute.xlu0 %4233
  %4235 = vrot.lane.b32.xlu0 %v4148, 64
  %v4236 = vpop.permute.xlu0 %4235
  %4237 = vrot.lane.b32.xlu0 %v4150, 64
  %v4238 = vpop.permute.xlu0 %4237
  %4239 = vrot.lane.b32.xlu0 %v4152, 64
  %v4240 = vpop.permute.xlu0 %4239
  %4241 = vrot.lane.b32.xlu0 %v4154, 64
  %v4242 = vpop.permute.xlu0 %4241
  %4243 = vrot.lane.b32.xlu0 %v4156, 64
  %v4244 = vpop.permute.xlu0 %4243
  %4245 = vrot.lane.b32.xlu0 %v4158, 64
  %v4246 = vpop.permute.xlu0 %4245
  %v4255 = vmul.f32 %v4223, %v4232
  %v4256 = vmul.f32 %v4224, %v4234
  %v4257 = vmul.f32 %v4225, %v4236
  %v4258 = vmul.f32 %v4226, %v4238
  %v4259 = vmul.f32 %v4227, %v4240
  %v4260 = vmul.f32 %v4228, %v4242
  %v4261 = vmul.f32 %v4229, %v4244
  %v4262 = vmul.f32 %v4230, %v4246
  %v4263 = vld [vmem:[%s18] sm:$0xff]
  %v4264 = vld [vmem:[%s18 + $0x8] sm:$0xff]
  %v4265 = vld [vmem:[%s18 + $0x10] sm:$0xff]
  %v4266 = vld [vmem:[%s18 + $0x18] sm:$0xff]
  %v4267 = vld [vmem:[%s18 + $0x20] sm:$0xff]
  %v4268 = vld [vmem:[%s18 + $0x28] sm:$0xff]
  %v4269 = vld [vmem:[%s18 + $0x30] sm:$0xff]
  %v4270 = vld [vmem:[%s18 + $0x38] sm:$0xff]
  %v4271 = vpack.c.bf16 %v4264, %v4263
  %v4272 = vpack.c.bf16 %v4266, %v4265
  %v4273 = vpack.c.bf16 %v4268, %v4267
  %v4274 = vpack.c.bf16 %v4270, %v4269
  %v4275 = vld [vmem:[%s19] sm:$0x1]
  %v4277 = vlaneseq
  %v4278 = vshrl.u32 %v4277, 7
  %v4279 = vsub.s32 0, %v4278
  %v4280 = vrot.slane %v4275, %v4279
  %4282 = vmatprep.subr.bf16.mxu0 0
  %4283 = vmatpush1.bf16.msra.mxu0 0
  %4284 = vmatprep.subr.bf16.mxu0 0
  %4285 = vmatpush1.bf16.msra.mxu0 0
  %4286 = vmatprep.subr.bf16.mxu0 0
  %4287 = vmatpush1.bf16.msra.mxu0 0
  %4288 = vmatprep.subr.bf16.mxu0 0
  %4289 = vmatpush1.bf16.msra.mxu0 0
  %4290 = vmatprep.subr.bf16.mxu0 0
  %4291 = vmatpush1.bf16.msra.mxu0 %v4274
  %4292 = vmatprep.subr.bf16.mxu0 0
  %4293 = vmatpush1.bf16.msra.mxu0 %v4273
  %4294 = vmatprep.subr.bf16.mxu0 0
  %4295 = vmatpush1.bf16.msra.mxu0 %v4272
  %4296 = vmatprep.subr.bf16.mxu0 0
  %4297 = vmatpush1.bf16.msra.mxu0 %v4271
  %4298 = vmatprep.subr.bf16.mxu0 0
  %4299 = vmatpush2.bf16.msra.mxu0 0
  %4300 = vmatprep.subr.bf16.mxu0 0
  %4301 = vmatpush2.bf16.msra.mxu0 0
  %4302 = vmatprep.subr.bf16.mxu0 0
  %4303 = vmatpush2.bf16.msra.mxu0 0
  %4304 = vmatprep.subr.bf16.mxu0 0
  %4305 = vmatpush2.bf16.msra.mxu0 0
  %4306 = vmatprep.subr.bf16.mxu0 0
  %4307 = vmatpush2.bf16.msra.mxu0 0
  %4308 = vmatprep.subr.bf16.mxu0 0
  %4309 = vmatpush2.bf16.msra.mxu0 0
  %4310 = vmatprep.subr.bf16.mxu0 0
  %4311 = vmatpush2.bf16.msra.mxu0 0
  %4312 = vmatprep.subr.bf16.mxu0 0
  %4313 = vmatpush2.bf16.msra.mxu0 0
  %4314 = vmatprep.mubr.bf16.mxu0 0
  %4315 = vmatmul.mubr.bf16.gmra.mxu0 %v3999
  %v4316 = vpop.f32.mrf.mxu0
  %v4317 = vadd.f32 %v4280, %v4316
  %v4318 = vpop.f32.mrf.mxu0
  %v4319 = vpop.f32.mrf.mxu0
  %v4320 = vadd.f32 %v4280, %v4319
  %v4321 = vpop.f32.mrf.mxu0
  %4322 = vmatprep.mubr.bf16.mxu0 0
  %4323 = vmatmul.mubr.bf16.gmra.mxu0 %v4002
  %v4324 = vpop.f32.mrf.mxu0
  %v4325 = vadd.f32 %v4280, %v4324
  %v4326 = vpop.f32.mrf.mxu0
  %v4327 = vpop.f32.mrf.mxu0
  %v4328 = vadd.f32 %v4280, %v4327
  %v4329 = vpop.f32.mrf.mxu0
  %4330 = vmatprep.mubr.bf16.mxu0 0
  %4331 = vmatmul.mubr.bf16.gmra.mxu0 %v4005
  %v4332 = vpop.f32.mrf.mxu0
  %v4333 = vadd.f32 %v4280, %v4332
  %v4334 = vpop.f32.mrf.mxu0
  %v4335 = vpop.f32.mrf.mxu0
  %v4336 = vadd.f32 %v4280, %v4335
  %v4337 = vpop.f32.mrf.mxu0
  %4338 = vmatprep.mubr.bf16.mxu0 0
  %4339 = vmatmul.mubr.bf16.gmra.mxu0 %v4008
  %v4340 = vpop.f32.mrf.mxu0
  %v4341 = vadd.f32 %v4280, %v4340
  %v4342 = vpop.f32.mrf.mxu0
  %v4343 = vpop.f32.mrf.mxu0
  %v4344 = vadd.f32 %v4280, %v4343
  %v4345 = vpop.f32.mrf.mxu0
  %4346 = vdwg.mxu0
  %v4347 = vld [vmem:[%s21] sm:$0xff]
  %v4348 = vld [vmem:[%s21 + $0x8] sm:$0xff]
  %v4349 = vld [vmem:[%s21 + $0x10] sm:$0xff]
  %v4350 = vld [vmem:[%s21 + $0x18] sm:$0xff]
  %v4351 = vpack.c.bf16 %v4320, %v4317
  %v4352 = vpack.c.bf16 %v4328, %v4325
  %v4353 = vpack.c.bf16 %v4336, %v4333
  %v4354 = vpack.c.bf16 %v4344, %v4341
  %v4355 = vpack.c.bf16 %v4348, %v4347
  %v4356 = vpack.c.bf16 %v4350, %v4349
  %v4357 = vld [vmem:[%s22] sm:$0x1]
  %v4359 = vlaneseq
  %v4360 = vshrl.u32 %v4359, 7
  %v4361 = vsub.s32 0, %v4360
  %v4362 = vrot.slane %v4357, %v4361
  %v4365 = vsel %vm322, %v4351, 0
  %v4368 = vsel %vm322, %v4352, 0
  %v4371 = vsel %vm322, %v4353, 0
  %v4374 = vsel %vm322, %v4354, 0
  %4376 = vmatprep.subr.bf16.mxu0 0
  %4377 = vmatpush1.bf16.msra.mxu0 0
  %4378 = vmatprep.subr.bf16.mxu0 0
  %4379 = vmatpush1.bf16.msra.mxu0 0
  %4380 = vmatprep.subr.bf16.mxu0 0
  %4381 = vmatpush1.bf16.msra.mxu0 0
  %4382 = vmatprep.subr.bf16.mxu0 0
  %4383 = vmatpush1.bf16.msra.mxu0 0
  %4384 = vmatprep.subr.bf16.mxu0 0
  %4385 = vmatpush1.bf16.msra.mxu0 0
  %4386 = vmatprep.subr.bf16.mxu0 0
  %4387 = vmatpush1.bf16.msra.mxu0 0
  %4388 = vmatprep.subr.bf16.mxu0 0
  %4389 = vmatpush1.bf16.msra.mxu0 %v4356
  %4390 = vmatprep.subr.bf16.mxu0 0
  %4391 = vmatpush1.bf16.msra.mxu0 %v4355
  %4392 = vmatprep.subr.bf16.mxu0 0
  %4393 = vmatpush2.bf16.msra.mxu0 0
  %4394 = vmatprep.subr.bf16.mxu0 0
  %4395 = vmatpush2.bf16.msra.mxu0 0
  %4396 = vmatprep.subr.bf16.mxu0 0
  %4397 = vmatpush2.bf16.msra.mxu0 0
  %4398 = vmatprep.subr.bf16.mxu0 0
  %4399 = vmatpush2.bf16.msra.mxu0 0
  %4400 = vmatprep.subr.bf16.mxu0 0
  %4401 = vmatpush2.bf16.msra.mxu0 0
  %4402 = vmatprep.subr.bf16.mxu0 0
  %4403 = vmatpush2.bf16.msra.mxu0 0
  %4404 = vmatprep.subr.bf16.mxu0 0
  %4405 = vmatpush2.bf16.msra.mxu0 0
  %4406 = vmatprep.subr.bf16.mxu0 0
  %4407 = vmatpush2.bf16.msra.mxu0 0
  %4408 = vmatprep.mubr.bf16.mxu0 0
  %4409 = vmatmul.mubr.bf16.gmra.mxu0 %v4365
  %v4410 = vpop.f32.mrf.mxu0
  %v4411 = vadd.f32 %v4362, %v4410
  %v4412 = vpop.f32.mrf.mxu0
  %v4413 = vpop.f32.mrf.mxu0
  %v4414 = vadd.f32 %v4362, %v4413
  %v4415 = vpop.f32.mrf.mxu0
  %4416 = vmatprep.mubr.bf16.mxu0 0
  %4417 = vmatmul.mubr.bf16.gmra.mxu0 %v4368
  %v4418 = vpop.f32.mrf.mxu0
  %v4419 = vadd.f32 %v4362, %v4418
  %v4420 = vpop.f32.mrf.mxu0
  %v4421 = vpop.f32.mrf.mxu0
  %v4422 = vadd.f32 %v4362, %v4421
  %v4423 = vpop.f32.mrf.mxu0
  %4424 = vmatprep.mubr.bf16.mxu0 0
  %4425 = vmatmul.mubr.bf16.gmra.mxu0 %v4371
  %v4426 = vpop.f32.mrf.mxu0
  %v4427 = vadd.f32 %v4362, %v4426
  %v4428 = vpop.f32.mrf.mxu0
  %v4429 = vpop.f32.mrf.mxu0
  %v4430 = vadd.f32 %v4362, %v4429
  %v4431 = vpop.f32.mrf.mxu0
  %4432 = vmatprep.mubr.bf16.mxu0 0
  %4433 = vmatmul.mubr.bf16.gmra.mxu0 %v4374
  %v4434 = vpop.f32.mrf.mxu0
  %v4435 = vadd.f32 %v4362, %v4434
  %v4436 = vpop.f32.mrf.mxu0
  %v4437 = vpop.f32.mrf.mxu0
  %v4438 = vadd.f32 %v4362, %v4437
  %v4439 = vpop.f32.mrf.mxu0
  %4440 = vdwg.mxu0
  %v4441 = vld [vmem:[%s20] sm:$0x1]
  %v4443 = vlaneseq
  %v4444 = vshrl.u32 %v4443, 7
  %v4445 = vsub.s32 0, %v4444
  %v4446 = vrot.slane %v4441, %v4445
  %v4448 = vmul.f32 %v4167, %v4446
  %v4449 = vmul.f32 %v4168, %v4446
  %v4450 = vmul.f32 %v4169, %v4446
  %v4451 = vmul.f32 %v4170, %v4446
  %v4452 = vmul.f32 %v4171, %v4446
  %v4453 = vmul.f32 %v4172, %v4446
  %v4454 = vmul.f32 %v4173, %v4446
  %v4455 = vmul.f32 %v4174, %v4446
  %v4456 = vsel %vm322, %v4448, 0.0
  %4457 = vadd.xlane.f32.xlu0 %v4456
  %v4458 = vpop.xlane.xlu0 %4457
  %v4459 = vsel %vm322, %v4449, 0.0
  %4460 = vadd.xlane.f32.xlu0 %v4459
  %v4461 = vpop.xlane.xlu0 %4460
  %v4462 = vsel %vm322, %v4450, 0.0
  %4463 = vadd.xlane.f32.xlu0 %v4462
  %v4464 = vpop.xlane.xlu0 %4463
  %v4465 = vsel %vm322, %v4451, 0.0
  %4466 = vadd.xlane.f32.xlu0 %v4465
  %v4467 = vpop.xlane.xlu0 %4466
  %v4468 = vsel %vm322, %v4452, 0.0
  %4469 = vadd.xlane.f32.xlu0 %v4468
  %v4470 = vpop.xlane.xlu0 %4469
  %v4471 = vsel %vm322, %v4453, 0.0
  %4472 = vadd.xlane.f32.xlu0 %v4471
  %v4473 = vpop.xlane.xlu0 %4472
  %v4474 = vsel %vm322, %v4454, 0.0
  %4475 = vadd.xlane.f32.xlu0 %v4474
  %v4476 = vpop.xlane.xlu0 %4475
  %v4477 = vsel %vm322, %v4455, 0.0
  %4478 = vadd.xlane.f32.xlu0 %v4477
  %v4479 = vpop.xlane.xlu0 %4478
  %4480 = vrot.lane.b32.xlu0 %v4446, 32
  %v4481 = vpop.permute.xlu0 %4480
  %v4483 = vmul.f32 %v4215, %v4481
  %v4484 = vmul.f32 %v4216, %v4481
  %v4485 = vmul.f32 %v4217, %v4481
  %v4486 = vmul.f32 %v4218, %v4481
  %v4487 = vmul.f32 %v4219, %v4481
  %v4488 = vmul.f32 %v4220, %v4481
  %v4489 = vmul.f32 %v4221, %v4481
  %v4490 = vmul.f32 %v4222, %v4481
  %4499 = vrot.lane.b32.xlu0 %v4483, 96
  %v4500 = vpop.permute.xlu0 %4499
  %4501 = vrot.lane.b32.xlu0 %v4484, 96
  %v4502 = vpop.permute.xlu0 %4501
  %4503 = vrot.lane.b32.xlu0 %v4485, 96
  %v4504 = vpop.permute.xlu0 %4503
  %4505 = vrot.lane.b32.xlu0 %v4486, 96
  %v4506 = vpop.permute.xlu0 %4505
  %4507 = vrot.lane.b32.xlu0 %v4487, 96
  %v4508 = vpop.permute.xlu0 %4507
  %4509 = vrot.lane.b32.xlu0 %v4488, 96
  %v4510 = vpop.permute.xlu0 %4509
  %4511 = vrot.lane.b32.xlu0 %v4489, 96
  %v4512 = vpop.permute.xlu0 %4511
  %4513 = vrot.lane.b32.xlu0 %v4490, 96
  %v4514 = vpop.permute.xlu0 %4513
  %v4523 = vsel %vm322, %v4500, 0.0
  %4524 = vadd.xlane.f32.xlu0 %v4523
  %v4525 = vpop.xlane.xlu0 %4524
  %v4526 = vsel %vm322, %v4502, 0.0
  %4527 = vadd.xlane.f32.xlu0 %v4526
  %v4528 = vpop.xlane.xlu0 %4527
  %v4529 = vsel %vm322, %v4504, 0.0
  %4530 = vadd.xlane.f32.xlu0 %v4529
  %v4531 = vpop.xlane.xlu0 %4530
  %v4532 = vsel %vm322, %v4506, 0.0
  %4533 = vadd.xlane.f32.xlu0 %v4532
  %v4534 = vpop.xlane.xlu0 %4533
  %v4535 = vsel %vm322, %v4508, 0.0
  %4536 = vadd.xlane.f32.xlu0 %v4535
  %v4537 = vpop.xlane.xlu0 %4536
  %v4538 = vsel %vm322, %v4510, 0.0
  %4539 = vadd.xlane.f32.xlu0 %v4538
  %v4540 = vpop.xlane.xlu0 %4539
  %v4541 = vsel %vm322, %v4512, 0.0
  %4542 = vadd.xlane.f32.xlu0 %v4541
  %v4543 = vpop.xlane.xlu0 %4542
  %v4544 = vsel %vm322, %v4514, 0.0
  %4545 = vadd.xlane.f32.xlu0 %v4544
  %v4546 = vpop.xlane.xlu0 %4545
  %4547 = vrot.lane.b32.xlu0 %v4446, 64
  %v4548 = vpop.permute.xlu0 %4547
  %v4550 = vmul.f32 %v4255, %v4548
  %v4551 = vmul.f32 %v4256, %v4548
  %v4552 = vmul.f32 %v4257, %v4548
  %v4553 = vmul.f32 %v4258, %v4548
  %v4554 = vmul.f32 %v4259, %v4548
  %v4555 = vmul.f32 %v4260, %v4548
  %v4556 = vmul.f32 %v4261, %v4548
  %v4557 = vmul.f32 %v4262, %v4548
  %4566 = vrot.lane.b32.xlu0 %v4550, 64
  %v4567 = vpop.permute.xlu0 %4566
  %4568 = vrot.lane.b32.xlu0 %v4551, 64
  %v4569 = vpop.permute.xlu0 %4568
  %4570 = vrot.lane.b32.xlu0 %v4552, 64
  %v4571 = vpop.permute.xlu0 %4570
  %4572 = vrot.lane.b32.xlu0 %v4553, 64
  %v4573 = vpop.permute.xlu0 %4572
  %4574 = vrot.lane.b32.xlu0 %v4554, 64
  %v4575 = vpop.permute.xlu0 %4574
  %4576 = vrot.lane.b32.xlu0 %v4555, 64
  %v4577 = vpop.permute.xlu0 %4576
  %4578 = vrot.lane.b32.xlu0 %v4556, 64
  %v4579 = vpop.permute.xlu0 %4578
  %4580 = vrot.lane.b32.xlu0 %v4557, 64
  %v4581 = vpop.permute.xlu0 %4580
  %v4590 = vsel %vm322, %v4567, 0.0
  %4591 = vadd.xlane.f32.xlu0 %v4590
  %v4592 = vpop.xlane.xlu0 %4591
  %v4593 = vsel %vm322, %v4569, 0.0
  %4594 = vadd.xlane.f32.xlu0 %v4593
  %v4595 = vpop.xlane.xlu0 %4594
  %v4596 = vsel %vm322, %v4571, 0.0
  %4597 = vadd.xlane.f32.xlu0 %v4596
  %v4598 = vpop.xlane.xlu0 %4597
  %v4599 = vsel %vm322, %v4573, 0.0
  %4600 = vadd.xlane.f32.xlu0 %v4599
  %v4601 = vpop.xlane.xlu0 %4600
  %v4602 = vsel %vm322, %v4575, 0.0
  %4603 = vadd.xlane.f32.xlu0 %v4602
  %v4604 = vpop.xlane.xlu0 %4603
  %v4605 = vsel %vm322, %v4577, 0.0
  %4606 = vadd.xlane.f32.xlu0 %v4605
  %v4607 = vpop.xlane.xlu0 %4606
  %v4608 = vsel %vm322, %v4579, 0.0
  %4609 = vadd.xlane.f32.xlu0 %v4608
  %v4610 = vpop.xlane.xlu0 %4609
  %v4611 = vsel %vm322, %v4581, 0.0
  %4612 = vadd.xlane.f32.xlu0 %v4611
  %v4613 = vpop.xlane.xlu0 %4612
  %4622 = vrot.lane.b32.xlu0 %v4411, 3
  %v4623 = vpop.permute.xlu0 %4622
  %4624 = vrot.lane.b32.xlu0 %v4414, 3
  %v4625 = vpop.permute.xlu0 %4624
  %4626 = vrot.lane.b32.xlu0 %v4419, 3
  %v4627 = vpop.permute.xlu0 %4626
  %4628 = vrot.lane.b32.xlu0 %v4422, 3
  %v4629 = vpop.permute.xlu0 %4628
  %4630 = vrot.lane.b32.xlu0 %v4427, 3
  %v4631 = vpop.permute.xlu0 %4630
  %4632 = vrot.lane.b32.xlu0 %v4430, 3
  %v4633 = vpop.permute.xlu0 %4632
  %4634 = vrot.lane.b32.xlu0 %v4435, 3
  %v4635 = vpop.permute.xlu0 %4634
  %4636 = vrot.lane.b32.xlu0 %v4438, 3
  %v4637 = vpop.permute.xlu0 %4636
  %vm4646 = vcmask 7168
  %v4647 = vsel %vm4646, %v4458, %v4525
  %v4648 = vsel %vm4646, %v4461, %v4528
  %v4649 = vsel %vm4646, %v4464, %v4531
  %v4650 = vsel %vm4646, %v4467, %v4534
  %v4651 = vsel %vm4646, %v4470, %v4537
  %v4652 = vsel %vm4646, %v4473, %v4540
  %v4653 = vsel %vm4646, %v4476, %v4543
  %v4654 = vsel %vm4646, %v4479, %v4546
  %vm4655 = vcmask 15360
  %v4656 = vsel %vm4655, %v4647, %v4592
  %v4657 = vsel %vm4655, %v4648, %v4595
  %v4658 = vsel %vm4655, %v4649, %v4598
  %v4659 = vsel %vm4655, %v4650, %v4601
  %v4660 = vsel %vm4655, %v4651, %v4604
  %v4661 = vsel %vm4655, %v4652, %v4607
  %v4662 = vsel %vm4655, %v4653, %v4610
  %v4663 = vsel %vm4655, %v4654, %v4613
  %vm4664 = vcmask 23552
  %v4665 = vsel %vm4664, %v4656, %v4623
  %v4666 = vsel %vm4664, %v4657, %v4625
  %v4667 = vsel %vm4664, %v4658, %v4627
  %v4668 = vsel %vm4664, %v4659, %v4629
  %v4669 = vsel %vm4664, %v4660, %v4631
  %v4670 = vsel %vm4664, %v4661, %v4633
  %v4671 = vsel %vm4664, %v4662, %v4635
  %v4672 = vsel %vm4664, %v4663, %v4637
  %vm4673 = vcmask 89088
  %4674 = vst.msk [vmem:[%s23] sm:$0xff] %vm4673, %v4665
  %4675 = vst.msk [vmem:[%s23 + $0x8] sm:$0xff] %vm4673, %v4666
  %4676 = vst.msk [vmem:[%s23 + $0x10] sm:$0xff] %vm4673, %v4667
  %4677 = vst.msk [vmem:[%s23 + $0x18] sm:$0xff] %vm4673, %v4668
  %4678 = vst.msk [vmem:[%s23 + $0x20] sm:$0xff] %vm4673, %v4669
  %4679 = vst.msk [vmem:[%s23 + $0x28] sm:$0xff] %vm4673, %v4670
  %4680 = vst.msk [vmem:[%s23 + $0x30] sm:$0xff] %vm4673, %v4671
  %4681 = vst.msk [vmem:[%s23 + $0x38] sm:$0xff] %vm4673, %v4672
  // Predicated region
  $region94: #{tpu_custom_call.1} parent=0 // pred_check
    _
  $region95: #{tpu_custom_call.1} parent=0 // pred_check_branch
    %4683 = sbr.rel (0) target = $region97
  $region96: #{tpu_custom_call.1} parent=0 // pred_region
    _
  $region97: #{tpu_custom_call.1} parent=0 // pred_fallthru
    _
  // Predicated region
  $region98: #{tpu_custom_call.1} parent=0 // pred_check
    _
  $region99: #{tpu_custom_call.1} parent=0 // pred_check_branch
    %4685 = sbr.rel (0) target = $region101
  $region100: #{tpu_custom_call.1} parent=0 // pred_region
    _
  $region101: #{tpu_custom_call.1} parent=0 // pred_fallthru
    _

</llo_original>
